<compile_context>
chip_gen: v7x
topology: tpu7x:2x2x1
jax: 0.10.0
libtpu: 0.0.40
codegen_flags: <defaults>
</compile_context>

<pallas_src>
import functools

import jax
import jax.numpy as jnp
from jax.experimental import pallas as pl
from jax.experimental.pallas import tpu as pltpu


_VMEM = pl.BlockSpec(memory_space=pltpu.MemorySpace.VMEM)


# ---------------------------------------------------------------------------
# Pallas kernels
# ---------------------------------------------------------------------------

def _sigmoid(x):
    # exp + reciprocal both run on the EUP slot, keeping the serial gate math off VALU.
    return pl.reciprocal(1.0 + jnp.exp(-x), approx=True)


def _gru_step(gi, gh, bhn, h, H):
    """One GRU cell update (PyTorch gate order [r, z, n]).
    gi already contains b_ih (+ b_hh folded in for the r/z gates)."""
    r = _sigmoid(gi[:, 0:H] + gh[:, 0:H])
    z = _sigmoid(gi[:, H:2 * H] + gh[:, H:2 * H])
    n = jnp.tanh(gi[:, 2 * H:3 * H] + r * (gh[:, 2 * H:3 * H] + bhn))
    return (1.0 - z) * n + z * h


def _enc_gru_gather_kernel(x_ref, idx_ref, wih_ref, whh_ref, bi_ref, bhn_ref,
                           out_ref, gi_ref, *, T, N):
    """GRU over T steps of N independent sequences (h0 = 0); outputs h at step idx[n]."""
    H = whh_ref.shape[0]
    # Hoisted input-side gate matmul for every (t, n) at once.
    gi_ref[...] = jnp.dot(x_ref[...], wih_ref[...],
                          preferred_element_type=jnp.float32) + bi_ref[...]
    whh = whh_ref[...]
    bhn = bhn_ref[...]
    idx = idx_ref[...]                                    # (N, 1) int32
    h = jnp.zeros((N, H), jnp.float32)
    gathered = jnp.zeros((N, H), jnp.float32)
    for t in range(T):                                    # static unroll (T small, static)
        gi = gi_ref[t * N:(t + 1) * N, :]
        gh = jnp.dot(h, whh, preferred_element_type=jnp.float32)
        h = _gru_step(gi, gh, bhn, h, H)
        gathered = jnp.where(idx == t, h, gathered)
    out_ref[...] = gathered


def _ctx_gru_gather2_kernel(x_ref, h0_ref, idx1_ref, idx2_ref,
                            wih_ref, whh_ref, bi_ref, bhn_ref,
                            ctx_ref, lctx_ref, gi_ref, *, T, N):
    """Context GRU (h0 given); gathers h at idx1 (context) and idx2 (last_context)."""
    H = whh_ref.shape[0]
    gi_ref[...] = jnp.dot(x_ref[...], wih_ref[...],
                          preferred_element_type=jnp.float32) + bi_ref[...]
    whh = whh_ref[...]
    bhn = bhn_ref[...]
    idx1 = idx1_ref[...]
    idx2 = idx2_ref[...]
    h = h0_ref[...]
    g1 = jnp.zeros((N, H), jnp.float32)
    g2 = jnp.zeros((N, H), jnp.float32)
    for t in range(T):
        gi = gi_ref[t * N:(t + 1) * N, :]
        gh = jnp.dot(h, whh, preferred_element_type=jnp.float32)
        h = _gru_step(gi, gh, bhn, h, H)
        g1 = jnp.where(idx1 == t, h, g1)
        g2 = jnp.where(idx2 == t, h, g2)
    ctx_ref[...] = g1
    lctx_ref[...] = g2


def _dec_gru_proj_kernel(x_ref, h0_ref, wih_ref, whh_ref, bi_ref, bhn_ref,
                         wout_ref, bout_ref, out_ref, gi_ref, hs_ref, *, T, N):
    """Decoder GRU fused with the output projection + log_softmax.
    Writes (T*N, V) log-probabilities (row = t*N + n, i.e. time-major)."""
    H = whh_ref.shape[0]
    gi_ref[...] = jnp.dot(x_ref[...], wih_ref[...],
                          preferred_element_type=jnp.float32) + bi_ref[...]
    whh = whh_ref[...]
    bhn = bhn_ref[...]
    h = h0_ref[...]
    for t in range(T):
        gi = gi_ref[t * N:(t + 1) * N, :]
        gh = jnp.dot(h, whh, preferred_element_type=jnp.float32)
        h = _gru_step(gi, gh, bhn, h, H)
        hs_ref[t * N:(t + 1) * N, :] = h
    # One wide (T*N, H) @ (H, V) projection + row-wise log_softmax (weights stay in VMEM).
    logits = jnp.dot(hs_ref[...], wout_ref[...],
                     preferred_element_type=jnp.float32) + bout_ref[...]
    m = jnp.max(logits, axis=-1, keepdims=True)
    lse = jnp.log(jnp.sum(jnp.exp(logits - m), axis=-1, keepdims=True)) + m
    out_ref[...] = logits - lse


def _vae_head_kernel(ctx_ref, lctx_ref, eps_ref,
                     wml_ref, bml_ref, wmll_ref, bmll_ref,
                     wc1_ref, wc2_ref, bc_ref,
                     wt1_ref, bt1_ref, wt2_ref, bt2_ref,
                     mu_ref, logvar_ref, mul_ref, logvarl_ref, hid_ref, t_ref):
    """mu/logvar (+last) nets, reparameterize, concat_net and terminal_net, all fused."""
    H = wc1_ref.shape[0]
    ctx = ctx_ref[...]
    ml = jnp.dot(ctx, wml_ref[...], preferred_element_type=jnp.float32) + bml_ref[...]
    mll = jnp.dot(lctx_ref[...], wmll_ref[...],
                  preferred_element_type=jnp.float32) + bmll_ref[...]
    mu, logvar = ml[:, 0:H], ml[:, H:2 * H]
    mu_last, logvar_last = mll[:, 0:H], mll[:, H:2 * H]
    # reparameterize (eps supplied from the host PRNG)
    z = eps_ref[...] * jnp.exp(0.5 * logvar_last) + mu_last
    # concat_net([context, z]) with the weight pre-split to avoid an in-kernel concat
    hid = (jnp.dot(ctx, wc1_ref[...], preferred_element_type=jnp.float32)
           + jnp.dot(z, wc2_ref[...], preferred_element_type=jnp.float32)
           + bc_ref[...])
    # terminal_net: Linear -> ReLU -> Linear(H, 1) (second layer as a lane reduction)
    th = jnp.maximum(jnp.dot(ctx, wt1_ref[...],
                             preferred_element_type=jnp.float32) + bt1_ref[...], 0.0)
    tw = jnp.sum(th * wt2_ref[...], axis=-1, keepdims=True) + bt2_ref[...]
    mu_ref[...] = mu
    logvar_ref[...] = logvar
    mul_ref[...] = mu_last
    logvarl_ref[...] = logvar_last
    hid_ref[...] = hid
    t_ref[...] = tw


# ---------------------------------------------------------------------------
# Pallas wrappers
# ---------------------------------------------------------------------------

def encoder_gru_gather(x_flat, lengths, T, N, gru_params):
    """x_flat: (T*N, E) time-major-flattened inputs (row t*N + n), h0 = 0.
    Returns the hidden state at step lengths[n]-1 for each sequence, shape (N, H).
    Negative/zero lengths wrap (mod T) like torch advanced indexing with -1."""
    wih, whh, bi, bhn = gru_params
    H = whh.shape[0]
    idx = jnp.mod(lengths.astype(jnp.int32).reshape(N, 1) - 1, T)
    kern = functools.partial(_enc_gru_gather_kernel, T=T, N=N)
    return pl.pallas_call(
        kern,
        out_shape=jax.ShapeDtypeStruct((N, H), jnp.float32),
        in_specs=[_VMEM] * 6,
        out_specs=_VMEM,
        scratch_shapes=[pltpu.VMEM((T * N, 3 * H), jnp.float32)],
    )(x_flat, idx, wih, whh, bi, bhn)


def context_gru_gather2(x_flat, h0, idx1, idx2, T, N, gru_params):
    """Context GRU with given h0; returns (context, last_context) gathered at idx1/idx2."""
    wih, whh, bi, bhn = gru_params
    H = whh.shape[0]
    kern = functools.partial(_ctx_gru_gather2_kernel, T=T, N=N)
    return pl.pallas_call(
        kern,
        out_shape=(jax.ShapeDtypeStruct((N, H), jnp.float32),
                   jax.ShapeDtypeStruct((N, H), jnp.float32)),
        in_specs=[_VMEM] * 8,
        out_specs=(_VMEM, _VMEM),
        scratch_shapes=[pltpu.VMEM((T * N, 3 * H), jnp.float32)],
    )(x_flat, h0, idx1, idx2, wih, whh, bi, bhn)


def decoder_gru_logsoftmax(x_flat, h0, T, N, gru_params, out_params):
    """Decoder GRU + out-projection + log_softmax. Returns (T, N, V) log-probs."""
    wih, whh, bi, bhn = gru_params
    wout, bout = out_params
    H = whh.shape[0]
    V = wout.shape[1]
    kern = functools.partial(_dec_gru_proj_kernel, T=T, N=N)
    flat = pl.pallas_call(
        kern,
        out_shape=jax.ShapeDtypeStruct((T * N, V), jnp.float32),
        in_specs=[_VMEM] * 8,
        out_specs=_VMEM,
        scratch_shapes=[pltpu.VMEM((T * N, 3 * H), jnp.float32),
                        pltpu.VMEM((T * N, H), jnp.float32)],
    )(x_flat, h0, wih, whh, bi, bhn, wout, bout)
    return flat.reshape(T, N, V)          # row-major compatible -> free reshape


def vae_head(context, last_context, eps, params):
    w_ml, b_ml = params['mu_logvar']
    w_mll, b_mll = params['mu_logvar_last']
    wc1, wc2, bc = params['concat']
    wt1, bt1, wt2, bt2 = params['term']
    B = context.shape[0]
    H = wc1.shape[0]
    return pl.pallas_call(
        _vae_head_kernel,
        out_shape=(jax.ShapeDtypeStruct((B, H), jnp.float32),   # mu
                   jax.ShapeDtypeStruct((B, H), jnp.float32),   # logvar
                   jax.ShapeDtypeStruct((B, H), jnp.float32),   # mu_last
                   jax.ShapeDtypeStruct((B, H), jnp.float32),   # logvar_last
                   jax.ShapeDtypeStruct((B, H), jnp.float32),   # hidden (decoder init)
                   jax.ShapeDtypeStruct((B, 1), jnp.float32)),  # terminal logits
        in_specs=[_VMEM] * 14,
        out_specs=(_VMEM,) * 6,
    )(context, last_context, eps, w_ml, b_ml, w_mll, b_mll,
      wc1, wc2, bc, wt1, bt1, wt2, bt2)


# ---------------------------------------------------------------------------
# Parameters (deterministic synthetic init, pre-fused for the kernels)
# ---------------------------------------------------------------------------

def init_params(key, cfg, voc_goal, voc_usr, voc_sys):
    E, H = cfg['eu_dim'], cfg['hu_dim']
    keys = iter(jax.random.split(key, 64))

    def mat(shape, scale=0.1):
        return scale * jax.random.normal(next(keys), shape, jnp.float32)

    def gru(in_dim):
        # Equivalent of torch GRU weight_ih_l0 (3H,in) / weight_hh_l0 (3H,H) / biases (3H,),
        # gate order [r, z, n], stored pre-transposed as (in,3H)/(H,3H). The input-side
        # bias has the hidden-side r/z biases folded in (they always add); the hidden-side
        # n bias stays separate because it is scaled by the reset gate.
        wih_t = mat((in_dim, 3 * H))
        whh_t = mat((H, 3 * H))
        bih = mat((3 * H,))
        bhh = mat((3 * H,))
        bi = bih + jnp.concatenate([bhh[:2 * H], jnp.zeros((H,), jnp.float32)])
        return wih_t, whh_t, bi.reshape(1, 3 * H), bhh[2 * H:].reshape(1, H)

    def lin(in_dim, out_dim):
        return mat((in_dim, out_dim)), mat((1, out_dim))

    w_mu, b_mu = lin(H, H)
    w_lv, b_lv = lin(H, H)
    w_mu_l, b_mu_l = lin(H, H)
    w_lv_l, b_lv_l = lin(H, H)
    w_cat, b_cat = lin(2 * H, H)
    w_t1, b_t1 = lin(H, H)
    w_t2, b_t2 = lin(H, 1)

    return {
        'goal_emb': mat((voc_goal, E)),
        'goal_gru': gru(E),
        'sys_emb': mat((voc_sys, E)),
        'sys_gru': gru(E),
        'ctx_gru': gru(H),
        # mu_net | logvar_net fused along the output axis -> one (H, 2H) matmul
        'mu_logvar': (jnp.concatenate([w_mu, w_lv], axis=1),
                      jnp.concatenate([b_mu, b_lv], axis=1)),
        'mu_logvar_last': (jnp.concatenate([w_mu_l, w_lv_l], axis=1),
                           jnp.concatenate([b_mu_l, b_lv_l], axis=1)),
        # concat_net weight split into the context half and the z half
        'concat': (w_cat[:H], w_cat[H:], b_cat),
        # terminal_net; second layer stored as (1, H) and applied as a lane reduction
        'term': (w_t1, b_t1, w_t2.T, b_t2),
        'dec_emb': mat((voc_usr, E)),
        'dec_gru': gru(E),
        'dec_out': lin(H, voc_usr),
    }


# ---------------------------------------------------------------------------
# VHUS forward (teacher-forcing path: origin_responses provided)
# ---------------------------------------------------------------------------

def vhus_forward(params, cfg, goals, goals_length, posts, posts_length,
                 origin_responses, noise_key):
    H = cfg['hu_dim']
    B, Lg = goals.shape

    # --- goal encoder: embed directly in time-major flat order (row t*B + b) ---
    goal_x = params['goal_emb'][goals.T.reshape(-1)]                  # (Lg*B, E)
    goal_h = encoder_gru_gather(goal_x, goals_length, Lg, B, params['goal_gru'])  # (B, H)

    # --- sys encoder over S*B independent sentences, s-major so the gathered states are
    #     already the time-major (flattened) input of the context GRU (row s*B + b) ---
    _, S, W = posts.shape
    post_idx = jnp.transpose(posts, (2, 1, 0)).reshape(-1)            # row w*(S*B)+s*B+b
    post_x = params['sys_emb'][post_idx]                              # (W*S*B, E)
    post_len = jnp.transpose(posts_length, (1, 0)).reshape(-1)        # (S*B,)
    post_h = encoder_gru_gather(post_x, post_len, W, S * B, params['sys_gru'])  # (S*B, H)

    # --- context encoder: gathers context (len-1) and last_context (len-2) in-kernel ---
    posts_sen_length = jnp.sum((posts_length > 0).astype(jnp.int32), axis=1)    # (B,)
    idx1 = jnp.mod(posts_sen_length.reshape(B, 1) - 1, S)
    idx2 = jnp.mod(posts_sen_length.reshape(B, 1) - 2, S)   # wraps like torch's -1 index
    context, last_context = context_gru_gather2(
        post_h, goal_h, idx1, idx2, S, B, params['ctx_gru'])

    # --- fused VAE head: mu/logvar (+last), reparameterize, concat_net, terminal_net ---
    # TODO(synk): torch.randn_like is nondeterministic; noise comes from a fixed PRNGKey.
    eps = jax.random.normal(noise_key, (B, H), jnp.float32)
    mu, logvar, mu_last, logvar_last, hidden, t_w = vae_head(
        context, last_context, eps, params)

    # --- usr decoder, teacher forcing (ratio=1 since origin_responses is given) ---
    # TODO(synk): greedy-inference decoder branch (teacher_forcing_ratio=0 with
    #             python-side EOS/length bookkeeping) is not implemented.
    dec_input = origin_responses[:, :-1]                              # (B, Td)
    Td = dec_input.shape[1]
    dec_x = params['dec_emb'][dec_input.T.reshape(-1)]                # (Td*B, E)
    a_weights = decoder_gru_logsoftmax(
        dec_x, hidden, Td, B, params['dec_gru'], params['dec_out'])   # (Td, B, V)

    t_weights = t_w[:, 0]                                             # (B,)
    return a_weights, t_weights, (mu_last, logvar_last, mu, logvar)


# ---------------------------------------------------------------------------
# Demo
# ---------------------------------------------------------------------------

if __name__ == "__main__":
    key = jax.random.PRNGKey(0)
    cfg = {'eu_dim': 16, 'hu_dim': 32, 'max_ulen': 8}
    voc_goal, voc_usr, voc_sys = 40, 50, 48

    pkey, gkey, postkey, rkey, nkey = jax.random.split(key, 5)
    params = init_params(pkey, cfg, voc_goal, voc_usr, voc_sys)

    B, Lg, S, W, Tr = 2, 6, 3, 5, 7
    goals = jax.random.randint(gkey, (B, Lg), 0, voc_goal, dtype=jnp.int32)
    goals_length = jnp.array([6, 4], jnp.int32)
    posts = jax.random.randint(postkey, (B, S, W), 0, voc_sys, dtype=jnp.int32)
    posts_length = jnp.array([[5, 3, 4], [2, 5, 3]], jnp.int32)
    origin_responses = jax.random.randint(rkey, (B, Tr), 0, voc_usr, dtype=jnp.int32)

    forward = jax.jit(
        lambda g, gl, p, pln, r, k: vhus_forward(params, cfg, g, gl, p, pln, r, k))
    a_weights, t_weights, (mu_last, logvar_last, mu, logvar) = forward(
        goals, goals_length, posts, posts_length, origin_responses, nkey)

    jax.block_until_ready((a_weights, t_weights, mu_last, logvar_last, mu, logvar))

    assert a_weights.shape == (Tr - 1, B, voc_usr)
    assert t_weights.shape == (B,)
    assert mu.shape == (B, cfg['hu_dim']) and logvar_last.shape == (B, cfg['hu_dim'])
    assert bool(jnp.all(jnp.isfinite(a_weights)))
    print("KERNEL_OK")
</pallas_src>

<mosaic_0001>
module attributes {stable_mosaic.version = 11 : i64} {
  func.func @_enc_gru_gather_kernel(%arg0: memref<12x16xf32, #tpu.memory_space<vmem>>, %arg1: memref<2x1xi32, #tpu.memory_space<vmem>>, %arg2: memref<16x96xf32, #tpu.memory_space<vmem>>, %arg3: memref<32x96xf32, #tpu.memory_space<vmem>>, %arg4: memref<1x96xf32, #tpu.memory_space<vmem>>, %arg5: memref<1x32xf32, #tpu.memory_space<vmem>>, %arg6: memref<2x32xf32, #tpu.memory_space<vmem>>, %arg7: memref<12x96xf32, #tpu.memory_space<vmem>>) attributes {dimension_semantics = [], scalar_prefetch = 0 : i64, scratch_operands = 1 : i64, tpu.core_type = #tpu.core_type<tc>} {
    %c0 = arith.constant 0 : index
    %c0_0 = arith.constant 0 : index
    %0 = vector.load %arg0[%c0, %c0_0] : memref<12x16xf32, #tpu.memory_space<vmem>>, vector<12x16xf32>
    %c0_1 = arith.constant 0 : index
    %c0_2 = arith.constant 0 : index
    %1 = vector.load %arg2[%c0_1, %c0_2] : memref<16x96xf32, #tpu.memory_space<vmem>>, vector<16x96xf32>
    %cst = arith.constant dense<0.000000e+00> : vector<12x96xf32>
    %2 = tpu.matmul %0, %1, %cst {dimension_numbers = #tpu.dot_dimension_numbers<[1], [0], [0], [1], [0, 0, 1, 1], [], []>} : vector<12x16xf32>, vector<16x96xf32>, vector<12x96xf32> -> vector<12x96xf32>
    %c0_3 = arith.constant 0 : index
    %c0_4 = arith.constant 0 : index
    %3 = vector.load %arg4[%c0_3, %c0_4] : memref<1x96xf32, #tpu.memory_space<vmem>>, vector<1x96xf32>
    %4 = vector.broadcast %3 : vector<1x96xf32> to vector<12x96xf32>
    %5 = arith.addf %2, %4 : vector<12x96xf32>
    %c0_5 = arith.constant 0 : index
    %c0_6 = arith.constant 0 : index
    %6 = vector.load %arg7[%c0_5, %c0_6] : memref<12x96xf32, #tpu.memory_space<vmem>>, vector<12x96xf32>
    tpu.vector_store %arg7[%c0_5, %c0_6], %5 {strides = array<i32>} : memref<12x96xf32, #tpu.memory_space<vmem>>, vector<12x96xf32>,
    %c0_7 = arith.constant 0 : index
    %c0_8 = arith.constant 0 : index
    %7 = vector.load %arg3[%c0_7, %c0_8] : memref<32x96xf32, #tpu.memory_space<vmem>>, vector<32x96xf32>
    %c0_9 = arith.constant 0 : index
    %c0_10 = arith.constant 0 : index
    %8 = vector.load %arg5[%c0_9, %c0_10] : memref<1x32xf32, #tpu.memory_space<vmem>>, vector<1x32xf32>
    %c0_11 = arith.constant 0 : index
    %c0_12 = arith.constant 0 : index
    %9 = vector.load %arg1[%c0_11, %c0_12] : memref<2x1xi32, #tpu.memory_space<vmem>>, vector<2x1xi32>
    %cst_13 = arith.constant 0.000000e+00 : f32
    %10 = vector.broadcast %cst_13 : f32 to vector<2x32xf32>
    %cst_14 = arith.constant 0.000000e+00 : f32
    %11 = vector.broadcast %cst_14 : f32 to vector<2x32xf32>
    %c0_15 = arith.constant 0 : index
    %c0_16 = arith.constant 0 : index
    %12 = vector.load %arg7[%c0_15, %c0_16] : memref<12x96xf32, #tpu.memory_space<vmem>>, vector<2x96xf32>
    %cst_17 = arith.constant dense<0.000000e+00> : vector<2x96xf32>
    %13 = tpu.matmul %10, %7, %cst_17 {dimension_numbers = #tpu.dot_dimension_numbers<[1], [0], [0], [1], [0, 0, 1, 1], [], []>} : vector<2x32xf32>, vector<32x96xf32>, vector<2x96xf32> -> vector<2x96xf32>
    %14 = vector.extract_strided_slice %12 {offsets = [0, 0], sizes = [2, 32], strides = [1, 1]} : vector<2x96xf32> to vector<2x32xf32>
    %15 = vector.extract_strided_slice %13 {offsets = [0, 0], sizes = [2, 32], strides = [1, 1]} : vector<2x96xf32> to vector<2x32xf32>
    %16 = arith.addf %14, %15 : vector<2x32xf32>
    %cst_18 = arith.constant 0.000000e+00 : f32
    %17 = vector.broadcast %cst_18 : f32 to vector<2x32xf32>
    %18 = arith.subf %17, %16 : vector<2x32xf32>
    %19 = math.exp %18 : vector<2x32xf32>
    %cst_19 = arith.constant 1.000000e+00 : f32
    %20 = vector.broadcast %cst_19 : f32 to vector<2x32xf32>
    %21 = arith.addf %20, %19 : vector<2x32xf32>
    %22 = tpu.reciprocal %21 {approx = true} : vector<2x32xf32> -> vector<2x32xf32>
    %23 = vector.extract_strided_slice %12 {offsets = [0, 32], sizes = [2, 32], strides = [1, 1]} : vector<2x96xf32> to vector<2x32xf32>
    %24 = vector.extract_strided_slice %13 {offsets = [0, 32], sizes = [2, 32], strides = [1, 1]} : vector<2x96xf32> to vector<2x32xf32>
    %25 = arith.addf %23, %24 : vector<2x32xf32>
    %cst_20 = arith.constant 0.000000e+00 : f32
    %26 = vector.broadcast %cst_20 : f32 to vector<2x32xf32>
    %27 = arith.subf %26, %25 : vector<2x32xf32>
    %28 = math.exp %27 : vector<2x32xf32>
    %cst_21 = arith.constant 1.000000e+00 : f32
    %29 = vector.broadcast %cst_21 : f32 to vector<2x32xf32>
    %30 = arith.addf %29, %28 : vector<2x32xf32>
    %31 = tpu.reciprocal %30 {approx = true} : vector<2x32xf32> -> vector<2x32xf32>
    %32 = vector.extract_strided_slice %12 {offsets = [0, 64], sizes = [2, 32], strides = [1, 1]} : vector<2x96xf32> to vector<2x32xf32>
    %33 = vector.extract_strided_slice %13 {offsets = [0, 64], sizes = [2, 32], strides = [1, 1]} : vector<2x96xf32> to vector<2x32xf32>
    %34 = vector.broadcast %8 : vector<1x32xf32> to vector<2x32xf32>
    %35 = arith.addf %33, %34 : vector<2x32xf32>
    %36 = arith.mulf %22, %35 : vector<2x32xf32>
    %37 = arith.addf %32, %36 : vector<2x32xf32>
    %38 = math.tanh %37 : vector<2x32xf32>
    %cst_22 = arith.constant 1.000000e+00 : f32
    %39 = vector.broadcast %cst_22 : f32 to vector<2x32xf32>
    %40 = arith.subf %39, %31 : vector<2x32xf32>
    %41 = arith.mulf %40, %38 : vector<2x32xf32>
    %42 = arith.mulf %31, %10 : vector<2x32xf32>
    %43 = arith.addf %41, %42 : vector<2x32xf32>
    %c0_i32 = arith.constant 0 : i32
    %44 = vector.broadcast %c0_i32 : i32 to vector<2x1xi32>
    %45 = arith.cmpi eq, %9, %44 : vector<2x1xi32>
    %46 = vector.shape_cast %45 : vector<2x1xi1> to vector<2x1xi1>
    %47 = vector.broadcast %46 : vector<2x1xi1> to vector<2x32xi1>
    %48 = arith.select %47, %43, %11 : vector<2x32xi1>, vector<2x32xf32>
    %c2 = arith.constant 2 : index
    %c0_23 = arith.constant 0 : index
    %49 = vector.load %arg7[%c2, %c0_23] : memref<12x96xf32, #tpu.memory_space<vmem>>, vector<2x96xf32>
    %cst_24 = arith.constant dense<0.000000e+00> : vector<2x96xf32>
    %50 = tpu.matmul %43, %7, %cst_24 {dimension_numbers = #tpu.dot_dimension_numbers<[1], [0], [0], [1], [0, 0, 1, 1], [], []>} : vector<2x32xf32>, vector<32x96xf32>, vector<2x96xf32> -> vector<2x96xf32>
    %51 = vector.extract_strided_slice %49 {offsets = [0, 0], sizes = [2, 32], strides = [1, 1]} : vector<2x96xf32> to vector<2x32xf32>
    %52 = vector.extract_strided_slice %50 {offsets = [0, 0], sizes = [2, 32], strides = [1, 1]} : vector<2x96xf32> to vector<2x32xf32>
    %53 = arith.addf %51, %52 : vector<2x32xf32>
    %cst_25 = arith.constant 0.000000e+00 : f32
    %54 = vector.broadcast %cst_25 : f32 to vector<2x32xf32>
    %55 = arith.subf %54, %53 : vector<2x32xf32>
    %56 = math.exp %55 : vector<2x32xf32>
    %cst_26 = arith.constant 1.000000e+00 : f32
    %57 = vector.broadcast %cst_26 : f32 to vector<2x32xf32>
    %58 = arith.addf %57, %56 : vector<2x32xf32>
    %59 = tpu.reciprocal %58 {approx = true} : vector<2x32xf32> -> vector<2x32xf32>
    %60 = vector.extract_strided_slice %49 {offsets = [0, 32], sizes = [2, 32], strides = [1, 1]} : vector<2x96xf32> to vector<2x32xf32>
    %61 = vector.extract_strided_slice %50 {offsets = [0, 32], sizes = [2, 32], strides = [1, 1]} : vector<2x96xf32> to vector<2x32xf32>
    %62 = arith.addf %60, %61 : vector<2x32xf32>
    %cst_27 = arith.constant 0.000000e+00 : f32
    %63 = vector.broadcast %cst_27 : f32 to vector<2x32xf32>
    %64 = arith.subf %63, %62 : vector<2x32xf32>
    %65 = math.exp %64 : vector<2x32xf32>
    %cst_28 = arith.constant 1.000000e+00 : f32
    %66 = vector.broadcast %cst_28 : f32 to vector<2x32xf32>
    %67 = arith.addf %66, %65 : vector<2x32xf32>
    %68 = tpu.reciprocal %67 {approx = true} : vector<2x32xf32> -> vector<2x32xf32>
    %69 = vector.extract_strided_slice %49 {offsets = [0, 64], sizes = [2, 32], strides = [1, 1]} : vector<2x96xf32> to vector<2x32xf32>
    %70 = vector.extract_strided_slice %50 {offsets = [0, 64], sizes = [2, 32], strides = [1, 1]} : vector<2x96xf32> to vector<2x32xf32>
    %71 = vector.broadcast %8 : vector<1x32xf32> to vector<2x32xf32>
    %72 = arith.addf %70, %71 : vector<2x32xf32>
    %73 = arith.mulf %59, %72 : vector<2x32xf32>
    %74 = arith.addf %69, %73 : vector<2x32xf32>
    %75 = math.tanh %74 : vector<2x32xf32>
    %cst_29 = arith.constant 1.000000e+00 : f32
    %76 = vector.broadcast %cst_29 : f32 to vector<2x32xf32>
    %77 = arith.subf %76, %68 : vector<2x32xf32>
    %78 = arith.mulf %77, %75 : vector<2x32xf32>
    %79 = arith.mulf %68, %43 : vector<2x32xf32>
    %80 = arith.addf %78, %79 : vector<2x32xf32>
    %c1_i32 = arith.constant 1 : i32
    %81 = vector.broadcast %c1_i32 : i32 to vector<2x1xi32>
    %82 = arith.cmpi eq, %9, %81 : vector<2x1xi32>
    %83 = vector.shape_cast %82 : vector<2x1xi1> to vector<2x1xi1>
    %84 = vector.broadcast %83 : vector<2x1xi1> to vector<2x32xi1>
    %85 = arith.select %84, %80, %48 : vector<2x32xi1>, vector<2x32xf32>
    %c4 = arith.constant 4 : index
    %c0_30 = arith.constant 0 : index
    %86 = vector.load %arg7[%c4, %c0_30] : memref<12x96xf32, #tpu.memory_space<vmem>>, vector<2x96xf32>
    %cst_31 = arith.constant dense<0.000000e+00> : vector<2x96xf32>
    %87 = tpu.matmul %80, %7, %cst_31 {dimension_numbers = #tpu.dot_dimension_numbers<[1], [0], [0], [1], [0, 0, 1, 1], [], []>} : vector<2x32xf32>, vector<32x96xf32>, vector<2x96xf32> -> vector<2x96xf32>
    %88 = vector.extract_strided_slice %86 {offsets = [0, 0], sizes = [2, 32], strides = [1, 1]} : vector<2x96xf32> to vector<2x32xf32>
    %89 = vector.extract_strided_slice %87 {offsets = [0, 0], sizes = [2, 32], strides = [1, 1]} : vector<2x96xf32> to vector<2x32xf32>
    %90 = arith.addf %88, %89 : vector<2x32xf32>
    %cst_32 = arith.constant 0.000000e+00 : f32
    %91 = vector.broadcast %cst_32 : f32 to vector<2x32xf32>
    %92 = arith.subf %91, %90 : vector<2x32xf32>
    %93 = math.exp %92 : vector<2x32xf32>
    %cst_33 = arith.constant 1.000000e+00 : f32
    %94 = vector.broadcast %cst_33 : f32 to vector<2x32xf32>
    %95 = arith.addf %94, %93 : vector<2x32xf32>
    %96 = tpu.reciprocal %95 {approx = true} : vector<2x32xf32> -> vector<2x32xf32>
    %97 = vector.extract_strided_slice %86 {offsets = [0, 32], sizes = [2, 32], strides = [1, 1]} : vector<2x96xf32> to vector<2x32xf32>
    %98 = vector.extract_strided_slice %87 {offsets = [0, 32], sizes = [2, 32], strides = [1, 1]} : vector<2x96xf32> to vector<2x32xf32>
    %99 = arith.addf %97, %98 : vector<2x32xf32>
    %cst_34 = arith.constant 0.000000e+00 : f32
    %100 = vector.broadcast %cst_34 : f32 to vector<2x32xf32>
    %101 = arith.subf %100, %99 : vector<2x32xf32>
    %102 = math.exp %101 : vector<2x32xf32>
    %cst_35 = arith.constant 1.000000e+00 : f32
    %103 = vector.broadcast %cst_35 : f32 to vector<2x32xf32>
    %104 = arith.addf %103, %102 : vector<2x32xf32>
    %105 = tpu.reciprocal %104 {approx = true} : vector<2x32xf32> -> vector<2x32xf32>
    %106 = vector.extract_strided_slice %86 {offsets = [0, 64], sizes = [2, 32], strides = [1, 1]} : vector<2x96xf32> to vector<2x32xf32>
    %107 = vector.extract_strided_slice %87 {offsets = [0, 64], sizes = [2, 32], strides = [1, 1]} : vector<2x96xf32> to vector<2x32xf32>
    %108 = vector.broadcast %8 : vector<1x32xf32> to vector<2x32xf32>
    %109 = arith.addf %107, %108 : vector<2x32xf32>
    %110 = arith.mulf %96, %109 : vector<2x32xf32>
    %111 = arith.addf %106, %110 : vector<2x32xf32>
    %112 = math.tanh %111 : vector<2x32xf32>
    %cst_36 = arith.constant 1.000000e+00 : f32
    %113 = vector.broadcast %cst_36 : f32 to vector<2x32xf32>
    %114 = arith.subf %113, %105 : vector<2x32xf32>
    %115 = arith.mulf %114, %112 : vector<2x32xf32>
    %116 = arith.mulf %105, %80 : vector<2x32xf32>
    %117 = arith.addf %115, %116 : vector<2x32xf32>
    %c2_i32 = arith.constant 2 : i32
    %118 = vector.broadcast %c2_i32 : i32 to vector<2x1xi32>
    %119 = arith.cmpi eq, %9, %118 : vector<2x1xi32>
    %120 = vector.shape_cast %119 : vector<2x1xi1> to vector<2x1xi1>
    %121 = vector.broadcast %120 : vector<2x1xi1> to vector<2x32xi1>
    %122 = arith.select %121, %117, %85 : vector<2x32xi1>, vector<2x32xf32>
    %c6 = arith.constant 6 : index
    %c0_37 = arith.constant 0 : index
    %123 = vector.load %arg7[%c6, %c0_37] : memref<12x96xf32, #tpu.memory_space<vmem>>, vector<2x96xf32>
    %cst_38 = arith.constant dense<0.000000e+00> : vector<2x96xf32>
    %124 = tpu.matmul %117, %7, %cst_38 {dimension_numbers = #tpu.dot_dimension_numbers<[1], [0], [0], [1], [0, 0, 1, 1], [], []>} : vector<2x32xf32>, vector<32x96xf32>, vector<2x96xf32> -> vector<2x96xf32>
    %125 = vector.extract_strided_slice %123 {offsets = [0, 0], sizes = [2, 32], strides = [1, 1]} : vector<2x96xf32> to vector<2x32xf32>
    %126 = vector.extract_strided_slice %124 {offsets = [0, 0], sizes = [2, 32], strides = [1, 1]} : vector<2x96xf32> to vector<2x32xf32>
    %127 = arith.addf %125, %126 : vector<2x32xf32>
    %cst_39 = arith.constant 0.000000e+00 : f32
    %128 = vector.broadcast %cst_39 : f32 to vector<2x32xf32>
    %129 = arith.subf %128, %127 : vector<2x32xf32>
    %130 = math.exp %129 : vector<2x32xf32>
    %cst_40 = arith.constant 1.000000e+00 : f32
    %131 = vector.broadcast %cst_40 : f32 to vector<2x32xf32>
    %132 = arith.addf %131, %130 : vector<2x32xf32>
    %133 = tpu.reciprocal %132 {approx = true} : vector<2x32xf32> -> vector<2x32xf32>
    %134 = vector.extract_strided_slice %123 {offsets = [0, 32], sizes = [2, 32], strides = [1, 1]} : vector<2x96xf32> to vector<2x32xf32>
    %135 = vector.extract_strided_slice %124 {offsets = [0, 32], sizes = [2, 32], strides = [1, 1]} : vector<2x96xf32> to vector<2x32xf32>
    %136 = arith.addf %134, %135 : vector<2x32xf32>
    %cst_41 = arith.constant 0.000000e+00 : f32
    %137 = vector.broadcast %cst_41 : f32 to vector<2x32xf32>
    %138 = arith.subf %137, %136 : vector<2x32xf32>
    %139 = math.exp %138 : vector<2x32xf32>
    %cst_42 = arith.constant 1.000000e+00 : f32
    %140 = vector.broadcast %cst_42 : f32 to vector<2x32xf32>
    %141 = arith.addf %140, %139 : vector<2x32xf32>
    %142 = tpu.reciprocal %141 {approx = true} : vector<2x32xf32> -> vector<2x32xf32>
    %143 = vector.extract_strided_slice %123 {offsets = [0, 64], sizes = [2, 32], strides = [1, 1]} : vector<2x96xf32> to vector<2x32xf32>
    %144 = vector.extract_strided_slice %124 {offsets = [0, 64], sizes = [2, 32], strides = [1, 1]} : vector<2x96xf32> to vector<2x32xf32>
    %145 = vector.broadcast %8 : vector<1x32xf32> to vector<2x32xf32>
    %146 = arith.addf %144, %145 : vector<2x32xf32>
    %147 = arith.mulf %133, %146 : vector<2x32xf32>
    %148 = arith.addf %143, %147 : vector<2x32xf32>
    %149 = math.tanh %148 : vector<2x32xf32>
    %cst_43 = arith.constant 1.000000e+00 : f32
    %150 = vector.broadcast %cst_43 : f32 to vector<2x32xf32>
    %151 = arith.subf %150, %142 : vector<2x32xf32>
    %152 = arith.mulf %151, %149 : vector<2x32xf32>
    %153 = arith.mulf %142, %117 : vector<2x32xf32>
    %154 = arith.addf %152, %153 : vector<2x32xf32>
    %c3_i32 = arith.constant 3 : i32
    %155 = vector.broadcast %c3_i32 : i32 to vector<2x1xi32>
    %156 = arith.cmpi eq, %9, %155 : vector<2x1xi32>
    %157 = vector.shape_cast %156 : vector<2x1xi1> to vector<2x1xi1>
    %158 = vector.broadcast %157 : vector<2x1xi1> to vector<2x32xi1>
    %159 = arith.select %158, %154, %122 : vector<2x32xi1>, vector<2x32xf32>
    %c8 = arith.constant 8 : index
    %c0_44 = arith.constant 0 : index
    %160 = vector.load %arg7[%c8, %c0_44] : memref<12x96xf32, #tpu.memory_space<vmem>>, vector<2x96xf32>
    %cst_45 = arith.constant dense<0.000000e+00> : vector<2x96xf32>
    %161 = tpu.matmul %154, %7, %cst_45 {dimension_numbers = #tpu.dot_dimension_numbers<[1], [0], [0], [1], [0, 0, 1, 1], [], []>} : vector<2x32xf32>, vector<32x96xf32>, vector<2x96xf32> -> vector<2x96xf32>
    %162 = vector.extract_strided_slice %160 {offsets = [0, 0], sizes = [2, 32], strides = [1, 1]} : vector<2x96xf32> to vector<2x32xf32>
    %163 = vector.extract_strided_slice %161 {offsets = [0, 0], sizes = [2, 32], strides = [1, 1]} : vector<2x96xf32> to vector<2x32xf32>
    %164 = arith.addf %162, %163 : vector<2x32xf32>
    %cst_46 = arith.constant 0.000000e+00 : f32
    %165 = vector.broadcast %cst_46 : f32 to vector<2x32xf32>
    %166 = arith.subf %165, %164 : vector<2x32xf32>
    %167 = math.exp %166 : vector<2x32xf32>
    %cst_47 = arith.constant 1.000000e+00 : f32
    %168 = vector.broadcast %cst_47 : f32 to vector<2x32xf32>
    %169 = arith.addf %168, %167 : vector<2x32xf32>
    %170 = tpu.reciprocal %169 {approx = true} : vector<2x32xf32> -> vector<2x32xf32>
    %171 = vector.extract_strided_slice %160 {offsets = [0, 32], sizes = [2, 32], strides = [1, 1]} : vector<2x96xf32> to vector<2x32xf32>
    %172 = vector.extract_strided_slice %161 {offsets = [0, 32], sizes = [2, 32], strides = [1, 1]} : vector<2x96xf32> to vector<2x32xf32>
    %173 = arith.addf %171, %172 : vector<2x32xf32>
    %cst_48 = arith.constant 0.000000e+00 : f32
    %174 = vector.broadcast %cst_48 : f32 to vector<2x32xf32>
    %175 = arith.subf %174, %173 : vector<2x32xf32>
    %176 = math.exp %175 : vector<2x32xf32>
    %cst_49 = arith.constant 1.000000e+00 : f32
    %177 = vector.broadcast %cst_49 : f32 to vector<2x32xf32>
    %178 = arith.addf %177, %176 : vector<2x32xf32>
    %179 = tpu.reciprocal %178 {approx = true} : vector<2x32xf32> -> vector<2x32xf32>
    %180 = vector.extract_strided_slice %160 {offsets = [0, 64], sizes = [2, 32], strides = [1, 1]} : vector<2x96xf32> to vector<2x32xf32>
    %181 = vector.extract_strided_slice %161 {offsets = [0, 64], sizes = [2, 32], strides = [1, 1]} : vector<2x96xf32> to vector<2x32xf32>
    %182 = vector.broadcast %8 : vector<1x32xf32> to vector<2x32xf32>
    %183 = arith.addf %181, %182 : vector<2x32xf32>
    %184 = arith.mulf %170, %183 : vector<2x32xf32>
    %185 = arith.addf %180, %184 : vector<2x32xf32>
    %186 = math.tanh %185 : vector<2x32xf32>
    %cst_50 = arith.constant 1.000000e+00 : f32
    %187 = vector.broadcast %cst_50 : f32 to vector<2x32xf32>
    %188 = arith.subf %187, %179 : vector<2x32xf32>
    %189 = arith.mulf %188, %186 : vector<2x32xf32>
    %190 = arith.mulf %179, %154 : vector<2x32xf32>
    %191 = arith.addf %189, %190 : vector<2x32xf32>
    %c4_i32 = arith.constant 4 : i32
    %192 = vector.broadcast %c4_i32 : i32 to vector<2x1xi32>
    %193 = arith.cmpi eq, %9, %192 : vector<2x1xi32>
    %194 = vector.shape_cast %193 : vector<2x1xi1> to vector<2x1xi1>
    %195 = vector.broadcast %194 : vector<2x1xi1> to vector<2x32xi1>
    %196 = arith.select %195, %191, %159 : vector<2x32xi1>, vector<2x32xf32>
    %c10 = arith.constant 10 : index
    %c0_51 = arith.constant 0 : index
    %197 = vector.load %arg7[%c10, %c0_51] : memref<12x96xf32, #tpu.memory_space<vmem>>, vector<2x96xf32>
    %cst_52 = arith.constant dense<0.000000e+00> : vector<2x96xf32>
    %198 = tpu.matmul %191, %7, %cst_52 {dimension_numbers = #tpu.dot_dimension_numbers<[1], [0], [0], [1], [0, 0, 1, 1], [], []>} : vector<2x32xf32>, vector<32x96xf32>, vector<2x96xf32> -> vector<2x96xf32>
    %199 = vector.extract_strided_slice %197 {offsets = [0, 0], sizes = [2, 32], strides = [1, 1]} : vector<2x96xf32> to vector<2x32xf32>
    %200 = vector.extract_strided_slice %198 {offsets = [0, 0], sizes = [2, 32], strides = [1, 1]} : vector<2x96xf32> to vector<2x32xf32>
    %201 = arith.addf %199, %200 : vector<2x32xf32>
    %cst_53 = arith.constant 0.000000e+00 : f32
    %202 = vector.broadcast %cst_53 : f32 to vector<2x32xf32>
    %203 = arith.subf %202, %201 : vector<2x32xf32>
    %204 = math.exp %203 : vector<2x32xf32>
    %cst_54 = arith.constant 1.000000e+00 : f32
    %205 = vector.broadcast %cst_54 : f32 to vector<2x32xf32>
    %206 = arith.addf %205, %204 : vector<2x32xf32>
    %207 = tpu.reciprocal %206 {approx = true} : vector<2x32xf32> -> vector<2x32xf32>
    %208 = vector.extract_strided_slice %197 {offsets = [0, 32], sizes = [2, 32], strides = [1, 1]} : vector<2x96xf32> to vector<2x32xf32>
    %209 = vector.extract_strided_slice %198 {offsets = [0, 32], sizes = [2, 32], strides = [1, 1]} : vector<2x96xf32> to vector<2x32xf32>
    %210 = arith.addf %208, %209 : vector<2x32xf32>
    %cst_55 = arith.constant 0.000000e+00 : f32
    %211 = vector.broadcast %cst_55 : f32 to vector<2x32xf32>
    %212 = arith.subf %211, %210 : vector<2x32xf32>
    %213 = math.exp %212 : vector<2x32xf32>
    %cst_56 = arith.constant 1.000000e+00 : f32
    %214 = vector.broadcast %cst_56 : f32 to vector<2x32xf32>
    %215 = arith.addf %214, %213 : vector<2x32xf32>
    %216 = tpu.reciprocal %215 {approx = true} : vector<2x32xf32> -> vector<2x32xf32>
    %217 = vector.extract_strided_slice %197 {offsets = [0, 64], sizes = [2, 32], strides = [1, 1]} : vector<2x96xf32> to vector<2x32xf32>
    %218 = vector.extract_strided_slice %198 {offsets = [0, 64], sizes = [2, 32], strides = [1, 1]} : vector<2x96xf32> to vector<2x32xf32>
    %219 = vector.broadcast %8 : vector<1x32xf32> to vector<2x32xf32>
    %220 = arith.addf %218, %219 : vector<2x32xf32>
    %221 = arith.mulf %207, %220 : vector<2x32xf32>
    %222 = arith.addf %217, %221 : vector<2x32xf32>
    %223 = math.tanh %222 : vector<2x32xf32>
    %cst_57 = arith.constant 1.000000e+00 : f32
    %224 = vector.broadcast %cst_57 : f32 to vector<2x32xf32>
    %225 = arith.subf %224, %216 : vector<2x32xf32>
    %226 = arith.mulf %225, %223 : vector<2x32xf32>
    %227 = arith.mulf %216, %191 : vector<2x32xf32>
    %228 = arith.addf %226, %227 : vector<2x32xf32>
    %c5_i32 = arith.constant 5 : i32
    %229 = vector.broadcast %c5_i32 : i32 to vector<2x1xi32>
    %230 = arith.cmpi eq, %9, %229 : vector<2x1xi32>
    %231 = vector.shape_cast %230 : vector<2x1xi1> to vector<2x1xi1>
    %232 = vector.broadcast %231 : vector<2x1xi1> to vector<2x32xi1>
    %233 = arith.select %232, %228, %196 : vector<2x32xi1>, vector<2x32xf32>
    %c0_58 = arith.constant 0 : index
    %c0_59 = arith.constant 0 : index
    %234 = vector.load %arg6[%c0_58, %c0_59] : memref<2x32xf32, #tpu.memory_space<vmem>>, vector<2x32xf32>
    tpu.vector_store %arg6[%c0_58, %c0_59], %233 {strides = array<i32>} : memref<2x32xf32, #tpu.memory_space<vmem>>, vector<2x32xf32>,
    return
  }
}

module attributes {stable_mosaic.version = 11 : i64} {
  func.func @_enc_gru_gather_kernel(%arg0: memref<30x16xf32, #tpu.memory_space<vmem>>, %arg1: memref<6x1xi32, #tpu.memory_space<vmem>>, %arg2: memref<16x96xf32, #tpu.memory_space<vmem>>, %arg3: memref<32x96xf32, #tpu.memory_space<vmem>>, %arg4: memref<1x96xf32, #tpu.memory_space<vmem>>, %arg5: memref<1x32xf32, #tpu.memory_space<vmem>>, %arg6: memref<6x32xf32, #tpu.memory_space<vmem>>, %arg7: memref<30x96xf32, #tpu.memory_space<vmem>>) attributes {dimension_semantics = [], scalar_prefetch = 0 : i64, scratch_operands = 1 : i64, tpu.core_type = #tpu.core_type<tc>} {
    %c0 = arith.constant 0 : index
    %c0_0 = arith.constant 0 : index
    %0 = vector.load %arg0[%c0, %c0_0] : memref<30x16xf32, #tpu.memory_space<vmem>>, vector<30x16xf32>
    %c0_1 = arith.constant 0 : index
    %c0_2 = arith.constant 0 : index
    %1 = vector.load %arg2[%c0_1, %c0_2] : memref<16x96xf32, #tpu.memory_space<vmem>>, vector<16x96xf32>
    %cst = arith.constant dense<0.000000e+00> : vector<30x96xf32>
    %2 = tpu.matmul %0, %1, %cst {dimension_numbers = #tpu.dot_dimension_numbers<[1], [0], [0], [1], [0, 0, 1, 1], [], []>} : vector<30x16xf32>, vector<16x96xf32>, vector<30x96xf32> -> vector<30x96xf32>
    %c0_3 = arith.constant 0 : index
    %c0_4 = arith.constant 0 : index
    %3 = vector.load %arg4[%c0_3, %c0_4] : memref<1x96xf32, #tpu.memory_space<vmem>>, vector<1x96xf32>
    %4 = vector.broadcast %3 : vector<1x96xf32> to vector<30x96xf32>
    %5 = arith.addf %2, %4 : vector<30x96xf32>
    %c0_5 = arith.constant 0 : index
    %c0_6 = arith.constant 0 : index
    %6 = vector.load %arg7[%c0_5, %c0_6] : memref<30x96xf32, #tpu.memory_space<vmem>>, vector<30x96xf32>
    tpu.vector_store %arg7[%c0_5, %c0_6], %5 {strides = array<i32>} : memref<30x96xf32, #tpu.memory_space<vmem>>, vector<30x96xf32>,
    %c0_7 = arith.constant 0 : index
    %c0_8 = arith.constant 0 : index
    %7 = vector.load %arg3[%c0_7, %c0_8] : memref<32x96xf32, #tpu.memory_space<vmem>>, vector<32x96xf32>
    %c0_9 = arith.constant 0 : index
    %c0_10 = arith.constant 0 : index
    %8 = vector.load %arg5[%c0_9, %c0_10] : memref<1x32xf32, #tpu.memory_space<vmem>>, vector<1x32xf32>
    %c0_11 = arith.constant 0 : index
    %c0_12 = arith.constant 0 : index
    %9 = vector.load %arg1[%c0_11, %c0_12] : memref<6x1xi32, #tpu.memory_space<vmem>>, vector<6x1xi32>
    %cst_13 = arith.constant 0.000000e+00 : f32
    %10 = vector.broadcast %cst_13 : f32 to vector<6x32xf32>
    %cst_14 = arith.constant 0.000000e+00 : f32
    %11 = vector.broadcast %cst_14 : f32 to vector<6x32xf32>
    %c0_15 = arith.constant 0 : index
    %c0_16 = arith.constant 0 : index
    %12 = vector.load %arg7[%c0_15, %c0_16] : memref<30x96xf32, #tpu.memory_space<vmem>>, vector<6x96xf32>
    %cst_17 = arith.constant dense<0.000000e+00> : vector<6x96xf32>
    %13 = tpu.matmul %10, %7, %cst_17 {dimension_numbers = #tpu.dot_dimension_numbers<[1], [0], [0], [1], [0, 0, 1, 1], [], []>} : vector<6x32xf32>, vector<32x96xf32>, vector<6x96xf32> -> vector<6x96xf32>
    %14 = vector.extract_strided_slice %12 {offsets = [0, 0], sizes = [6, 32], strides = [1, 1]} : vector<6x96xf32> to vector<6x32xf32>
    %15 = vector.extract_strided_slice %13 {offsets = [0, 0], sizes = [6, 32], strides = [1, 1]} : vector<6x96xf32> to vector<6x32xf32>
    %16 = arith.addf %14, %15 : vector<6x32xf32>
    %cst_18 = arith.constant 0.000000e+00 : f32
    %17 = vector.broadcast %cst_18 : f32 to vector<6x32xf32>
    %18 = arith.subf %17, %16 : vector<6x32xf32>
    %19 = math.exp %18 : vector<6x32xf32>
    %cst_19 = arith.constant 1.000000e+00 : f32
    %20 = vector.broadcast %cst_19 : f32 to vector<6x32xf32>
    %21 = arith.addf %20, %19 : vector<6x32xf32>
    %22 = tpu.reciprocal %21 {approx = true} : vector<6x32xf32> -> vector<6x32xf32>
    %23 = vector.extract_strided_slice %12 {offsets = [0, 32], sizes = [6, 32], strides = [1, 1]} : vector<6x96xf32> to vector<6x32xf32>
    %24 = vector.extract_strided_slice %13 {offsets = [0, 32], sizes = [6, 32], strides = [1, 1]} : vector<6x96xf32> to vector<6x32xf32>
    %25 = arith.addf %23, %24 : vector<6x32xf32>
    %cst_20 = arith.constant 0.000000e+00 : f32
    %26 = vector.broadcast %cst_20 : f32 to vector<6x32xf32>
    %27 = arith.subf %26, %25 : vector<6x32xf32>
    %28 = math.exp %27 : vector<6x32xf32>
    %cst_21 = arith.constant 1.000000e+00 : f32
    %29 = vector.broadcast %cst_21 : f32 to vector<6x32xf32>
    %30 = arith.addf %29, %28 : vector<6x32xf32>
    %31 = tpu.reciprocal %30 {approx = true} : vector<6x32xf32> -> vector<6x32xf32>
    %32 = vector.extract_strided_slice %12 {offsets = [0, 64], sizes = [6, 32], strides = [1, 1]} : vector<6x96xf32> to vector<6x32xf32>
    %33 = vector.extract_strided_slice %13 {offsets = [0, 64], sizes = [6, 32], strides = [1, 1]} : vector<6x96xf32> to vector<6x32xf32>
    %34 = vector.broadcast %8 : vector<1x32xf32> to vector<6x32xf32>
    %35 = arith.addf %33, %34 : vector<6x32xf32>
    %36 = arith.mulf %22, %35 : vector<6x32xf32>
    %37 = arith.addf %32, %36 : vector<6x32xf32>
    %38 = math.tanh %37 : vector<6x32xf32>
    %cst_22 = arith.constant 1.000000e+00 : f32
    %39 = vector.broadcast %cst_22 : f32 to vector<6x32xf32>
    %40 = arith.subf %39, %31 : vector<6x32xf32>
    %41 = arith.mulf %40, %38 : vector<6x32xf32>
    %42 = arith.mulf %31, %10 : vector<6x32xf32>
    %43 = arith.addf %41, %42 : vector<6x32xf32>
    %c0_i32 = arith.constant 0 : i32
    %44 = vector.broadcast %c0_i32 : i32 to vector<6x1xi32>
    %45 = arith.cmpi eq, %9, %44 : vector<6x1xi32>
    %46 = vector.shape_cast %45 : vector<6x1xi1> to vector<6x1xi1>
    %47 = vector.broadcast %46 : vector<6x1xi1> to vector<6x32xi1>
    %48 = arith.select %47, %43, %11 : vector<6x32xi1>, vector<6x32xf32>
    %c6 = arith.constant 6 : index
    %c0_23 = arith.constant 0 : index
    %49 = vector.load %arg7[%c6, %c0_23] : memref<30x96xf32, #tpu.memory_space<vmem>>, vector<6x96xf32>
    %cst_24 = arith.constant dense<0.000000e+00> : vector<6x96xf32>
    %50 = tpu.matmul %43, %7, %cst_24 {dimension_numbers = #tpu.dot_dimension_numbers<[1], [0], [0], [1], [0, 0, 1, 1], [], []>} : vector<6x32xf32>, vector<32x96xf32>, vector<6x96xf32> -> vector<6x96xf32>
    %51 = vector.extract_strided_slice %49 {offsets = [0, 0], sizes = [6, 32], strides = [1, 1]} : vector<6x96xf32> to vector<6x32xf32>
    %52 = vector.extract_strided_slice %50 {offsets = [0, 0], sizes = [6, 32], strides = [1, 1]} : vector<6x96xf32> to vector<6x32xf32>
    %53 = arith.addf %51, %52 : vector<6x32xf32>
    %cst_25 = arith.constant 0.000000e+00 : f32
    %54 = vector.broadcast %cst_25 : f32 to vector<6x32xf32>
    %55 = arith.subf %54, %53 : vector<6x32xf32>
    %56 = math.exp %55 : vector<6x32xf32>
    %cst_26 = arith.constant 1.000000e+00 : f32
    %57 = vector.broadcast %cst_26 : f32 to vector<6x32xf32>
    %58 = arith.addf %57, %56 : vector<6x32xf32>
    %59 = tpu.reciprocal %58 {approx = true} : vector<6x32xf32> -> vector<6x32xf32>
    %60 = vector.extract_strided_slice %49 {offsets = [0, 32], sizes = [6, 32], strides = [1, 1]} : vector<6x96xf32> to vector<6x32xf32>
    %61 = vector.extract_strided_slice %50 {offsets = [0, 32], sizes = [6, 32], strides = [1, 1]} : vector<6x96xf32> to vector<6x32xf32>
    %62 = arith.addf %60, %61 : vector<6x32xf32>
    %cst_27 = arith.constant 0.000000e+00 : f32
    %63 = vector.broadcast %cst_27 : f32 to vector<6x32xf32>
    %64 = arith.subf %63, %62 : vector<6x32xf32>
    %65 = math.exp %64 : vector<6x32xf32>
    %cst_28 = arith.constant 1.000000e+00 : f32
    %66 = vector.broadcast %cst_28 : f32 to vector<6x32xf32>
    %67 = arith.addf %66, %65 : vector<6x32xf32>
    %68 = tpu.reciprocal %67 {approx = true} : vector<6x32xf32> -> vector<6x32xf32>
    %69 = vector.extract_strided_slice %49 {offsets = [0, 64], sizes = [6, 32], strides = [1, 1]} : vector<6x96xf32> to vector<6x32xf32>
    %70 = vector.extract_strided_slice %50 {offsets = [0, 64], sizes = [6, 32], strides = [1, 1]} : vector<6x96xf32> to vector<6x32xf32>
    %71 = vector.broadcast %8 : vector<1x32xf32> to vector<6x32xf32>
    %72 = arith.addf %70, %71 : vector<6x32xf32>
    %73 = arith.mulf %59, %72 : vector<6x32xf32>
    %74 = arith.addf %69, %73 : vector<6x32xf32>
    %75 = math.tanh %74 : vector<6x32xf32>
    %cst_29 = arith.constant 1.000000e+00 : f32
    %76 = vector.broadcast %cst_29 : f32 to vector<6x32xf32>
    %77 = arith.subf %76, %68 : vector<6x32xf32>
    %78 = arith.mulf %77, %75 : vector<6x32xf32>
    %79 = arith.mulf %68, %43 : vector<6x32xf32>
    %80 = arith.addf %78, %79 : vector<6x32xf32>
    %c1_i32 = arith.constant 1 : i32
    %81 = vector.broadcast %c1_i32 : i32 to vector<6x1xi32>
    %82 = arith.cmpi eq, %9, %81 : vector<6x1xi32>
    %83 = vector.shape_cast %82 : vector<6x1xi1> to vector<6x1xi1>
    %84 = vector.broadcast %83 : vector<6x1xi1> to vector<6x32xi1>
    %85 = arith.select %84, %80, %48 : vector<6x32xi1>, vector<6x32xf32>
    %c12 = arith.constant 12 : index
    %c0_30 = arith.constant 0 : index
    %86 = vector.load %arg7[%c12, %c0_30] : memref<30x96xf32, #tpu.memory_space<vmem>>, vector<6x96xf32>
    %cst_31 = arith.constant dense<0.000000e+00> : vector<6x96xf32>
    %87 = tpu.matmul %80, %7, %cst_31 {dimension_numbers = #tpu.dot_dimension_numbers<[1], [0], [0], [1], [0, 0, 1, 1], [], []>} : vector<6x32xf32>, vector<32x96xf32>, vector<6x96xf32> -> vector<6x96xf32>
    %88 = vector.extract_strided_slice %86 {offsets = [0, 0], sizes = [6, 32], strides = [1, 1]} : vector<6x96xf32> to vector<6x32xf32>
    %89 = vector.extract_strided_slice %87 {offsets = [0, 0], sizes = [6, 32], strides = [1, 1]} : vector<6x96xf32> to vector<6x32xf32>
    %90 = arith.addf %88, %89 : vector<6x32xf32>
    %cst_32 = arith.constant 0.000000e+00 : f32
    %91 = vector.broadcast %cst_32 : f32 to vector<6x32xf32>
    %92 = arith.subf %91, %90 : vector<6x32xf32>
    %93 = math.exp %92 : vector<6x32xf32>
    %cst_33 = arith.constant 1.000000e+00 : f32
    %94 = vector.broadcast %cst_33 : f32 to vector<6x32xf32>
    %95 = arith.addf %94, %93 : vector<6x32xf32>
    %96 = tpu.reciprocal %95 {approx = true} : vector<6x32xf32> -> vector<6x32xf32>
    %97 = vector.extract_strided_slice %86 {offsets = [0, 32], sizes = [6, 32], strides = [1, 1]} : vector<6x96xf32> to vector<6x32xf32>
    %98 = vector.extract_strided_slice %87 {offsets = [0, 32], sizes = [6, 32], strides = [1, 1]} : vector<6x96xf32> to vector<6x32xf32>
    %99 = arith.addf %97, %98 : vector<6x32xf32>
    %cst_34 = arith.constant 0.000000e+00 : f32
    %100 = vector.broadcast %cst_34 : f32 to vector<6x32xf32>
    %101 = arith.subf %100, %99 : vector<6x32xf32>
    %102 = math.exp %101 : vector<6x32xf32>
    %cst_35 = arith.constant 1.000000e+00 : f32
    %103 = vector.broadcast %cst_35 : f32 to vector<6x32xf32>
    %104 = arith.addf %103, %102 : vector<6x32xf32>
    %105 = tpu.reciprocal %104 {approx = true} : vector<6x32xf32> -> vector<6x32xf32>
    %106 = vector.extract_strided_slice %86 {offsets = [0, 64], sizes = [6, 32], strides = [1, 1]} : vector<6x96xf32> to vector<6x32xf32>
    %107 = vector.extract_strided_slice %87 {offsets = [0, 64], sizes = [6, 32], strides = [1, 1]} : vector<6x96xf32> to vector<6x32xf32>
    %108 = vector.broadcast %8 : vector<1x32xf32> to vector<6x32xf32>
    %109 = arith.addf %107, %108 : vector<6x32xf32>
    %110 = arith.mulf %96, %109 : vector<6x32xf32>
    %111 = arith.addf %106, %110 : vector<6x32xf32>
    %112 = math.tanh %111 : vector<6x32xf32>
    %cst_36 = arith.constant 1.000000e+00 : f32
    %113 = vector.broadcast %cst_36 : f32 to vector<6x32xf32>
    %114 = arith.subf %113, %105 : vector<6x32xf32>
    %115 = arith.mulf %114, %112 : vector<6x32xf32>
    %116 = arith.mulf %105, %80 : vector<6x32xf32>
    %117 = arith.addf %115, %116 : vector<6x32xf32>
    %c2_i32 = arith.constant 2 : i32
    %118 = vector.broadcast %c2_i32 : i32 to vector<6x1xi32>
    %119 = arith.cmpi eq, %9, %118 : vector<6x1xi32>
    %120 = vector.shape_cast %119 : vector<6x1xi1> to vector<6x1xi1>
    %121 = vector.broadcast %120 : vector<6x1xi1> to vector<6x32xi1>
    %122 = arith.select %121, %117, %85 : vector<6x32xi1>, vector<6x32xf32>
    %c18 = arith.constant 18 : index
    %c0_37 = arith.constant 0 : index
    %123 = vector.load %arg7[%c18, %c0_37] : memref<30x96xf32, #tpu.memory_space<vmem>>, vector<6x96xf32>
    %cst_38 = arith.constant dense<0.000000e+00> : vector<6x96xf32>
    %124 = tpu.matmul %117, %7, %cst_38 {dimension_numbers = #tpu.dot_dimension_numbers<[1], [0], [0], [1], [0, 0, 1, 1], [], []>} : vector<6x32xf32>, vector<32x96xf32>, vector<6x96xf32> -> vector<6x96xf32>
    %125 = vector.extract_strided_slice %123 {offsets = [0, 0], sizes = [6, 32], strides = [1, 1]} : vector<6x96xf32> to vector<6x32xf32>
    %126 = vector.extract_strided_slice %124 {offsets = [0, 0], sizes = [6, 32], strides = [1, 1]} : vector<6x96xf32> to vector<6x32xf32>
    %127 = arith.addf %125, %126 : vector<6x32xf32>
    %cst_39 = arith.constant 0.000000e+00 : f32
    %128 = vector.broadcast %cst_39 : f32 to vector<6x32xf32>
    %129 = arith.subf %128, %127 : vector<6x32xf32>
    %130 = math.exp %129 : vector<6x32xf32>
    %cst_40 = arith.constant 1.000000e+00 : f32
    %131 = vector.broadcast %cst_40 : f32 to vector<6x32xf32>
    %132 = arith.addf %131, %130 : vector<6x32xf32>
    %133 = tpu.reciprocal %132 {approx = true} : vector<6x32xf32> -> vector<6x32xf32>
    %134 = vector.extract_strided_slice %123 {offsets = [0, 32], sizes = [6, 32], strides = [1, 1]} : vector<6x96xf32> to vector<6x32xf32>
    %135 = vector.extract_strided_slice %124 {offsets = [0, 32], sizes = [6, 32], strides = [1, 1]} : vector<6x96xf32> to vector<6x32xf32>
    %136 = arith.addf %134, %135 : vector<6x32xf32>
    %cst_41 = arith.constant 0.000000e+00 : f32
    %137 = vector.broadcast %cst_41 : f32 to vector<6x32xf32>
    %138 = arith.subf %137, %136 : vector<6x32xf32>
    %139 = math.exp %138 : vector<6x32xf32>
    %cst_42 = arith.constant 1.000000e+00 : f32
    %140 = vector.broadcast %cst_42 : f32 to vector<6x32xf32>
    %141 = arith.addf %140, %139 : vector<6x32xf32>
    %142 = tpu.reciprocal %141 {approx = true} : vector<6x32xf32> -> vector<6x32xf32>
    %143 = vector.extract_strided_slice %123 {offsets = [0, 64], sizes = [6, 32], strides = [1, 1]} : vector<6x96xf32> to vector<6x32xf32>
    %144 = vector.extract_strided_slice %124 {offsets = [0, 64], sizes = [6, 32], strides = [1, 1]} : vector<6x96xf32> to vector<6x32xf32>
    %145 = vector.broadcast %8 : vector<1x32xf32> to vector<6x32xf32>
    %146 = arith.addf %144, %145 : vector<6x32xf32>
    %147 = arith.mulf %133, %146 : vector<6x32xf32>
    %148 = arith.addf %143, %147 : vector<6x32xf32>
    %149 = math.tanh %148 : vector<6x32xf32>
    %cst_43 = arith.constant 1.000000e+00 : f32
    %150 = vector.broadcast %cst_43 : f32 to vector<6x32xf32>
    %151 = arith.subf %150, %142 : vector<6x32xf32>
    %152 = arith.mulf %151, %149 : vector<6x32xf32>
    %153 = arith.mulf %142, %117 : vector<6x32xf32>
    %154 = arith.addf %152, %153 : vector<6x32xf32>
    %c3_i32 = arith.constant 3 : i32
    %155 = vector.broadcast %c3_i32 : i32 to vector<6x1xi32>
    %156 = arith.cmpi eq, %9, %155 : vector<6x1xi32>
    %157 = vector.shape_cast %156 : vector<6x1xi1> to vector<6x1xi1>
    %158 = vector.broadcast %157 : vector<6x1xi1> to vector<6x32xi1>
    %159 = arith.select %158, %154, %122 : vector<6x32xi1>, vector<6x32xf32>
    %c24 = arith.constant 24 : index
    %c0_44 = arith.constant 0 : index
    %160 = vector.load %arg7[%c24, %c0_44] : memref<30x96xf32, #tpu.memory_space<vmem>>, vector<6x96xf32>
    %cst_45 = arith.constant dense<0.000000e+00> : vector<6x96xf32>
    %161 = tpu.matmul %154, %7, %cst_45 {dimension_numbers = #tpu.dot_dimension_numbers<[1], [0], [0], [1], [0, 0, 1, 1], [], []>} : vector<6x32xf32>, vector<32x96xf32>, vector<6x96xf32> -> vector<6x96xf32>
    %162 = vector.extract_strided_slice %160 {offsets = [0, 0], sizes = [6, 32], strides = [1, 1]} : vector<6x96xf32> to vector<6x32xf32>
    %163 = vector.extract_strided_slice %161 {offsets = [0, 0], sizes = [6, 32], strides = [1, 1]} : vector<6x96xf32> to vector<6x32xf32>
    %164 = arith.addf %162, %163 : vector<6x32xf32>
    %cst_46 = arith.constant 0.000000e+00 : f32
    %165 = vector.broadcast %cst_46 : f32 to vector<6x32xf32>
    %166 = arith.subf %165, %164 : vector<6x32xf32>
    %167 = math.exp %166 : vector<6x32xf32>
    %cst_47 = arith.constant 1.000000e+00 : f32
    %168 = vector.broadcast %cst_47 : f32 to vector<6x32xf32>
    %169 = arith.addf %168, %167 : vector<6x32xf32>
    %170 = tpu.reciprocal %169 {approx = true} : vector<6x32xf32> -> vector<6x32xf32>
    %171 = vector.extract_strided_slice %160 {offsets = [0, 32], sizes = [6, 32], strides = [1, 1]} : vector<6x96xf32> to vector<6x32xf32>
    %172 = vector.extract_strided_slice %161 {offsets = [0, 32], sizes = [6, 32], strides = [1, 1]} : vector<6x96xf32> to vector<6x32xf32>
    %173 = arith.addf %171, %172 : vector<6x32xf32>
    %cst_48 = arith.constant 0.000000e+00 : f32
    %174 = vector.broadcast %cst_48 : f32 to vector<6x32xf32>
    %175 = arith.subf %174, %173 : vector<6x32xf32>
    %176 = math.exp %175 : vector<6x32xf32>
    %cst_49 = arith.constant 1.000000e+00 : f32
    %177 = vector.broadcast %cst_49 : f32 to vector<6x32xf32>
    %178 = arith.addf %177, %176 : vector<6x32xf32>
    %179 = tpu.reciprocal %178 {approx = true} : vector<6x32xf32> -> vector<6x32xf32>
    %180 = vector.extract_strided_slice %160 {offsets = [0, 64], sizes = [6, 32], strides = [1, 1]} : vector<6x96xf32> to vector<6x32xf32>
    %181 = vector.extract_strided_slice %161 {offsets = [0, 64], sizes = [6, 32], strides = [1, 1]} : vector<6x96xf32> to vector<6x32xf32>
    %182 = vector.broadcast %8 : vector<1x32xf32> to vector<6x32xf32>
    %183 = arith.addf %181, %182 : vector<6x32xf32>
    %184 = arith.mulf %170, %183 : vector<6x32xf32>
    %185 = arith.addf %180, %184 : vector<6x32xf32>
    %186 = math.tanh %185 : vector<6x32xf32>
    %cst_50 = arith.constant 1.000000e+00 : f32
    %187 = vector.broadcast %cst_50 : f32 to vector<6x32xf32>
    %188 = arith.subf %187, %179 : vector<6x32xf32>
    %189 = arith.mulf %188, %186 : vector<6x32xf32>
    %190 = arith.mulf %179, %154 : vector<6x32xf32>
    %191 = arith.addf %189, %190 : vector<6x32xf32>
    %c4_i32 = arith.constant 4 : i32
    %192 = vector.broadcast %c4_i32 : i32 to vector<6x1xi32>
    %193 = arith.cmpi eq, %9, %192 : vector<6x1xi32>
    %194 = vector.shape_cast %193 : vector<6x1xi1> to vector<6x1xi1>
    %195 = vector.broadcast %194 : vector<6x1xi1> to vector<6x32xi1>
    %196 = arith.select %195, %191, %159 : vector<6x32xi1>, vector<6x32xf32>
    %c0_51 = arith.constant 0 : index
    %c0_52 = arith.constant 0 : index
    %197 = vector.load %arg6[%c0_51, %c0_52] : memref<6x32xf32, #tpu.memory_space<vmem>>, vector<6x32xf32>
    tpu.vector_store %arg6[%c0_51, %c0_52], %196 {strides = array<i32>} : memref<6x32xf32, #tpu.memory_space<vmem>>, vector<6x32xf32>,
    return
  }
}

module attributes {stable_mosaic.version = 11 : i64} {
  func.func @_ctx_gru_gather2_kernel(%arg0: memref<6x32xf32, #tpu.memory_space<vmem>>, %arg1: memref<2x32xf32, #tpu.memory_space<vmem>>, %arg2: memref<2x1xi32, #tpu.memory_space<vmem>>, %arg3: memref<2x1xi32, #tpu.memory_space<vmem>>, %arg4: memref<32x96xf32, #tpu.memory_space<vmem>>, %arg5: memref<32x96xf32, #tpu.memory_space<vmem>>, %arg6: memref<1x96xf32, #tpu.memory_space<vmem>>, %arg7: memref<1x32xf32, #tpu.memory_space<vmem>>, %arg8: memref<2x32xf32, #tpu.memory_space<vmem>>, %arg9: memref<2x32xf32, #tpu.memory_space<vmem>>, %arg10: memref<6x96xf32, #tpu.memory_space<vmem>>) attributes {dimension_semantics = [], scalar_prefetch = 0 : i64, scratch_operands = 1 : i64, tpu.core_type = #tpu.core_type<tc>} {
    %c0 = arith.constant 0 : index
    %c0_0 = arith.constant 0 : index
    %0 = vector.load %arg0[%c0, %c0_0] : memref<6x32xf32, #tpu.memory_space<vmem>>, vector<6x32xf32>
    %c0_1 = arith.constant 0 : index
    %c0_2 = arith.constant 0 : index
    %1 = vector.load %arg4[%c0_1, %c0_2] : memref<32x96xf32, #tpu.memory_space<vmem>>, vector<32x96xf32>
    %cst = arith.constant dense<0.000000e+00> : vector<6x96xf32>
    %2 = tpu.matmul %0, %1, %cst {dimension_numbers = #tpu.dot_dimension_numbers<[1], [0], [0], [1], [0, 0, 1, 1], [], []>} : vector<6x32xf32>, vector<32x96xf32>, vector<6x96xf32> -> vector<6x96xf32>
    %c0_3 = arith.constant 0 : index
    %c0_4 = arith.constant 0 : index
    %3 = vector.load %arg6[%c0_3, %c0_4] : memref<1x96xf32, #tpu.memory_space<vmem>>, vector<1x96xf32>
    %4 = vector.broadcast %3 : vector<1x96xf32> to vector<6x96xf32>
    %5 = arith.addf %2, %4 : vector<6x96xf32>
    %c0_5 = arith.constant 0 : index
    %c0_6 = arith.constant 0 : index
    %6 = vector.load %arg10[%c0_5, %c0_6] : memref<6x96xf32, #tpu.memory_space<vmem>>, vector<6x96xf32>
    tpu.vector_store %arg10[%c0_5, %c0_6], %5 {strides = array<i32>} : memref<6x96xf32, #tpu.memory_space<vmem>>, vector<6x96xf32>,
    %c0_7 = arith.constant 0 : index
    %c0_8 = arith.constant 0 : index
    %7 = vector.load %arg5[%c0_7, %c0_8] : memref<32x96xf32, #tpu.memory_space<vmem>>, vector<32x96xf32>
    %c0_9 = arith.constant 0 : index
    %c0_10 = arith.constant 0 : index
    %8 = vector.load %arg7[%c0_9, %c0_10] : memref<1x32xf32, #tpu.memory_space<vmem>>, vector<1x32xf32>
    %c0_11 = arith.constant 0 : index
    %c0_12 = arith.constant 0 : index
    %9 = vector.load %arg2[%c0_11, %c0_12] : memref<2x1xi32, #tpu.memory_space<vmem>>, vector<2x1xi32>
    %c0_13 = arith.constant 0 : index
    %c0_14 = arith.constant 0 : index
    %10 = vector.load %arg3[%c0_13, %c0_14] : memref<2x1xi32, #tpu.memory_space<vmem>>, vector<2x1xi32>
    %c0_15 = arith.constant 0 : index
    %c0_16 = arith.constant 0 : index
    %11 = vector.load %arg1[%c0_15, %c0_16] : memref<2x32xf32, #tpu.memory_space<vmem>>, vector<2x32xf32>
    %cst_17 = arith.constant 0.000000e+00 : f32
    %12 = vector.broadcast %cst_17 : f32 to vector<2x32xf32>
    %cst_18 = arith.constant 0.000000e+00 : f32
    %13 = vector.broadcast %cst_18 : f32 to vector<2x32xf32>
    %c0_19 = arith.constant 0 : index
    %c0_20 = arith.constant 0 : index
    %14 = vector.load %arg10[%c0_19, %c0_20] : memref<6x96xf32, #tpu.memory_space<vmem>>, vector<2x96xf32>
    %cst_21 = arith.constant dense<0.000000e+00> : vector<2x96xf32>
    %15 = tpu.matmul %11, %7, %cst_21 {dimension_numbers = #tpu.dot_dimension_numbers<[1], [0], [0], [1], [0, 0, 1, 1], [], []>} : vector<2x32xf32>, vector<32x96xf32>, vector<2x96xf32> -> vector<2x96xf32>
    %16 = vector.extract_strided_slice %14 {offsets = [0, 0], sizes = [2, 32], strides = [1, 1]} : vector<2x96xf32> to vector<2x32xf32>
    %17 = vector.extract_strided_slice %15 {offsets = [0, 0], sizes = [2, 32], strides = [1, 1]} : vector<2x96xf32> to vector<2x32xf32>
    %18 = arith.addf %16, %17 : vector<2x32xf32>
    %cst_22 = arith.constant 0.000000e+00 : f32
    %19 = vector.broadcast %cst_22 : f32 to vector<2x32xf32>
    %20 = arith.subf %19, %18 : vector<2x32xf32>
    %21 = math.exp %20 : vector<2x32xf32>
    %cst_23 = arith.constant 1.000000e+00 : f32
    %22 = vector.broadcast %cst_23 : f32 to vector<2x32xf32>
    %23 = arith.addf %22, %21 : vector<2x32xf32>
    %24 = tpu.reciprocal %23 {approx = true} : vector<2x32xf32> -> vector<2x32xf32>
    %25 = vector.extract_strided_slice %14 {offsets = [0, 32], sizes = [2, 32], strides = [1, 1]} : vector<2x96xf32> to vector<2x32xf32>
    %26 = vector.extract_strided_slice %15 {offsets = [0, 32], sizes = [2, 32], strides = [1, 1]} : vector<2x96xf32> to vector<2x32xf32>
    %27 = arith.addf %25, %26 : vector<2x32xf32>
    %cst_24 = arith.constant 0.000000e+00 : f32
    %28 = vector.broadcast %cst_24 : f32 to vector<2x32xf32>
    %29 = arith.subf %28, %27 : vector<2x32xf32>
    %30 = math.exp %29 : vector<2x32xf32>
    %cst_25 = arith.constant 1.000000e+00 : f32
    %31 = vector.broadcast %cst_25 : f32 to vector<2x32xf32>
    %32 = arith.addf %31, %30 : vector<2x32xf32>
    %33 = tpu.reciprocal %32 {approx = true} : vector<2x32xf32> -> vector<2x32xf32>
    %34 = vector.extract_strided_slice %14 {offsets = [0, 64], sizes = [2, 32], strides = [1, 1]} : vector<2x96xf32> to vector<2x32xf32>
    %35 = vector.extract_strided_slice %15 {offsets = [0, 64], sizes = [2, 32], strides = [1, 1]} : vector<2x96xf32> to vector<2x32xf32>
    %36 = vector.broadcast %8 : vector<1x32xf32> to vector<2x32xf32>
    %37 = arith.addf %35, %36 : vector<2x32xf32>
    %38 = arith.mulf %24, %37 : vector<2x32xf32>
    %39 = arith.addf %34, %38 : vector<2x32xf32>
    %40 = math.tanh %39 : vector<2x32xf32>
    %cst_26 = arith.constant 1.000000e+00 : f32
    %41 = vector.broadcast %cst_26 : f32 to vector<2x32xf32>
    %42 = arith.subf %41, %33 : vector<2x32xf32>
    %43 = arith.mulf %42, %40 : vector<2x32xf32>
    %44 = arith.mulf %33, %11 : vector<2x32xf32>
    %45 = arith.addf %43, %44 : vector<2x32xf32>
    %c0_i32 = arith.constant 0 : i32
    %46 = vector.broadcast %c0_i32 : i32 to vector<2x1xi32>
    %47 = arith.cmpi eq, %9, %46 : vector<2x1xi32>
    %48 = vector.shape_cast %47 : vector<2x1xi1> to vector<2x1xi1>
    %49 = vector.broadcast %48 : vector<2x1xi1> to vector<2x32xi1>
    %50 = arith.select %49, %45, %12 : vector<2x32xi1>, vector<2x32xf32>
    %c0_i32_27 = arith.constant 0 : i32
    %51 = vector.broadcast %c0_i32_27 : i32 to vector<2x1xi32>
    %52 = arith.cmpi eq, %10, %51 : vector<2x1xi32>
    %53 = vector.shape_cast %52 : vector<2x1xi1> to vector<2x1xi1>
    %54 = vector.broadcast %53 : vector<2x1xi1> to vector<2x32xi1>
    %55 = arith.select %54, %45, %13 : vector<2x32xi1>, vector<2x32xf32>
    %c2 = arith.constant 2 : index
    %c0_28 = arith.constant 0 : index
    %56 = vector.load %arg10[%c2, %c0_28] : memref<6x96xf32, #tpu.memory_space<vmem>>, vector<2x96xf32>
    %cst_29 = arith.constant dense<0.000000e+00> : vector<2x96xf32>
    %57 = tpu.matmul %45, %7, %cst_29 {dimension_numbers = #tpu.dot_dimension_numbers<[1], [0], [0], [1], [0, 0, 1, 1], [], []>} : vector<2x32xf32>, vector<32x96xf32>, vector<2x96xf32> -> vector<2x96xf32>
    %58 = vector.extract_strided_slice %56 {offsets = [0, 0], sizes = [2, 32], strides = [1, 1]} : vector<2x96xf32> to vector<2x32xf32>
    %59 = vector.extract_strided_slice %57 {offsets = [0, 0], sizes = [2, 32], strides = [1, 1]} : vector<2x96xf32> to vector<2x32xf32>
    %60 = arith.addf %58, %59 : vector<2x32xf32>
    %cst_30 = arith.constant 0.000000e+00 : f32
    %61 = vector.broadcast %cst_30 : f32 to vector<2x32xf32>
    %62 = arith.subf %61, %60 : vector<2x32xf32>
    %63 = math.exp %62 : vector<2x32xf32>
    %cst_31 = arith.constant 1.000000e+00 : f32
    %64 = vector.broadcast %cst_31 : f32 to vector<2x32xf32>
    %65 = arith.addf %64, %63 : vector<2x32xf32>
    %66 = tpu.reciprocal %65 {approx = true} : vector<2x32xf32> -> vector<2x32xf32>
    %67 = vector.extract_strided_slice %56 {offsets = [0, 32], sizes = [2, 32], strides = [1, 1]} : vector<2x96xf32> to vector<2x32xf32>
    %68 = vector.extract_strided_slice %57 {offsets = [0, 32], sizes = [2, 32], strides = [1, 1]} : vector<2x96xf32> to vector<2x32xf32>
    %69 = arith.addf %67, %68 : vector<2x32xf32>
    %cst_32 = arith.constant 0.000000e+00 : f32
    %70 = vector.broadcast %cst_32 : f32 to vector<2x32xf32>
    %71 = arith.subf %70, %69 : vector<2x32xf32>
    %72 = math.exp %71 : vector<2x32xf32>
    %cst_33 = arith.constant 1.000000e+00 : f32
    %73 = vector.broadcast %cst_33 : f32 to vector<2x32xf32>
    %74 = arith.addf %73, %72 : vector<2x32xf32>
    %75 = tpu.reciprocal %74 {approx = true} : vector<2x32xf32> -> vector<2x32xf32>
    %76 = vector.extract_strided_slice %56 {offsets = [0, 64], sizes = [2, 32], strides = [1, 1]} : vector<2x96xf32> to vector<2x32xf32>
    %77 = vector.extract_strided_slice %57 {offsets = [0, 64], sizes = [2, 32], strides = [1, 1]} : vector<2x96xf32> to vector<2x32xf32>
    %78 = vector.broadcast %8 : vector<1x32xf32> to vector<2x32xf32>
    %79 = arith.addf %77, %78 : vector<2x32xf32>
    %80 = arith.mulf %66, %79 : vector<2x32xf32>
    %81 = arith.addf %76, %80 : vector<2x32xf32>
    %82 = math.tanh %81 : vector<2x32xf32>
    %cst_34 = arith.constant 1.000000e+00 : f32
    %83 = vector.broadcast %cst_34 : f32 to vector<2x32xf32>
    %84 = arith.subf %83, %75 : vector<2x32xf32>
    %85 = arith.mulf %84, %82 : vector<2x32xf32>
    %86 = arith.mulf %75, %45 : vector<2x32xf32>
    %87 = arith.addf %85, %86 : vector<2x32xf32>
    %c1_i32 = arith.constant 1 : i32
    %88 = vector.broadcast %c1_i32 : i32 to vector<2x1xi32>
    %89 = arith.cmpi eq, %9, %88 : vector<2x1xi32>
    %90 = vector.shape_cast %89 : vector<2x1xi1> to vector<2x1xi1>
    %91 = vector.broadcast %90 : vector<2x1xi1> to vector<2x32xi1>
    %92 = arith.select %91, %87, %50 : vector<2x32xi1>, vector<2x32xf32>
    %c1_i32_35 = arith.constant 1 : i32
    %93 = vector.broadcast %c1_i32_35 : i32 to vector<2x1xi32>
    %94 = arith.cmpi eq, %10, %93 : vector<2x1xi32>
    %95 = vector.shape_cast %94 : vector<2x1xi1> to vector<2x1xi1>
    %96 = vector.broadcast %95 : vector<2x1xi1> to vector<2x32xi1>
    %97 = arith.select %96, %87, %55 : vector<2x32xi1>, vector<2x32xf32>
    %c4 = arith.constant 4 : index
    %c0_36 = arith.constant 0 : index
    %98 = vector.load %arg10[%c4, %c0_36] : memref<6x96xf32, #tpu.memory_space<vmem>>, vector<2x96xf32>
    %cst_37 = arith.constant dense<0.000000e+00> : vector<2x96xf32>
    %99 = tpu.matmul %87, %7, %cst_37 {dimension_numbers = #tpu.dot_dimension_numbers<[1], [0], [0], [1], [0, 0, 1, 1], [], []>} : vector<2x32xf32>, vector<32x96xf32>, vector<2x96xf32> -> vector<2x96xf32>
    %100 = vector.extract_strided_slice %98 {offsets = [0, 0], sizes = [2, 32], strides = [1, 1]} : vector<2x96xf32> to vector<2x32xf32>
    %101 = vector.extract_strided_slice %99 {offsets = [0, 0], sizes = [2, 32], strides = [1, 1]} : vector<2x96xf32> to vector<2x32xf32>
    %102 = arith.addf %100, %101 : vector<2x32xf32>
    %cst_38 = arith.constant 0.000000e+00 : f32
    %103 = vector.broadcast %cst_38 : f32 to vector<2x32xf32>
    %104 = arith.subf %103, %102 : vector<2x32xf32>
    %105 = math.exp %104 : vector<2x32xf32>
    %cst_39 = arith.constant 1.000000e+00 : f32
    %106 = vector.broadcast %cst_39 : f32 to vector<2x32xf32>
    %107 = arith.addf %106, %105 : vector<2x32xf32>
    %108 = tpu.reciprocal %107 {approx = true} : vector<2x32xf32> -> vector<2x32xf32>
    %109 = vector.extract_strided_slice %98 {offsets = [0, 32], sizes = [2, 32], strides = [1, 1]} : vector<2x96xf32> to vector<2x32xf32>
    %110 = vector.extract_strided_slice %99 {offsets = [0, 32], sizes = [2, 32], strides = [1, 1]} : vector<2x96xf32> to vector<2x32xf32>
    %111 = arith.addf %109, %110 : vector<2x32xf32>
    %cst_40 = arith.constant 0.000000e+00 : f32
    %112 = vector.broadcast %cst_40 : f32 to vector<2x32xf32>
    %113 = arith.subf %112, %111 : vector<2x32xf32>
    %114 = math.exp %113 : vector<2x32xf32>
    %cst_41 = arith.constant 1.000000e+00 : f32
    %115 = vector.broadcast %cst_41 : f32 to vector<2x32xf32>
    %116 = arith.addf %115, %114 : vector<2x32xf32>
    %117 = tpu.reciprocal %116 {approx = true} : vector<2x32xf32> -> vector<2x32xf32>
    %118 = vector.extract_strided_slice %98 {offsets = [0, 64], sizes = [2, 32], strides = [1, 1]} : vector<2x96xf32> to vector<2x32xf32>
    %119 = vector.extract_strided_slice %99 {offsets = [0, 64], sizes = [2, 32], strides = [1, 1]} : vector<2x96xf32> to vector<2x32xf32>
    %120 = vector.broadcast %8 : vector<1x32xf32> to vector<2x32xf32>
    %121 = arith.addf %119, %120 : vector<2x32xf32>
    %122 = arith.mulf %108, %121 : vector<2x32xf32>
    %123 = arith.addf %118, %122 : vector<2x32xf32>
    %124 = math.tanh %123 : vector<2x32xf32>
    %cst_42 = arith.constant 1.000000e+00 : f32
    %125 = vector.broadcast %cst_42 : f32 to vector<2x32xf32>
    %126 = arith.subf %125, %117 : vector<2x32xf32>
    %127 = arith.mulf %126, %124 : vector<2x32xf32>
    %128 = arith.mulf %117, %87 : vector<2x32xf32>
    %129 = arith.addf %127, %128 : vector<2x32xf32>
    %c2_i32 = arith.constant 2 : i32
    %130 = vector.broadcast %c2_i32 : i32 to vector<2x1xi32>
    %131 = arith.cmpi eq, %9, %130 : vector<2x1xi32>
    %132 = vector.shape_cast %131 : vector<2x1xi1> to vector<2x1xi1>
    %133 = vector.broadcast %132 : vector<2x1xi1> to vector<2x32xi1>
    %134 = arith.select %133, %129, %92 : vector<2x32xi1>, vector<2x32xf32>
    %c2_i32_43 = arith.constant 2 : i32
    %135 = vector.broadcast %c2_i32_43 : i32 to vector<2x1xi32>
    %136 = arith.cmpi eq, %10, %135 : vector<2x1xi32>
    %137 = vector.shape_cast %136 : vector<2x1xi1> to vector<2x1xi1>
    %138 = vector.broadcast %137 : vector<2x1xi1> to vector<2x32xi1>
    %139 = arith.select %138, %129, %97 : vector<2x32xi1>, vector<2x32xf32>
    %c0_44 = arith.constant 0 : index
    %c0_45 = arith.constant 0 : index
    %140 = vector.load %arg8[%c0_44, %c0_45] : memref<2x32xf32, #tpu.memory_space<vmem>>, vector<2x32xf32>
    tpu.vector_store %arg8[%c0_44, %c0_45], %134 {strides = array<i32>} : memref<2x32xf32, #tpu.memory_space<vmem>>, vector<2x32xf32>,
    %c0_46 = arith.constant 0 : index
    %c0_47 = arith.constant 0 : index
    %141 = vector.load %arg9[%c0_46, %c0_47] : memref<2x32xf32, #tpu.memory_space<vmem>>, vector<2x32xf32>
    tpu.vector_store %arg9[%c0_46, %c0_47], %139 {strides = array<i32>} : memref<2x32xf32, #tpu.memory_space<vmem>>, vector<2x32xf32>,
    return
  }
}

module attributes {stable_mosaic.version = 11 : i64} {
  func.func @_vae_head_kernel(%arg0: memref<2x32xf32, #tpu.memory_space<vmem>>, %arg1: memref<2x32xf32, #tpu.memory_space<vmem>>, %arg2: memref<2x32xf32, #tpu.memory_space<vmem>>, %arg3: memref<32x64xf32, #tpu.memory_space<vmem>>, %arg4: memref<1x64xf32, #tpu.memory_space<vmem>>, %arg5: memref<32x64xf32, #tpu.memory_space<vmem>>, %arg6: memref<1x64xf32, #tpu.memory_space<vmem>>, %arg7: memref<32x32xf32, #tpu.memory_space<vmem>>, %arg8: memref<32x32xf32, #tpu.memory_space<vmem>>, %arg9: memref<1x32xf32, #tpu.memory_space<vmem>>, %arg10: memref<32x32xf32, #tpu.memory_space<vmem>>, %arg11: memref<1x32xf32, #tpu.memory_space<vmem>>, %arg12: memref<1x32xf32, #tpu.memory_space<vmem>>, %arg13: memref<1x1xf32, #tpu.memory_space<vmem>>, %arg14: memref<2x32xf32, #tpu.memory_space<vmem>>, %arg15: memref<2x32xf32, #tpu.memory_space<vmem>>, %arg16: memref<2x32xf32, #tpu.memory_space<vmem>>, %arg17: memref<2x32xf32, #tpu.memory_space<vmem>>, %arg18: memref<2x32xf32, #tpu.memory_space<vmem>>, %arg19: memref<2x1xf32, #tpu.memory_space<vmem>>) attributes {dimension_semantics = [], scalar_prefetch = 0 : i64, scratch_operands = 0 : i64, tpu.core_type = #tpu.core_type<tc>} {
    %c0 = arith.constant 0 : index
    %c0_0 = arith.constant 0 : index
    %0 = vector.load %arg0[%c0, %c0_0] : memref<2x32xf32, #tpu.memory_space<vmem>>, vector<2x32xf32>
    %c0_1 = arith.constant 0 : index
    %c0_2 = arith.constant 0 : index
    %1 = vector.load %arg3[%c0_1, %c0_2] : memref<32x64xf32, #tpu.memory_space<vmem>>, vector<32x64xf32>
    %cst = arith.constant dense<0.000000e+00> : vector<2x64xf32>
    %2 = tpu.matmul %0, %1, %cst {dimension_numbers = #tpu.dot_dimension_numbers<[1], [0], [0], [1], [0, 0, 1, 1], [], []>} : vector<2x32xf32>, vector<32x64xf32>, vector<2x64xf32> -> vector<2x64xf32>
    %c0_3 = arith.constant 0 : index
    %c0_4 = arith.constant 0 : index
    %3 = vector.load %arg4[%c0_3, %c0_4] : memref<1x64xf32, #tpu.memory_space<vmem>>, vector<1x64xf32>
    %4 = vector.broadcast %3 : vector<1x64xf32> to vector<2x64xf32>
    %5 = arith.addf %2, %4 : vector<2x64xf32>
    %c0_5 = arith.constant 0 : index
    %c0_6 = arith.constant 0 : index
    %6 = vector.load %arg1[%c0_5, %c0_6] : memref<2x32xf32, #tpu.memory_space<vmem>>, vector<2x32xf32>
    %c0_7 = arith.constant 0 : index
    %c0_8 = arith.constant 0 : index
    %7 = vector.load %arg5[%c0_7, %c0_8] : memref<32x64xf32, #tpu.memory_space<vmem>>, vector<32x64xf32>
    %cst_9 = arith.constant dense<0.000000e+00> : vector<2x64xf32>
    %8 = tpu.matmul %6, %7, %cst_9 {dimension_numbers = #tpu.dot_dimension_numbers<[1], [0], [0], [1], [0, 0, 1, 1], [], []>} : vector<2x32xf32>, vector<32x64xf32>, vector<2x64xf32> -> vector<2x64xf32>
    %c0_10 = arith.constant 0 : index
    %c0_11 = arith.constant 0 : index
    %9 = vector.load %arg6[%c0_10, %c0_11] : memref<1x64xf32, #tpu.memory_space<vmem>>, vector<1x64xf32>
    %10 = vector.broadcast %9 : vector<1x64xf32> to vector<2x64xf32>
    %11 = arith.addf %8, %10 : vector<2x64xf32>
    %12 = vector.extract_strided_slice %5 {offsets = [0, 0], sizes = [2, 32], strides = [1, 1]} : vector<2x64xf32> to vector<2x32xf32>
    %13 = vector.extract_strided_slice %5 {offsets = [0, 32], sizes = [2, 32], strides = [1, 1]} : vector<2x64xf32> to vector<2x32xf32>
    %14 = vector.extract_strided_slice %11 {offsets = [0, 0], sizes = [2, 32], strides = [1, 1]} : vector<2x64xf32> to vector<2x32xf32>
    %15 = vector.extract_strided_slice %11 {offsets = [0, 32], sizes = [2, 32], strides = [1, 1]} : vector<2x64xf32> to vector<2x32xf32>
    %c0_12 = arith.constant 0 : index
    %c0_13 = arith.constant 0 : index
    %16 = vector.load %arg2[%c0_12, %c0_13] : memref<2x32xf32, #tpu.memory_space<vmem>>, vector<2x32xf32>
    %cst_14 = arith.constant 5.000000e-01 : f32
    %17 = vector.broadcast %cst_14 : f32 to vector<2x32xf32>
    %18 = arith.mulf %17, %15 : vector<2x32xf32>
    %19 = math.exp %18 : vector<2x32xf32>
    %20 = arith.mulf %16, %19 : vector<2x32xf32>
    %21 = arith.addf %20, %14 : vector<2x32xf32>
    %c0_15 = arith.constant 0 : index
    %c0_16 = arith.constant 0 : index
    %22 = vector.load %arg7[%c0_15, %c0_16] : memref<32x32xf32, #tpu.memory_space<vmem>>, vector<32x32xf32>
    %cst_17 = arith.constant dense<0.000000e+00> : vector<2x32xf32>
    %23 = tpu.matmul %0, %22, %cst_17 {dimension_numbers = #tpu.dot_dimension_numbers<[1], [0], [0], [1], [0, 0, 1, 1], [], []>} : vector<2x32xf32>, vector<32x32xf32>, vector<2x32xf32> -> vector<2x32xf32>
    %c0_18 = arith.constant 0 : index
    %c0_19 = arith.constant 0 : index
    %24 = vector.load %arg8[%c0_18, %c0_19] : memref<32x32xf32, #tpu.memory_space<vmem>>, vector<32x32xf32>
    %cst_20 = arith.constant dense<0.000000e+00> : vector<2x32xf32>
    %25 = tpu.matmul %21, %24, %cst_20 {dimension_numbers = #tpu.dot_dimension_numbers<[1], [0], [0], [1], [0, 0, 1, 1], [], []>} : vector<2x32xf32>, vector<32x32xf32>, vector<2x32xf32> -> vector<2x32xf32>
    %26 = arith.addf %23, %25 : vector<2x32xf32>
    %c0_21 = arith.constant 0 : index
    %c0_22 = arith.constant 0 : index
    %27 = vector.load %arg9[%c0_21, %c0_22] : memref<1x32xf32, #tpu.memory_space<vmem>>, vector<1x32xf32>
    %28 = vector.broadcast %27 : vector<1x32xf32> to vector<2x32xf32>
    %29 = arith.addf %26, %28 : vector<2x32xf32>
    %c0_23 = arith.constant 0 : index
    %c0_24 = arith.constant 0 : index
    %30 = vector.load %arg10[%c0_23, %c0_24] : memref<32x32xf32, #tpu.memory_space<vmem>>, vector<32x32xf32>
    %cst_25 = arith.constant dense<0.000000e+00> : vector<2x32xf32>
    %31 = tpu.matmul %0, %30, %cst_25 {dimension_numbers = #tpu.dot_dimension_numbers<[1], [0], [0], [1], [0, 0, 1, 1], [], []>} : vector<2x32xf32>, vector<32x32xf32>, vector<2x32xf32> -> vector<2x32xf32>
    %c0_26 = arith.constant 0 : index
    %c0_27 = arith.constant 0 : index
    %32 = vector.load %arg11[%c0_26, %c0_27] : memref<1x32xf32, #tpu.memory_space<vmem>>, vector<1x32xf32>
    %33 = vector.broadcast %32 : vector<1x32xf32> to vector<2x32xf32>
    %34 = arith.addf %31, %33 : vector<2x32xf32>
    %cst_28 = arith.constant 0.000000e+00 : f32
    %35 = vector.broadcast %cst_28 : f32 to vector<2x32xf32>
    %36 = arith.maximumf %34, %35 : vector<2x32xf32>
    %c0_29 = arith.constant 0 : index
    %c0_30 = arith.constant 0 : index
    %37 = vector.load %arg12[%c0_29, %c0_30] : memref<1x32xf32, #tpu.memory_space<vmem>>, vector<1x32xf32>
    %38 = vector.broadcast %37 : vector<1x32xf32> to vector<2x32xf32>
    %39 = arith.mulf %36, %38 : vector<2x32xf32>
    %cst_31 = arith.constant dense<0.000000e+00> : vector<2xf32>
    %40 = vector.multi_reduction <add>, %39, %cst_31 [1] : vector<2x32xf32> to vector<2xf32>
    %41 = vector.shape_cast %40 : vector<2xf32> to vector<2x1xf32>
    %c0_32 = arith.constant 0 : index
    %c0_33 = arith.constant 0 : index
    %42 = vector.load %arg13[%c0_32, %c0_33] : memref<1x1xf32, #tpu.memory_space<vmem>>, vector<1x1xf32>
    %43 = vector.broadcast %42 : vector<1x1xf32> to vector<2x1xf32>
    %44 = arith.addf %41, %43 : vector<2x1xf32>
    %c0_34 = arith.constant 0 : index
    %c0_35 = arith.constant 0 : index
    %45 = vector.load %arg14[%c0_34, %c0_35] : memref<2x32xf32, #tpu.memory_space<vmem>>, vector<2x32xf32>
    tpu.vector_store %arg14[%c0_34, %c0_35], %12 {strides = array<i32>} : memref<2x32xf32, #tpu.memory_space<vmem>>, vector<2x32xf32>,
    %c0_36 = arith.constant 0 : index
    %c0_37 = arith.constant 0 : index
    %46 = vector.load %arg15[%c0_36, %c0_37] : memref<2x32xf32, #tpu.memory_space<vmem>>, vector<2x32xf32>
    tpu.vector_store %arg15[%c0_36, %c0_37], %13 {strides = array<i32>} : memref<2x32xf32, #tpu.memory_space<vmem>>, vector<2x32xf32>,
    %c0_38 = arith.constant 0 : index
    %c0_39 = arith.constant 0 : index
    %47 = vector.load %arg16[%c0_38, %c0_39] : memref<2x32xf32, #tpu.memory_space<vmem>>, vector<2x32xf32>
    tpu.vector_store %arg16[%c0_38, %c0_39], %14 {strides = array<i32>} : memref<2x32xf32, #tpu.memory_space<vmem>>, vector<2x32xf32>,
    %c0_40 = arith.constant 0 : index
    %c0_41 = arith.constant 0 : index
    %48 = vector.load %arg17[%c0_40, %c0_41] : memref<2x32xf32, #tpu.memory_space<vmem>>, vector<2x32xf32>
    tpu.vector_store %arg17[%c0_40, %c0_41], %15 {strides = array<i32>} : memref<2x32xf32, #tpu.memory_space<vmem>>, vector<2x32xf32>,
    %c0_42 = arith.constant 0 : index
    %c0_43 = arith.constant 0 : index
    %49 = vector.load %arg18[%c0_42, %c0_43] : memref<2x32xf32, #tpu.memory_space<vmem>>, vector<2x32xf32>
    tpu.vector_store %arg18[%c0_42, %c0_43], %29 {strides = array<i32>} : memref<2x32xf32, #tpu.memory_space<vmem>>, vector<2x32xf32>,
    %c0_44 = arith.constant 0 : index
    %c0_45 = arith.constant 0 : index
    %50 = vector.load %arg19[%c0_44, %c0_45] : memref<2x1xf32, #tpu.memory_space<vmem>>, vector<2x1xf32>
    tpu.vector_store %arg19[%c0_44, %c0_45], %44 {strides = array<i32>} : memref<2x1xf32, #tpu.memory_space<vmem>>, vector<2x1xf32>,
    return
  }
}

module attributes {stable_mosaic.version = 11 : i64} {
  func.func @_dec_gru_proj_kernel(%arg0: memref<12x16xf32, #tpu.memory_space<vmem>>, %arg1: memref<2x32xf32, #tpu.memory_space<vmem>>, %arg2: memref<16x96xf32, #tpu.memory_space<vmem>>, %arg3: memref<32x96xf32, #tpu.memory_space<vmem>>, %arg4: memref<1x96xf32, #tpu.memory_space<vmem>>, %arg5: memref<1x32xf32, #tpu.memory_space<vmem>>, %arg6: memref<32x50xf32, #tpu.memory_space<vmem>>, %arg7: memref<1x50xf32, #tpu.memory_space<vmem>>, %arg8: memref<12x50xf32, #tpu.memory_space<vmem>>, %arg9: memref<12x96xf32, #tpu.memory_space<vmem>>, %arg10: memref<12x32xf32, #tpu.memory_space<vmem>>) attributes {dimension_semantics = [], scalar_prefetch = 0 : i64, scratch_operands = 2 : i64, tpu.core_type = #tpu.core_type<tc>} {
    %c0 = arith.constant 0 : index
    %c0_0 = arith.constant 0 : index
    %0 = vector.load %arg0[%c0, %c0_0] : memref<12x16xf32, #tpu.memory_space<vmem>>, vector<12x16xf32>
    %c0_1 = arith.constant 0 : index
    %c0_2 = arith.constant 0 : index
    %1 = vector.load %arg2[%c0_1, %c0_2] : memref<16x96xf32, #tpu.memory_space<vmem>>, vector<16x96xf32>
    %cst = arith.constant dense<0.000000e+00> : vector<12x96xf32>
    %2 = tpu.matmul %0, %1, %cst {dimension_numbers = #tpu.dot_dimension_numbers<[1], [0], [0], [1], [0, 0, 1, 1], [], []>} : vector<12x16xf32>, vector<16x96xf32>, vector<12x96xf32> -> vector<12x96xf32>
    %c0_3 = arith.constant 0 : index
    %c0_4 = arith.constant 0 : index
    %3 = vector.load %arg4[%c0_3, %c0_4] : memref<1x96xf32, #tpu.memory_space<vmem>>, vector<1x96xf32>
    %4 = vector.broadcast %3 : vector<1x96xf32> to vector<12x96xf32>
    %5 = arith.addf %2, %4 : vector<12x96xf32>
    %c0_5 = arith.constant 0 : index
    %c0_6 = arith.constant 0 : index
    %6 = vector.load %arg9[%c0_5, %c0_6] : memref<12x96xf32, #tpu.memory_space<vmem>>, vector<12x96xf32>
    tpu.vector_store %arg9[%c0_5, %c0_6], %5 {strides = array<i32>} : memref<12x96xf32, #tpu.memory_space<vmem>>, vector<12x96xf32>,
    %c0_7 = arith.constant 0 : index
    %c0_8 = arith.constant 0 : index
    %7 = vector.load %arg3[%c0_7, %c0_8] : memref<32x96xf32, #tpu.memory_space<vmem>>, vector<32x96xf32>
    %c0_9 = arith.constant 0 : index
    %c0_10 = arith.constant 0 : index
    %8 = vector.load %arg5[%c0_9, %c0_10] : memref<1x32xf32, #tpu.memory_space<vmem>>, vector<1x32xf32>
    %c0_11 = arith.constant 0 : index
    %c0_12 = arith.constant 0 : index
    %9 = vector.load %arg1[%c0_11, %c0_12] : memref<2x32xf32, #tpu.memory_space<vmem>>, vector<2x32xf32>
    %c0_13 = arith.constant 0 : index
    %c0_14 = arith.constant 0 : index
    %10 = vector.load %arg9[%c0_13, %c0_14] : memref<12x96xf32, #tpu.memory_space<vmem>>, vector<2x96xf32>
    %cst_15 = arith.constant dense<0.000000e+00> : vector<2x96xf32>
    %11 = tpu.matmul %9, %7, %cst_15 {dimension_numbers = #tpu.dot_dimension_numbers<[1], [0], [0], [1], [0, 0, 1, 1], [], []>} : vector<2x32xf32>, vector<32x96xf32>, vector<2x96xf32> -> vector<2x96xf32>
    %12 = vector.extract_strided_slice %10 {offsets = [0, 0], sizes = [2, 32], strides = [1, 1]} : vector<2x96xf32> to vector<2x32xf32>
    %13 = vector.extract_strided_slice %11 {offsets = [0, 0], sizes = [2, 32], strides = [1, 1]} : vector<2x96xf32> to vector<2x32xf32>
    %14 = arith.addf %12, %13 : vector<2x32xf32>
    %cst_16 = arith.constant 0.000000e+00 : f32
    %15 = vector.broadcast %cst_16 : f32 to vector<2x32xf32>
    %16 = arith.subf %15, %14 : vector<2x32xf32>
    %17 = math.exp %16 : vector<2x32xf32>
    %cst_17 = arith.constant 1.000000e+00 : f32
    %18 = vector.broadcast %cst_17 : f32 to vector<2x32xf32>
    %19 = arith.addf %18, %17 : vector<2x32xf32>
    %20 = tpu.reciprocal %19 {approx = true} : vector<2x32xf32> -> vector<2x32xf32>
    %21 = vector.extract_strided_slice %10 {offsets = [0, 32], sizes = [2, 32], strides = [1, 1]} : vector<2x96xf32> to vector<2x32xf32>
    %22 = vector.extract_strided_slice %11 {offsets = [0, 32], sizes = [2, 32], strides = [1, 1]} : vector<2x96xf32> to vector<2x32xf32>
    %23 = arith.addf %21, %22 : vector<2x32xf32>
    %cst_18 = arith.constant 0.000000e+00 : f32
    %24 = vector.broadcast %cst_18 : f32 to vector<2x32xf32>
    %25 = arith.subf %24, %23 : vector<2x32xf32>
    %26 = math.exp %25 : vector<2x32xf32>
    %cst_19 = arith.constant 1.000000e+00 : f32
    %27 = vector.broadcast %cst_19 : f32 to vector<2x32xf32>
    %28 = arith.addf %27, %26 : vector<2x32xf32>
    %29 = tpu.reciprocal %28 {approx = true} : vector<2x32xf32> -> vector<2x32xf32>
    %30 = vector.extract_strided_slice %10 {offsets = [0, 64], sizes = [2, 32], strides = [1, 1]} : vector<2x96xf32> to vector<2x32xf32>
    %31 = vector.extract_strided_slice %11 {offsets = [0, 64], sizes = [2, 32], strides = [1, 1]} : vector<2x96xf32> to vector<2x32xf32>
    %32 = vector.broadcast %8 : vector<1x32xf32> to vector<2x32xf32>
    %33 = arith.addf %31, %32 : vector<2x32xf32>
    %34 = arith.mulf %20, %33 : vector<2x32xf32>
    %35 = arith.addf %30, %34 : vector<2x32xf32>
    %36 = math.tanh %35 : vector<2x32xf32>
    %cst_20 = arith.constant 1.000000e+00 : f32
    %37 = vector.broadcast %cst_20 : f32 to vector<2x32xf32>
    %38 = arith.subf %37, %29 : vector<2x32xf32>
    %39 = arith.mulf %38, %36 : vector<2x32xf32>
    %40 = arith.mulf %29, %9 : vector<2x32xf32>
    %41 = arith.addf %39, %40 : vector<2x32xf32>
    %c0_21 = arith.constant 0 : index
    %c0_22 = arith.constant 0 : index
    %42 = vector.load %arg10[%c0_21, %c0_22] : memref<12x32xf32, #tpu.memory_space<vmem>>, vector<2x32xf32>
    tpu.vector_store %arg10[%c0_21, %c0_22], %41 {strides = array<i32>} : memref<12x32xf32, #tpu.memory_space<vmem>>, vector<2x32xf32>,
    %c2 = arith.constant 2 : index
    %c0_23 = arith.constant 0 : index
    %43 = vector.load %arg9[%c2, %c0_23] : memref<12x96xf32, #tpu.memory_space<vmem>>, vector<2x96xf32>
    %cst_24 = arith.constant dense<0.000000e+00> : vector<2x96xf32>
    %44 = tpu.matmul %41, %7, %cst_24 {dimension_numbers = #tpu.dot_dimension_numbers<[1], [0], [0], [1], [0, 0, 1, 1], [], []>} : vector<2x32xf32>, vector<32x96xf32>, vector<2x96xf32> -> vector<2x96xf32>
    %45 = vector.extract_strided_slice %43 {offsets = [0, 0], sizes = [2, 32], strides = [1, 1]} : vector<2x96xf32> to vector<2x32xf32>
    %46 = vector.extract_strided_slice %44 {offsets = [0, 0], sizes = [2, 32], strides = [1, 1]} : vector<2x96xf32> to vector<2x32xf32>
    %47 = arith.addf %45, %46 : vector<2x32xf32>
    %cst_25 = arith.constant 0.000000e+00 : f32
    %48 = vector.broadcast %cst_25 : f32 to vector<2x32xf32>
    %49 = arith.subf %48, %47 : vector<2x32xf32>
    %50 = math.exp %49 : vector<2x32xf32>
    %cst_26 = arith.constant 1.000000e+00 : f32
    %51 = vector.broadcast %cst_26 : f32 to vector<2x32xf32>
    %52 = arith.addf %51, %50 : vector<2x32xf32>
    %53 = tpu.reciprocal %52 {approx = true} : vector<2x32xf32> -> vector<2x32xf32>
    %54 = vector.extract_strided_slice %43 {offsets = [0, 32], sizes = [2, 32], strides = [1, 1]} : vector<2x96xf32> to vector<2x32xf32>
    %55 = vector.extract_strided_slice %44 {offsets = [0, 32], sizes = [2, 32], strides = [1, 1]} : vector<2x96xf32> to vector<2x32xf32>
    %56 = arith.addf %54, %55 : vector<2x32xf32>
    %cst_27 = arith.constant 0.000000e+00 : f32
    %57 = vector.broadcast %cst_27 : f32 to vector<2x32xf32>
    %58 = arith.subf %57, %56 : vector<2x32xf32>
    %59 = math.exp %58 : vector<2x32xf32>
    %cst_28 = arith.constant 1.000000e+00 : f32
    %60 = vector.broadcast %cst_28 : f32 to vector<2x32xf32>
    %61 = arith.addf %60, %59 : vector<2x32xf32>
    %62 = tpu.reciprocal %61 {approx = true} : vector<2x32xf32> -> vector<2x32xf32>
    %63 = vector.extract_strided_slice %43 {offsets = [0, 64], sizes = [2, 32], strides = [1, 1]} : vector<2x96xf32> to vector<2x32xf32>
    %64 = vector.extract_strided_slice %44 {offsets = [0, 64], sizes = [2, 32], strides = [1, 1]} : vector<2x96xf32> to vector<2x32xf32>
    %65 = vector.broadcast %8 : vector<1x32xf32> to vector<2x32xf32>
    %66 = arith.addf %64, %65 : vector<2x32xf32>
    %67 = arith.mulf %53, %66 : vector<2x32xf32>
    %68 = arith.addf %63, %67 : vector<2x32xf32>
    %69 = math.tanh %68 : vector<2x32xf32>
    %cst_29 = arith.constant 1.000000e+00 : f32
    %70 = vector.broadcast %cst_29 : f32 to vector<2x32xf32>
    %71 = arith.subf %70, %62 : vector<2x32xf32>
    %72 = arith.mulf %71, %69 : vector<2x32xf32>
    %73 = arith.mulf %62, %41 : vector<2x32xf32>
    %74 = arith.addf %72, %73 : vector<2x32xf32>
    %c2_30 = arith.constant 2 : index
    %c0_31 = arith.constant 0 : index
    %75 = vector.load %arg10[%c2_30, %c0_31] : memref<12x32xf32, #tpu.memory_space<vmem>>, vector<2x32xf32>
    tpu.vector_store %arg10[%c2_30, %c0_31], %74 {strides = array<i32>} : memref<12x32xf32, #tpu.memory_space<vmem>>, vector<2x32xf32>,
    %c4 = arith.constant 4 : index
    %c0_32 = arith.constant 0 : index
    %76 = vector.load %arg9[%c4, %c0_32] : memref<12x96xf32, #tpu.memory_space<vmem>>, vector<2x96xf32>
    %cst_33 = arith.constant dense<0.000000e+00> : vector<2x96xf32>
    %77 = tpu.matmul %74, %7, %cst_33 {dimension_numbers = #tpu.dot_dimension_numbers<[1], [0], [0], [1], [0, 0, 1, 1], [], []>} : vector<2x32xf32>, vector<32x96xf32>, vector<2x96xf32> -> vector<2x96xf32>
    %78 = vector.extract_strided_slice %76 {offsets = [0, 0], sizes = [2, 32], strides = [1, 1]} : vector<2x96xf32> to vector<2x32xf32>
    %79 = vector.extract_strided_slice %77 {offsets = [0, 0], sizes = [2, 32], strides = [1, 1]} : vector<2x96xf32> to vector<2x32xf32>
    %80 = arith.addf %78, %79 : vector<2x32xf32>
    %cst_34 = arith.constant 0.000000e+00 : f32
    %81 = vector.broadcast %cst_34 : f32 to vector<2x32xf32>
    %82 = arith.subf %81, %80 : vector<2x32xf32>
    %83 = math.exp %82 : vector<2x32xf32>
    %cst_35 = arith.constant 1.000000e+00 : f32
    %84 = vector.broadcast %cst_35 : f32 to vector<2x32xf32>
    %85 = arith.addf %84, %83 : vector<2x32xf32>
    %86 = tpu.reciprocal %85 {approx = true} : vector<2x32xf32> -> vector<2x32xf32>
    %87 = vector.extract_strided_slice %76 {offsets = [0, 32], sizes = [2, 32], strides = [1, 1]} : vector<2x96xf32> to vector<2x32xf32>
    %88 = vector.extract_strided_slice %77 {offsets = [0, 32], sizes = [2, 32], strides = [1, 1]} : vector<2x96xf32> to vector<2x32xf32>
    %89 = arith.addf %87, %88 : vector<2x32xf32>
    %cst_36 = arith.constant 0.000000e+00 : f32
    %90 = vector.broadcast %cst_36 : f32 to vector<2x32xf32>
    %91 = arith.subf %90, %89 : vector<2x32xf32>
    %92 = math.exp %91 : vector<2x32xf32>
    %cst_37 = arith.constant 1.000000e+00 : f32
    %93 = vector.broadcast %cst_37 : f32 to vector<2x32xf32>
    %94 = arith.addf %93, %92 : vector<2x32xf32>
    %95 = tpu.reciprocal %94 {approx = true} : vector<2x32xf32> -> vector<2x32xf32>
    %96 = vector.extract_strided_slice %76 {offsets = [0, 64], sizes = [2, 32], strides = [1, 1]} : vector<2x96xf32> to vector<2x32xf32>
    %97 = vector.extract_strided_slice %77 {offsets = [0, 64], sizes = [2, 32], strides = [1, 1]} : vector<2x96xf32> to vector<2x32xf32>
    %98 = vector.broadcast %8 : vector<1x32xf32> to vector<2x32xf32>
    %99 = arith.addf %97, %98 : vector<2x32xf32>
    %100 = arith.mulf %86, %99 : vector<2x32xf32>
    %101 = arith.addf %96, %100 : vector<2x32xf32>
    %102 = math.tanh %101 : vector<2x32xf32>
    %cst_38 = arith.constant 1.000000e+00 : f32
    %103 = vector.broadcast %cst_38 : f32 to vector<2x32xf32>
    %104 = arith.subf %103, %95 : vector<2x32xf32>
    %105 = arith.mulf %104, %102 : vector<2x32xf32>
    %106 = arith.mulf %95, %74 : vector<2x32xf32>
    %107 = arith.addf %105, %106 : vector<2x32xf32>
    %c4_39 = arith.constant 4 : index
    %c0_40 = arith.constant 0 : index
    %108 = vector.load %arg10[%c4_39, %c0_40] : memref<12x32xf32, #tpu.memory_space<vmem>>, vector<2x32xf32>
    tpu.vector_store %arg10[%c4_39, %c0_40], %107 {strides = array<i32>} : memref<12x32xf32, #tpu.memory_space<vmem>>, vector<2x32xf32>,
    %c6 = arith.constant 6 : index
    %c0_41 = arith.constant 0 : index
    %109 = vector.load %arg9[%c6, %c0_41] : memref<12x96xf32, #tpu.memory_space<vmem>>, vector<2x96xf32>
    %cst_42 = arith.constant dense<0.000000e+00> : vector<2x96xf32>
    %110 = tpu.matmul %107, %7, %cst_42 {dimension_numbers = #tpu.dot_dimension_numbers<[1], [0], [0], [1], [0, 0, 1, 1], [], []>} : vector<2x32xf32>, vector<32x96xf32>, vector<2x96xf32> -> vector<2x96xf32>
    %111 = vector.extract_strided_slice %109 {offsets = [0, 0], sizes = [2, 32], strides = [1, 1]} : vector<2x96xf32> to vector<2x32xf32>
    %112 = vector.extract_strided_slice %110 {offsets = [0, 0], sizes = [2, 32], strides = [1, 1]} : vector<2x96xf32> to vector<2x32xf32>
    %113 = arith.addf %111, %112 : vector<2x32xf32>
    %cst_43 = arith.constant 0.000000e+00 : f32
    %114 = vector.broadcast %cst_43 : f32 to vector<2x32xf32>
    %115 = arith.subf %114, %113 : vector<2x32xf32>
    %116 = math.exp %115 : vector<2x32xf32>
    %cst_44 = arith.constant 1.000000e+00 : f32
    %117 = vector.broadcast %cst_44 : f32 to vector<2x32xf32>
    %118 = arith.addf %117, %116 : vector<2x32xf32>
    %119 = tpu.reciprocal %118 {approx = true} : vector<2x32xf32> -> vector<2x32xf32>
    %120 = vector.extract_strided_slice %109 {offsets = [0, 32], sizes = [2, 32], strides = [1, 1]} : vector<2x96xf32> to vector<2x32xf32>
    %121 = vector.extract_strided_slice %110 {offsets = [0, 32], sizes = [2, 32], strides = [1, 1]} : vector<2x96xf32> to vector<2x32xf32>
    %122 = arith.addf %120, %121 : vector<2x32xf32>
    %cst_45 = arith.constant 0.000000e+00 : f32
    %123 = vector.broadcast %cst_45 : f32 to vector<2x32xf32>
    %124 = arith.subf %123, %122 : vector<2x32xf32>
    %125 = math.exp %124 : vector<2x32xf32>
    %cst_46 = arith.constant 1.000000e+00 : f32
    %126 = vector.broadcast %cst_46 : f32 to vector<2x32xf32>
    %127 = arith.addf %126, %125 : vector<2x32xf32>
    %128 = tpu.reciprocal %127 {approx = true} : vector<2x32xf32> -> vector<2x32xf32>
    %129 = vector.extract_strided_slice %109 {offsets = [0, 64], sizes = [2, 32], strides = [1, 1]} : vector<2x96xf32> to vector<2x32xf32>
    %130 = vector.extract_strided_slice %110 {offsets = [0, 64], sizes = [2, 32], strides = [1, 1]} : vector<2x96xf32> to vector<2x32xf32>
    %131 = vector.broadcast %8 : vector<1x32xf32> to vector<2x32xf32>
    %132 = arith.addf %130, %131 : vector<2x32xf32>
    %133 = arith.mulf %119, %132 : vector<2x32xf32>
    %134 = arith.addf %129, %133 : vector<2x32xf32>
    %135 = math.tanh %134 : vector<2x32xf32>
    %cst_47 = arith.constant 1.000000e+00 : f32
    %136 = vector.broadcast %cst_47 : f32 to vector<2x32xf32>
    %137 = arith.subf %136, %128 : vector<2x32xf32>
    %138 = arith.mulf %137, %135 : vector<2x32xf32>
    %139 = arith.mulf %128, %107 : vector<2x32xf32>
    %140 = arith.addf %138, %139 : vector<2x32xf32>
    %c6_48 = arith.constant 6 : index
    %c0_49 = arith.constant 0 : index
    %141 = vector.load %arg10[%c6_48, %c0_49] : memref<12x32xf32, #tpu.memory_space<vmem>>, vector<2x32xf32>
    tpu.vector_store %arg10[%c6_48, %c0_49], %140 {strides = array<i32>} : memref<12x32xf32, #tpu.memory_space<vmem>>, vector<2x32xf32>,
    %c8 = arith.constant 8 : index
    %c0_50 = arith.constant 0 : index
    %142 = vector.load %arg9[%c8, %c0_50] : memref<12x96xf32, #tpu.memory_space<vmem>>, vector<2x96xf32>
    %cst_51 = arith.constant dense<0.000000e+00> : vector<2x96xf32>
    %143 = tpu.matmul %140, %7, %cst_51 {dimension_numbers = #tpu.dot_dimension_numbers<[1], [0], [0], [1], [0, 0, 1, 1], [], []>} : vector<2x32xf32>, vector<32x96xf32>, vector<2x96xf32> -> vector<2x96xf32>
    %144 = vector.extract_strided_slice %142 {offsets = [0, 0], sizes = [2, 32], strides = [1, 1]} : vector<2x96xf32> to vector<2x32xf32>
    %145 = vector.extract_strided_slice %143 {offsets = [0, 0], sizes = [2, 32], strides = [1, 1]} : vector<2x96xf32> to vector<2x32xf32>
    %146 = arith.addf %144, %145 : vector<2x32xf32>
    %cst_52 = arith.constant 0.000000e+00 : f32
    %147 = vector.broadcast %cst_52 : f32 to vector<2x32xf32>
    %148 = arith.subf %147, %146 : vector<2x32xf32>
    %149 = math.exp %148 : vector<2x32xf32>
    %cst_53 = arith.constant 1.000000e+00 : f32
    %150 = vector.broadcast %cst_53 : f32 to vector<2x32xf32>
    %151 = arith.addf %150, %149 : vector<2x32xf32>
    %152 = tpu.reciprocal %151 {approx = true} : vector<2x32xf32> -> vector<2x32xf32>
    %153 = vector.extract_strided_slice %142 {offsets = [0, 32], sizes = [2, 32], strides = [1, 1]} : vector<2x96xf32> to vector<2x32xf32>
    %154 = vector.extract_strided_slice %143 {offsets = [0, 32], sizes = [2, 32], strides = [1, 1]} : vector<2x96xf32> to vector<2x32xf32>
    %155 = arith.addf %153, %154 : vector<2x32xf32>
    %cst_54 = arith.constant 0.000000e+00 : f32
    %156 = vector.broadcast %cst_54 : f32 to vector<2x32xf32>
    %157 = arith.subf %156, %155 : vector<2x32xf32>
    %158 = math.exp %157 : vector<2x32xf32>
    %cst_55 = arith.constant 1.000000e+00 : f32
    %159 = vector.broadcast %cst_55 : f32 to vector<2x32xf32>
    %160 = arith.addf %159, %158 : vector<2x32xf32>
    %161 = tpu.reciprocal %160 {approx = true} : vector<2x32xf32> -> vector<2x32xf32>
    %162 = vector.extract_strided_slice %142 {offsets = [0, 64], sizes = [2, 32], strides = [1, 1]} : vector<2x96xf32> to vector<2x32xf32>
    %163 = vector.extract_strided_slice %143 {offsets = [0, 64], sizes = [2, 32], strides = [1, 1]} : vector<2x96xf32> to vector<2x32xf32>
    %164 = vector.broadcast %8 : vector<1x32xf32> to vector<2x32xf32>
    %165 = arith.addf %163, %164 : vector<2x32xf32>
    %166 = arith.mulf %152, %165 : vector<2x32xf32>
    %167 = arith.addf %162, %166 : vector<2x32xf32>
    %168 = math.tanh %167 : vector<2x32xf32>
    %cst_56 = arith.constant 1.000000e+00 : f32
    %169 = vector.broadcast %cst_56 : f32 to vector<2x32xf32>
    %170 = arith.subf %169, %161 : vector<2x32xf32>
    %171 = arith.mulf %170, %168 : vector<2x32xf32>
    %172 = arith.mulf %161, %140 : vector<2x32xf32>
    %173 = arith.addf %171, %172 : vector<2x32xf32>
    %c8_57 = arith.constant 8 : index
    %c0_58 = arith.constant 0 : index
    %174 = vector.load %arg10[%c8_57, %c0_58] : memref<12x32xf32, #tpu.memory_space<vmem>>, vector<2x32xf32>
    tpu.vector_store %arg10[%c8_57, %c0_58], %173 {strides = array<i32>} : memref<12x32xf32, #tpu.memory_space<vmem>>, vector<2x32xf32>,
    %c10 = arith.constant 10 : index
    %c0_59 = arith.constant 0 : index
    %175 = vector.load %arg9[%c10, %c0_59] : memref<12x96xf32, #tpu.memory_space<vmem>>, vector<2x96xf32>
    %cst_60 = arith.constant dense<0.000000e+00> : vector<2x96xf32>
    %176 = tpu.matmul %173, %7, %cst_60 {dimension_numbers = #tpu.dot_dimension_numbers<[1], [0], [0], [1], [0, 0, 1, 1], [], []>} : vector<2x32xf32>, vector<32x96xf32>, vector<2x96xf32> -> vector<2x96xf32>
    %177 = vector.extract_strided_slice %175 {offsets = [0, 0], sizes = [2, 32], strides = [1, 1]} : vector<2x96xf32> to vector<2x32xf32>
    %178 = vector.extract_strided_slice %176 {offsets = [0, 0], sizes = [2, 32], strides = [1, 1]} : vector<2x96xf32> to vector<2x32xf32>
    %179 = arith.addf %177, %178 : vector<2x32xf32>
    %cst_61 = arith.constant 0.000000e+00 : f32
    %180 = vector.broadcast %cst_61 : f32 to vector<2x32xf32>
    %181 = arith.subf %180, %179 : vector<2x32xf32>
    %182 = math.exp %181 : vector<2x32xf32>
    %cst_62 = arith.constant 1.000000e+00 : f32
    %183 = vector.broadcast %cst_62 : f32 to vector<2x32xf32>
    %184 = arith.addf %183, %182 : vector<2x32xf32>
    %185 = tpu.reciprocal %184 {approx = true} : vector<2x32xf32> -> vector<2x32xf32>
    %186 = vector.extract_strided_slice %175 {offsets = [0, 32], sizes = [2, 32], strides = [1, 1]} : vector<2x96xf32> to vector<2x32xf32>
    %187 = vector.extract_strided_slice %176 {offsets = [0, 32], sizes = [2, 32], strides = [1, 1]} : vector<2x96xf32> to vector<2x32xf32>
    %188 = arith.addf %186, %187 : vector<2x32xf32>
    %cst_63 = arith.constant 0.000000e+00 : f32
    %189 = vector.broadcast %cst_63 : f32 to vector<2x32xf32>
    %190 = arith.subf %189, %188 : vector<2x32xf32>
    %191 = math.exp %190 : vector<2x32xf32>
    %cst_64 = arith.constant 1.000000e+00 : f32
    %192 = vector.broadcast %cst_64 : f32 to vector<2x32xf32>
    %193 = arith.addf %192, %191 : vector<2x32xf32>
    %194 = tpu.reciprocal %193 {approx = true} : vector<2x32xf32> -> vector<2x32xf32>
    %195 = vector.extract_strided_slice %175 {offsets = [0, 64], sizes = [2, 32], strides = [1, 1]} : vector<2x96xf32> to vector<2x32xf32>
    %196 = vector.extract_strided_slice %176 {offsets = [0, 64], sizes = [2, 32], strides = [1, 1]} : vector<2x96xf32> to vector<2x32xf32>
    %197 = vector.broadcast %8 : vector<1x32xf32> to vector<2x32xf32>
    %198 = arith.addf %196, %197 : vector<2x32xf32>
    %199 = arith.mulf %185, %198 : vector<2x32xf32>
    %200 = arith.addf %195, %199 : vector<2x32xf32>
    %201 = math.tanh %200 : vector<2x32xf32>
    %cst_65 = arith.constant 1.000000e+00 : f32
    %202 = vector.broadcast %cst_65 : f32 to vector<2x32xf32>
    %203 = arith.subf %202, %194 : vector<2x32xf32>
    %204 = arith.mulf %203, %201 : vector<2x32xf32>
    %205 = arith.mulf %194, %173 : vector<2x32xf32>
    %206 = arith.addf %204, %205 : vector<2x32xf32>
    %c10_66 = arith.constant 10 : index
    %c0_67 = arith.constant 0 : index
    %207 = vector.load %arg10[%c10_66, %c0_67] : memref<12x32xf32, #tpu.memory_space<vmem>>, vector<2x32xf32>
    tpu.vector_store %arg10[%c10_66, %c0_67], %206 {strides = array<i32>} : memref<12x32xf32, #tpu.memory_space<vmem>>, vector<2x32xf32>,
    %c0_68 = arith.constant 0 : index
    %c0_69 = arith.constant 0 : index
    %208 = vector.load %arg10[%c0_68, %c0_69] : memref<12x32xf32, #tpu.memory_space<vmem>>, vector<12x32xf32>
    %c0_70 = arith.constant 0 : index
    %c0_71 = arith.constant 0 : index
    %209 = vector.load %arg6[%c0_70, %c0_71] : memref<32x50xf32, #tpu.memory_space<vmem>>, vector<32x50xf32>
    %cst_72 = arith.constant dense<0.000000e+00> : vector<12x50xf32>
    %210 = tpu.matmul %208, %209, %cst_72 {dimension_numbers = #tpu.dot_dimension_numbers<[1], [0], [0], [1], [0, 0, 1, 1], [], []>} : vector<12x32xf32>, vector<32x50xf32>, vector<12x50xf32> -> vector<12x50xf32>
    %c0_73 = arith.constant 0 : index
    %c0_74 = arith.constant 0 : index
    %211 = vector.load %arg7[%c0_73, %c0_74] : memref<1x50xf32, #tpu.memory_space<vmem>>, vector<1x50xf32>
    %212 = vector.broadcast %211 : vector<1x50xf32> to vector<12x50xf32>
    %213 = arith.addf %210, %212 : vector<12x50xf32>
    %cst_75 = arith.constant dense<0xFF800000> : vector<12xf32>
    %214 = vector.multi_reduction <maximumf>, %213, %cst_75 [1] : vector<12x50xf32> to vector<12xf32>
    %215 = vector.shape_cast %214 : vector<12xf32> to vector<12x1xf32>
    %216 = vector.broadcast %215 : vector<12x1xf32> to vector<12x50xf32>
    %217 = arith.subf %213, %216 : vector<12x50xf32>
    %218 = math.exp %217 : vector<12x50xf32>
    %cst_76 = arith.constant dense<0.000000e+00> : vector<12xf32>
    %219 = vector.multi_reduction <add>, %218, %cst_76 [1] : vector<12x50xf32> to vector<12xf32>
    %220 = vector.shape_cast %219 : vector<12xf32> to vector<12x1xf32>
    %221 = math.log %220 : vector<12x1xf32>
    %222 = arith.addf %221, %215 : vector<12x1xf32>
    %223 = vector.broadcast %222 : vector<12x1xf32> to vector<12x50xf32>
    %224 = arith.subf %213, %223 : vector<12x50xf32>
    %c0_77 = arith.constant 0 : index
    %c0_78 = arith.constant 0 : index
    %225 = vector.load %arg8[%c0_77, %c0_78] : memref<12x50xf32, #tpu.memory_space<vmem>>, vector<12x50xf32>
    tpu.vector_store %arg8[%c0_77, %c0_78], %224 {strides = array<i32>} : memref<12x50xf32, #tpu.memory_space<vmem>>, vector<12x50xf32>,
    return
  }
}

</mosaic_0001>

<llo_original>
// kernel: _lambda_.5
$region0: #{_lambda_.5}
  #allocation0 [shape = 'u32[]', space=smem, size = 0x4, offset = 0x4, fixed_abs, tag = 'smem constant byte address 0x4 - core index']
  #allocation1 [shape = 'u32[144,128]{1,0:T(1,128)}', space=vmem, size = 0x12000, scoped, tag = 'internal scratch']
  #allocation2 [shape = 'f32[30,96]{1,0:T(8,128)}', space=vmem, size = 0x4000, scoped, tag = 'scratch operand']
  %s0 = inlined_call_operand.vmem [shape: f32[30,16], index: 0, kind: input, shape index: {}]
  %s1 = inlined_call_operand.vmem [shape: s32[6,1], index: 1, kind: input, shape index: {}]
  %s2 = inlined_call_operand.vmem [shape: f32[16,96], index: 2, kind: input, shape index: {}]
  %s3 = inlined_call_operand.vmem [shape: f32[32,96], index: 3, kind: input, shape index: {}]
  %s4 = inlined_call_operand.vmem [shape: f32[1,96], index: 4, kind: input, shape index: {}]
  %s5 = inlined_call_operand.vmem [shape: f32[1,32], index: 5, kind: input, shape index: {}]
  %s6 = inlined_call_operand.vmem [shape: f32[6,32], index: 6, kind: output, shape index: {}]
  %s7 = sld [smem:[#allocation0]]
  $region34: #{_lambda_.5} parent=0
    _
  %s9 = ssub.s32 1, %s7
  %s10 = scalar_select 0, %s9, %s7
  // Predicated region
  $region2: #{_lambda_.5} parent=0 // pred_check
    _
  $region3: #{_lambda_.5} parent=0 // pred_check_branch
    %12 = sbr.rel (0) target = $region5
  $region4: #{_lambda_.5} parent=0 // pred_region
    _
  $region5: #{_lambda_.5} parent=0 // pred_fallthru
    _
  // Predicated region
  $region6: #{_lambda_.5} parent=0 // pred_check
    _
  $region7: #{_lambda_.5} parent=0 // pred_check_branch
    %14 = sbr.rel (0) target = $region9
  $region8: #{_lambda_.5} parent=0 // pred_region
    _
  $region9: #{_lambda_.5} parent=0 // pred_fallthru
    _
  // Predicated region
  $region10: #{_lambda_.5} parent=0 // pred_check
    _
  $region11: #{_lambda_.5} parent=0 // pred_check_branch
    %16 = sbr.rel (0) target = $region13
  $region12: #{_lambda_.5} parent=0 // pred_region
    _
  $region13: #{_lambda_.5} parent=0 // pred_fallthru
    _
  // Predicated region
  $region14: #{_lambda_.5} parent=0 // pred_check
    _
  $region15: #{_lambda_.5} parent=0 // pred_check_branch
    %18 = sbr.rel (0) target = $region17
  $region16: #{_lambda_.5} parent=0 // pred_region
    _
  $region17: #{_lambda_.5} parent=0 // pred_fallthru
    _
  // Predicated region
  $region18: #{_lambda_.5} parent=0 // pred_check
    _
  $region19: #{_lambda_.5} parent=0 // pred_check_branch
    %20 = sbr.rel (0) target = $region21
  $region20: #{_lambda_.5} parent=0 // pred_region
    _
  $region21: #{_lambda_.5} parent=0 // pred_fallthru
    _
  // Predicated region
  $region22: #{_lambda_.5} parent=0 // pred_check
    _
  $region23: #{_lambda_.5} parent=0 // pred_check_branch
    %22 = sbr.rel (0) target = $region25
  $region24: #{_lambda_.5} parent=0 // pred_region
    _
  $region25: #{_lambda_.5} parent=0 // pred_fallthru
    _
  %v23 = vld [vmem:[%s0] sm:$0xff]
  %v24 = vld [vmem:[%s0 + $0x8] sm:$0xff]
  %v25 = vld [vmem:[%s0 + $0x10] sm:$0xff]
  %v26 = vld [vmem:[%s0 + $0x18] sm:$0x3f]
  %v27 = vld [vmem:[%s2] sm:$0xff]
  %v28 = vld [vmem:[%s2 + $0x8] sm:$0xff]
  %v29 = vld [vmem:[%s4] sm:$0x1]
  %v31 = vlaneseq
  %v32 = vshrl.u32 %v31, 7
  %v33 = vsub.s32 0, %v32
  %v34 = vrot.slane %v29, %v33
  %vm36 = vcmask 130048
  %v38 = vsel %vm36, %v23, 0
  %v41 = vsel %vm36, %v24, 0
  %v44 = vsel %vm36, %v25, 0
  %v47 = vsel %vm36, %v26, 0
  %49 = vmatprep.subr.mxu0 0.0
  %50 = vmatpush1.msra.mxu0 %v27
  %51 = vmatprep.subr.mxu0 0.0
  %52 = vmatpush1.msra.mxu0 %v28
  %53 = vmatprep.subr.mxu0 0.0
  %54 = vmatpush1.msra.mxu0 0.0
  %55 = vmatprep.subr.mxu0 0.0
  %56 = vmatpush1.msra.mxu0 0.0
  %57 = vmatprep.subr.mxu0 0.0
  %58 = vmatpush1.msra.mxu0 0.0
  %59 = vmatprep.subr.mxu0 0.0
  %60 = vmatpush1.msra.mxu0 0.0
  %61 = vmatprep.subr.mxu0 0.0
  %62 = vmatpush1.msra.mxu0 0.0
  %63 = vmatprep.subr.mxu0 0.0
  %64 = vmatpush1.msra.mxu0 0.0
  %65 = vmatprep.subr.mxu0 0.0
  %66 = vmatpush1.msra.mxu0 0.0
  %67 = vmatprep.subr.mxu0 0.0
  %68 = vmatpush1.msra.mxu0 0.0
  %69 = vmatprep.subr.mxu0 0.0
  %70 = vmatpush1.msra.mxu0 0.0
  %71 = vmatprep.subr.mxu0 0.0
  %72 = vmatpush1.msra.mxu0 0.0
  %73 = vmatprep.subr.mxu0 0.0
  %74 = vmatpush1.msra.mxu0 0.0
  %75 = vmatprep.subr.mxu0 0.0
  %76 = vmatpush1.msra.mxu0 0.0
  %77 = vmatprep.subr.mxu0 0.0
  %78 = vmatpush1.msra.mxu0 0.0
  %79 = vmatprep.subr.mxu0 0.0
  %80 = vmatpush1.msra.mxu0 0.0
  %81 = vmatprep.subr.mxu0 0.0
  %82 = vmatpush1.msra.mxu0 0.0
  %83 = vmatprep.subr.mxu0 0.0
  %84 = vmatpush1.msra.mxu0 0.0
  %85 = vmatprep.subr.mxu0 0.0
  %86 = vmatpush1.msra.mxu0 0.0
  %87 = vmatprep.subr.mxu0 0.0
  %88 = vmatpush1.msra.mxu0 0.0
  %89 = vmatprep.subr.mxu0 0.0
  %90 = vmatpush1.msra.mxu0 0.0
  %91 = vmatprep.subr.mxu0 0.0
  %92 = vmatpush1.msra.mxu0 0.0
  %93 = vmatprep.subr.mxu0 0.0
  %94 = vmatpush1.msra.mxu0 0.0
  %95 = vmatprep.subr.mxu0 0.0
  %96 = vmatpush1.msra.mxu0 0.0
  %97 = vmatprep.subr.mxu0 0.0
  %98 = vmatpush1.msra.mxu0 0.0
  %99 = vmatprep.subr.mxu0 0.0
  %100 = vmatpush1.msra.mxu0 0.0
  %101 = vmatprep.subr.mxu0 0.0
  %102 = vmatpush1.msra.mxu0 0.0
  %103 = vmatprep.subr.mxu0 0.0
  %104 = vmatpush1.msra.mxu0 0.0
  %105 = vmatprep.subr.mxu0 0.0
  %106 = vmatpush1.msra.mxu0 0.0
  %107 = vmatprep.subr.mxu0 0.0
  %108 = vmatpush1.msra.mxu0 0.0
  %109 = vmatprep.subr.mxu0 0.0
  %110 = vmatpush1.msra.mxu0 0.0
  %111 = vmatprep.subr.mxu0 0.0
  %112 = vmatpush1.msra.mxu0 0.0
  %113 = vmatprep.mubr.f32.mxu0 0.0
  %114 = vmatmul.mubr.f32.gmra.mrb[0].mxu0 %v38
  %v115 = vpop.f32.mrb[0].mxu0
  %v116 = vadd.f32 %v34, %v115
  %v117 = vpop.f32.mrb[0].mxu0
  %118 = vmatprep.mubr.f32.mxu0 0.0
  %119 = vmatmul.mubr.f32.gmra.mrb[0].mxu0 %v41
  %v120 = vpop.f32.mrb[0].mxu0
  %v121 = vadd.f32 %v34, %v120
  %v122 = vpop.f32.mrb[0].mxu0
  %123 = vmatprep.mubr.f32.mxu0 0.0
  %124 = vmatmul.mubr.f32.gmra.mrb[0].mxu0 %v44
  %v125 = vpop.f32.mrb[0].mxu0
  %v126 = vadd.f32 %v34, %v125
  %v127 = vpop.f32.mrb[0].mxu0
  %128 = vmatprep.mubr.f32.mxu0 0.0
  %129 = vmatmul.mubr.f32.gmra.mrb[0].mxu0 %v47
  %v130 = vpop.f32.mrb[0].mxu0
  %v131 = vadd.f32 %v34, %v130
  %v132 = vpop.f32.mrb[0].mxu0
  %133 = vdwg.mxu0
  %vm134 = vcmask 785408
  %135 = vst.msk [vmem:[#allocation2] sm:$0xff] %vm134, %v116
  %136 = vst.msk [vmem:[#allocation2 + $0x8] sm:$0xff] %vm134, %v121
  %137 = vst.msk [vmem:[#allocation2 + $0x10] sm:$0xff] %vm134, %v126
  %vm138 = vcmask 783360
  %139 = vst.msk [vmem:[#allocation2 + $0x18] sm:$0x3f] %vm138, %v131
  %v140 = vld [vmem:[%s3] sm:$0xff]
  %v141 = vld [vmem:[%s3 + $0x8] sm:$0xff]
  %v142 = vld [vmem:[%s3 + $0x10] sm:$0xff]
  %v143 = vld [vmem:[%s3 + $0x18] sm:$0xff]
  %v144 = vld [vmem:[%s5] sm:$0x1]
  %v145 = vld [vmem:[%s1] sm:$0x3f]
  %v146 = vld [vmem:[#allocation2] sm:$0x3f]
  %vm147 = vcmask 261120
  %v149 = vsel %vm147, 0.0, 0
  %151 = vmatprep.subr.mxu0 0.0
  %152 = vmatpush1.msra.mxu0 %v140
  %153 = vmatprep.subr.mxu0 0.0
  %154 = vmatpush1.msra.mxu0 %v141
  %155 = vmatprep.subr.mxu0 0.0
  %156 = vmatpush1.msra.mxu0 %v142
  %157 = vmatprep.subr.mxu0 0.0
  %158 = vmatpush1.msra.mxu0 %v143
  %159 = vmatprep.subr.mxu0 0.0
  %160 = vmatpush1.msra.mxu0 0.0
  %161 = vmatprep.subr.mxu0 0.0
  %162 = vmatpush1.msra.mxu0 0.0
  %163 = vmatprep.subr.mxu0 0.0
  %164 = vmatpush1.msra.mxu0 0.0
  %165 = vmatprep.subr.mxu0 0.0
  %166 = vmatpush1.msra.mxu0 0.0
  %167 = vmatprep.subr.mxu0 0.0
  %168 = vmatpush1.msra.mxu0 0.0
  %169 = vmatprep.subr.mxu0 0.0
  %170 = vmatpush1.msra.mxu0 0.0
  %171 = vmatprep.subr.mxu0 0.0
  %172 = vmatpush1.msra.mxu0 0.0
  %173 = vmatprep.subr.mxu0 0.0
  %174 = vmatpush1.msra.mxu0 0.0
  %175 = vmatprep.subr.mxu0 0.0
  %176 = vmatpush1.msra.mxu0 0.0
  %177 = vmatprep.subr.mxu0 0.0
  %178 = vmatpush1.msra.mxu0 0.0
  %179 = vmatprep.subr.mxu0 0.0
  %180 = vmatpush1.msra.mxu0 0.0
  %181 = vmatprep.subr.mxu0 0.0
  %182 = vmatpush1.msra.mxu0 0.0
  %183 = vmatprep.subr.mxu0 0.0
  %184 = vmatpush1.msra.mxu0 0.0
  %185 = vmatprep.subr.mxu0 0.0
  %186 = vmatpush1.msra.mxu0 0.0
  %187 = vmatprep.subr.mxu0 0.0
  %188 = vmatpush1.msra.mxu0 0.0
  %189 = vmatprep.subr.mxu0 0.0
  %190 = vmatpush1.msra.mxu0 0.0
  %191 = vmatprep.subr.mxu0 0.0
  %192 = vmatpush1.msra.mxu0 0.0
  %193 = vmatprep.subr.mxu0 0.0
  %194 = vmatpush1.msra.mxu0 0.0
  %195 = vmatprep.subr.mxu0 0.0
  %196 = vmatpush1.msra.mxu0 0.0
  %197 = vmatprep.subr.mxu0 0.0
  %198 = vmatpush1.msra.mxu0 0.0
  %199 = vmatprep.subr.mxu0 0.0
  %200 = vmatpush1.msra.mxu0 0.0
  %201 = vmatprep.subr.mxu0 0.0
  %202 = vmatpush1.msra.mxu0 0.0
  %203 = vmatprep.subr.mxu0 0.0
  %204 = vmatpush1.msra.mxu0 0.0
  %205 = vmatprep.subr.mxu0 0.0
  %206 = vmatpush1.msra.mxu0 0.0
  %207 = vmatprep.subr.mxu0 0.0
  %208 = vmatpush1.msra.mxu0 0.0
  %209 = vmatprep.subr.mxu0 0.0
  %210 = vmatpush1.msra.mxu0 0.0
  %211 = vmatprep.subr.mxu0 0.0
  %212 = vmatpush1.msra.mxu0 0.0
  %213 = vmatprep.subr.mxu0 0.0
  %214 = vmatpush1.msra.mxu0 0.0
  %215 = vmatprep.mubr.f32.mxu0 0.0
  %216 = vmatmul.mubr.f32.gmra.mrb[0].mxu0 %v149
  %v217 = vpop.f32.mrb[0].mxu0
  %v218 = vadd.f32 0.0, %v217
  %v219 = vpop.f32.mrb[0].mxu0
  %220 = vdwg.mxu0
  %v221 = vadd.f32 %v146, %v218
  %v222 = vsub.f32 0.0, %v221
  %v223 = vmul.f32 %v222, 1.442695
  %v224 = vpow.pop %v223
  %v225 = vadd.f32 %v224, 1.0
  %v226 = vrcp.pop %v225
  %v228 = vlaneseq
  %v229 = vshrl.u32 %v228, 7
  %v230 = vsub.s32 0, %v229
  %v231 = vrot.slane %v144, %v230
  %232 = vrot.lane.b32.xlu0 %v231, 64
  %v233 = vpop.permute.xlu0 %232
  %v235 = vadd.f32 %v218, %v233
  %237 = vrot.lane.b32.xlu0 %v235, 64
  %v238 = vpop.permute.xlu0 %237
  %v240 = vmul.f32 %v226, %v238
  %242 = vrot.lane.b32.xlu0 %v240, 64
  %v243 = vpop.permute.xlu0 %242
  %v245 = vadd.f32 %v146, %v243
  %v246 = vtanh.pop %v245
  %v247 = vsub.f32 1.0, %v226
  %249 = vrot.lane.b32.xlu0 %v246, 96
  %v250 = vpop.permute.xlu0 %249
  %v252 = vmul.f32 %v247, %v250
  %v253 = vmul.f32 %v226, 0.0
  %v254 = vadd.f32 %v252, %v253
  %vm255 = vcmp.eq.s32.totalorder %v145, 0
  %v256 = vsel %vm255, 1, 0
  %257 = vset.pattern.permute.xlu0 0
  %258 = vperm.xlu0 %257, %v256
  %v259 = vpop.permute.xlu0 %258
  %vm260 = vcmp.eq.s32.totalorder %v259, 1
  %v261 = vsel %vm260, %v254, 0.0
  %v262 = vld [vmem:[#allocation2 + $0x6] sm:$0x3f]
  %264 = vrot.lane.b32.xlu0 %v254, 96
  %v265 = vpop.permute.xlu0 %264
  %v266 = vsel %vm147, %v265, 0
  %268 = vmatprep.subr.mxu0 0.0
  %269 = vmatpush1.msra.mxu0 %v140
  %270 = vmatprep.subr.mxu0 0.0
  %271 = vmatpush1.msra.mxu0 %v141
  %272 = vmatprep.subr.mxu0 0.0
  %273 = vmatpush1.msra.mxu0 %v142
  %274 = vmatprep.subr.mxu0 0.0
  %275 = vmatpush1.msra.mxu0 %v143
  %276 = vmatprep.subr.mxu0 0.0
  %277 = vmatpush1.msra.mxu0 0.0
  %278 = vmatprep.subr.mxu0 0.0
  %279 = vmatpush1.msra.mxu0 0.0
  %280 = vmatprep.subr.mxu0 0.0
  %281 = vmatpush1.msra.mxu0 0.0
  %282 = vmatprep.subr.mxu0 0.0
  %283 = vmatpush1.msra.mxu0 0.0
  %284 = vmatprep.subr.mxu0 0.0
  %285 = vmatpush1.msra.mxu0 0.0
  %286 = vmatprep.subr.mxu0 0.0
  %287 = vmatpush1.msra.mxu0 0.0
  %288 = vmatprep.subr.mxu0 0.0
  %289 = vmatpush1.msra.mxu0 0.0
  %290 = vmatprep.subr.mxu0 0.0
  %291 = vmatpush1.msra.mxu0 0.0
  %292 = vmatprep.subr.mxu0 0.0
  %293 = vmatpush1.msra.mxu0 0.0
  %294 = vmatprep.subr.mxu0 0.0
  %295 = vmatpush1.msra.mxu0 0.0
  %296 = vmatprep.subr.mxu0 0.0
  %297 = vmatpush1.msra.mxu0 0.0
  %298 = vmatprep.subr.mxu0 0.0
  %299 = vmatpush1.msra.mxu0 0.0
  %300 = vmatprep.subr.mxu0 0.0
  %301 = vmatpush1.msra.mxu0 0.0
  %302 = vmatprep.subr.mxu0 0.0
  %303 = vmatpush1.msra.mxu0 0.0
  %304 = vmatprep.subr.mxu0 0.0
  %305 = vmatpush1.msra.mxu0 0.0
  %306 = vmatprep.subr.mxu0 0.0
  %307 = vmatpush1.msra.mxu0 0.0
  %308 = vmatprep.subr.mxu0 0.0
  %309 = vmatpush1.msra.mxu0 0.0
  %310 = vmatprep.subr.mxu0 0.0
  %311 = vmatpush1.msra.mxu0 0.0
  %312 = vmatprep.subr.mxu0 0.0
  %313 = vmatpush1.msra.mxu0 0.0
  %314 = vmatprep.subr.mxu0 0.0
  %315 = vmatpush1.msra.mxu0 0.0
  %316 = vmatprep.subr.mxu0 0.0
  %317 = vmatpush1.msra.mxu0 0.0
  %318 = vmatprep.subr.mxu0 0.0
  %319 = vmatpush1.msra.mxu0 0.0
  %320 = vmatprep.subr.mxu0 0.0
  %321 = vmatpush1.msra.mxu0 0.0
  %322 = vmatprep.subr.mxu0 0.0
  %323 = vmatpush1.msra.mxu0 0.0
  %324 = vmatprep.subr.mxu0 0.0
  %325 = vmatpush1.msra.mxu0 0.0
  %326 = vmatprep.subr.mxu0 0.0
  %327 = vmatpush1.msra.mxu0 0.0
  %328 = vmatprep.subr.mxu0 0.0
  %329 = vmatpush1.msra.mxu0 0.0
  %330 = vmatprep.subr.mxu0 0.0
  %331 = vmatpush1.msra.mxu0 0.0
  %332 = vmatprep.mubr.f32.mxu0 0.0
  %333 = vmatmul.mubr.f32.gmra.mrb[0].mxu0 %v266
  %v334 = vpop.f32.mrb[0].mxu0
  %v335 = vadd.f32 0.0, %v334
  %v336 = vpop.f32.mrb[0].mxu0
  %337 = vdwg.mxu0
  %v338 = vadd.f32 %v262, %v335
  %v339 = vsub.f32 0.0, %v338
  %v340 = vmul.f32 %v339, 1.442695
  %v341 = vpow.pop %v340
  %v342 = vadd.f32 %v341, 1.0
  %v343 = vrcp.pop %v342
  %v344 = vadd.f32 %v335, %v233
  %346 = vrot.lane.b32.xlu0 %v344, 64
  %v347 = vpop.permute.xlu0 %346
  %v349 = vmul.f32 %v343, %v347
  %351 = vrot.lane.b32.xlu0 %v349, 64
  %v352 = vpop.permute.xlu0 %351
  %v354 = vadd.f32 %v262, %v352
  %v355 = vtanh.pop %v354
  %v356 = vsub.f32 1.0, %v343
  %358 = vrot.lane.b32.xlu0 %v355, 96
  %v359 = vpop.permute.xlu0 %358
  %v361 = vmul.f32 %v356, %v359
  %v362 = vmul.f32 %v343, %v254
  %v363 = vadd.f32 %v361, %v362
  %vm364 = vcmp.eq.s32.totalorder %v145, 1
  %v365 = vsel %vm364, 1, 0
  %366 = vset.pattern.permute.xlu0 0
  %367 = vperm.xlu0 %366, %v365
  %v368 = vpop.permute.xlu0 %367
  %vm369 = vcmp.eq.s32.totalorder %v368, 1
  %v370 = vsel %vm369, %v363, %v261
  %v371 = vld [vmem:[#allocation2 + $0xc] sm:$0x3f]
  %373 = vrot.lane.b32.xlu0 %v363, 96
  %v374 = vpop.permute.xlu0 %373
  %v375 = vsel %vm147, %v374, 0
  %377 = vmatprep.subr.mxu0 0.0
  %378 = vmatpush1.msra.mxu0 %v140
  %379 = vmatprep.subr.mxu0 0.0
  %380 = vmatpush1.msra.mxu0 %v141
  %381 = vmatprep.subr.mxu0 0.0
  %382 = vmatpush1.msra.mxu0 %v142
  %383 = vmatprep.subr.mxu0 0.0
  %384 = vmatpush1.msra.mxu0 %v143
  %385 = vmatprep.subr.mxu0 0.0
  %386 = vmatpush1.msra.mxu0 0.0
  %387 = vmatprep.subr.mxu0 0.0
  %388 = vmatpush1.msra.mxu0 0.0
  %389 = vmatprep.subr.mxu0 0.0
  %390 = vmatpush1.msra.mxu0 0.0
  %391 = vmatprep.subr.mxu0 0.0
  %392 = vmatpush1.msra.mxu0 0.0
  %393 = vmatprep.subr.mxu0 0.0
  %394 = vmatpush1.msra.mxu0 0.0
  %395 = vmatprep.subr.mxu0 0.0
  %396 = vmatpush1.msra.mxu0 0.0
  %397 = vmatprep.subr.mxu0 0.0
  %398 = vmatpush1.msra.mxu0 0.0
  %399 = vmatprep.subr.mxu0 0.0
  %400 = vmatpush1.msra.mxu0 0.0
  %401 = vmatprep.subr.mxu0 0.0
  %402 = vmatpush1.msra.mxu0 0.0
  %403 = vmatprep.subr.mxu0 0.0
  %404 = vmatpush1.msra.mxu0 0.0
  %405 = vmatprep.subr.mxu0 0.0
  %406 = vmatpush1.msra.mxu0 0.0
  %407 = vmatprep.subr.mxu0 0.0
  %408 = vmatpush1.msra.mxu0 0.0
  %409 = vmatprep.subr.mxu0 0.0
  %410 = vmatpush1.msra.mxu0 0.0
  %411 = vmatprep.subr.mxu0 0.0
  %412 = vmatpush1.msra.mxu0 0.0
  %413 = vmatprep.subr.mxu0 0.0
  %414 = vmatpush1.msra.mxu0 0.0
  %415 = vmatprep.subr.mxu0 0.0
  %416 = vmatpush1.msra.mxu0 0.0
  %417 = vmatprep.subr.mxu0 0.0
  %418 = vmatpush1.msra.mxu0 0.0
  %419 = vmatprep.subr.mxu0 0.0
  %420 = vmatpush1.msra.mxu0 0.0
  %421 = vmatprep.subr.mxu0 0.0
  %422 = vmatpush1.msra.mxu0 0.0
  %423 = vmatprep.subr.mxu0 0.0
  %424 = vmatpush1.msra.mxu0 0.0
  %425 = vmatprep.subr.mxu0 0.0
  %426 = vmatpush1.msra.mxu0 0.0
  %427 = vmatprep.subr.mxu0 0.0
  %428 = vmatpush1.msra.mxu0 0.0
  %429 = vmatprep.subr.mxu0 0.0
  %430 = vmatpush1.msra.mxu0 0.0
  %431 = vmatprep.subr.mxu0 0.0
  %432 = vmatpush1.msra.mxu0 0.0
  %433 = vmatprep.subr.mxu0 0.0
  %434 = vmatpush1.msra.mxu0 0.0
  %435 = vmatprep.subr.mxu0 0.0
  %436 = vmatpush1.msra.mxu0 0.0
  %437 = vmatprep.subr.mxu0 0.0
  %438 = vmatpush1.msra.mxu0 0.0
  %439 = vmatprep.subr.mxu0 0.0
  %440 = vmatpush1.msra.mxu0 0.0
  %441 = vmatprep.mubr.f32.mxu0 0.0
  %442 = vmatmul.mubr.f32.gmra.mrb[0].mxu0 %v375
  %v443 = vpop.f32.mrb[0].mxu0
  %v444 = vadd.f32 0.0, %v443
  %v445 = vpop.f32.mrb[0].mxu0
  %446 = vdwg.mxu0
  %v447 = vadd.f32 %v371, %v444
  %v448 = vsub.f32 0.0, %v447
  %v449 = vmul.f32 %v448, 1.442695
  %v450 = vpow.pop %v449
  %v451 = vadd.f32 %v450, 1.0
  %v452 = vrcp.pop %v451
  %v453 = vadd.f32 %v444, %v233
  %455 = vrot.lane.b32.xlu0 %v453, 64
  %v456 = vpop.permute.xlu0 %455
  %v458 = vmul.f32 %v452, %v456
  %460 = vrot.lane.b32.xlu0 %v458, 64
  %v461 = vpop.permute.xlu0 %460
  %v463 = vadd.f32 %v371, %v461
  %v464 = vtanh.pop %v463
  %v465 = vsub.f32 1.0, %v452
  %467 = vrot.lane.b32.xlu0 %v464, 96
  %v468 = vpop.permute.xlu0 %467
  %v470 = vmul.f32 %v465, %v468
  %v471 = vmul.f32 %v452, %v363
  %v472 = vadd.f32 %v470, %v471
  %vm473 = vcmp.eq.s32.totalorder %v145, 2
  %v474 = vsel %vm473, 1, 0
  %475 = vset.pattern.permute.xlu0 0
  %476 = vperm.xlu0 %475, %v474
  %v477 = vpop.permute.xlu0 %476
  %vm478 = vcmp.eq.s32.totalorder %v477, 1
  %v479 = vsel %vm478, %v472, %v370
  %v480 = vld [vmem:[#allocation2 + $0x12] sm:$0x3f]
  %482 = vrot.lane.b32.xlu0 %v472, 96
  %v483 = vpop.permute.xlu0 %482
  %v484 = vsel %vm147, %v483, 0
  %486 = vmatprep.subr.mxu0 0.0
  %487 = vmatpush1.msra.mxu0 %v140
  %488 = vmatprep.subr.mxu0 0.0
  %489 = vmatpush1.msra.mxu0 %v141
  %490 = vmatprep.subr.mxu0 0.0
  %491 = vmatpush1.msra.mxu0 %v142
  %492 = vmatprep.subr.mxu0 0.0
  %493 = vmatpush1.msra.mxu0 %v143
  %494 = vmatprep.subr.mxu0 0.0
  %495 = vmatpush1.msra.mxu0 0.0
  %496 = vmatprep.subr.mxu0 0.0
  %497 = vmatpush1.msra.mxu0 0.0
  %498 = vmatprep.subr.mxu0 0.0
  %499 = vmatpush1.msra.mxu0 0.0
  %500 = vmatprep.subr.mxu0 0.0
  %501 = vmatpush1.msra.mxu0 0.0
  %502 = vmatprep.subr.mxu0 0.0
  %503 = vmatpush1.msra.mxu0 0.0
  %504 = vmatprep.subr.mxu0 0.0
  %505 = vmatpush1.msra.mxu0 0.0
  %506 = vmatprep.subr.mxu0 0.0
  %507 = vmatpush1.msra.mxu0 0.0
  %508 = vmatprep.subr.mxu0 0.0
  %509 = vmatpush1.msra.mxu0 0.0
  %510 = vmatprep.subr.mxu0 0.0
  %511 = vmatpush1.msra.mxu0 0.0
  %512 = vmatprep.subr.mxu0 0.0
  %513 = vmatpush1.msra.mxu0 0.0
  %514 = vmatprep.subr.mxu0 0.0
  %515 = vmatpush1.msra.mxu0 0.0
  %516 = vmatprep.subr.mxu0 0.0
  %517 = vmatpush1.msra.mxu0 0.0
  %518 = vmatprep.subr.mxu0 0.0
  %519 = vmatpush1.msra.mxu0 0.0
  %520 = vmatprep.subr.mxu0 0.0
  %521 = vmatpush1.msra.mxu0 0.0
  %522 = vmatprep.subr.mxu0 0.0
  %523 = vmatpush1.msra.mxu0 0.0
  %524 = vmatprep.subr.mxu0 0.0
  %525 = vmatpush1.msra.mxu0 0.0
  %526 = vmatprep.subr.mxu0 0.0
  %527 = vmatpush1.msra.mxu0 0.0
  %528 = vmatprep.subr.mxu0 0.0
  %529 = vmatpush1.msra.mxu0 0.0
  %530 = vmatprep.subr.mxu0 0.0
  %531 = vmatpush1.msra.mxu0 0.0
  %532 = vmatprep.subr.mxu0 0.0
  %533 = vmatpush1.msra.mxu0 0.0
  %534 = vmatprep.subr.mxu0 0.0
  %535 = vmatpush1.msra.mxu0 0.0
  %536 = vmatprep.subr.mxu0 0.0
  %537 = vmatpush1.msra.mxu0 0.0
  %538 = vmatprep.subr.mxu0 0.0
  %539 = vmatpush1.msra.mxu0 0.0
  %540 = vmatprep.subr.mxu0 0.0
  %541 = vmatpush1.msra.mxu0 0.0
  %542 = vmatprep.subr.mxu0 0.0
  %543 = vmatpush1.msra.mxu0 0.0
  %544 = vmatprep.subr.mxu0 0.0
  %545 = vmatpush1.msra.mxu0 0.0
  %546 = vmatprep.subr.mxu0 0.0
  %547 = vmatpush1.msra.mxu0 0.0
  %548 = vmatprep.subr.mxu0 0.0
  %549 = vmatpush1.msra.mxu0 0.0
  %550 = vmatprep.mubr.f32.mxu0 0.0
  %551 = vmatmul.mubr.f32.gmra.mrb[0].mxu0 %v484
  %v552 = vpop.f32.mrb[0].mxu0
  %v553 = vadd.f32 0.0, %v552
  %v554 = vpop.f32.mrb[0].mxu0
  %555 = vdwg.mxu0
  %v556 = vadd.f32 %v480, %v553
  %v557 = vsub.f32 0.0, %v556
  %v558 = vmul.f32 %v557, 1.442695
  %v559 = vpow.pop %v558
  %v560 = vadd.f32 %v559, 1.0
  %v561 = vrcp.pop %v560
  %v562 = vadd.f32 %v553, %v233
  %564 = vrot.lane.b32.xlu0 %v562, 64
  %v565 = vpop.permute.xlu0 %564
  %v567 = vmul.f32 %v561, %v565
  %569 = vrot.lane.b32.xlu0 %v567, 64
  %v570 = vpop.permute.xlu0 %569
  %v572 = vadd.f32 %v480, %v570
  %v573 = vtanh.pop %v572
  %v574 = vsub.f32 1.0, %v561
  %576 = vrot.lane.b32.xlu0 %v573, 96
  %v577 = vpop.permute.xlu0 %576
  %v579 = vmul.f32 %v574, %v577
  %v580 = vmul.f32 %v561, %v472
  %v581 = vadd.f32 %v579, %v580
  %vm582 = vcmp.eq.s32.totalorder %v145, 3
  %v583 = vsel %vm582, 1, 0
  %584 = vset.pattern.permute.xlu0 0
  %585 = vperm.xlu0 %584, %v583
  %v586 = vpop.permute.xlu0 %585
  %vm587 = vcmp.eq.s32.totalorder %v586, 1
  %v588 = vsel %vm587, %v581, %v479
  %v589 = vld [vmem:[#allocation2 + $0x18] sm:$0x3f]
  %591 = vrot.lane.b32.xlu0 %v581, 96
  %v592 = vpop.permute.xlu0 %591
  %v593 = vsel %vm147, %v592, 0
  %595 = vmatprep.subr.mxu0 0.0
  %596 = vmatpush1.msra.mxu0 %v140
  %597 = vmatprep.subr.mxu0 0.0
  %598 = vmatpush1.msra.mxu0 %v141
  %599 = vmatprep.subr.mxu0 0.0
  %600 = vmatpush1.msra.mxu0 %v142
  %601 = vmatprep.subr.mxu0 0.0
  %602 = vmatpush1.msra.mxu0 %v143
  %603 = vmatprep.subr.mxu0 0.0
  %604 = vmatpush1.msra.mxu0 0.0
  %605 = vmatprep.subr.mxu0 0.0
  %606 = vmatpush1.msra.mxu0 0.0
  %607 = vmatprep.subr.mxu0 0.0
  %608 = vmatpush1.msra.mxu0 0.0
  %609 = vmatprep.subr.mxu0 0.0
  %610 = vmatpush1.msra.mxu0 0.0
  %611 = vmatprep.subr.mxu0 0.0
  %612 = vmatpush1.msra.mxu0 0.0
  %613 = vmatprep.subr.mxu0 0.0
  %614 = vmatpush1.msra.mxu0 0.0
  %615 = vmatprep.subr.mxu0 0.0
  %616 = vmatpush1.msra.mxu0 0.0
  %617 = vmatprep.subr.mxu0 0.0
  %618 = vmatpush1.msra.mxu0 0.0
  %619 = vmatprep.subr.mxu0 0.0
  %620 = vmatpush1.msra.mxu0 0.0
  %621 = vmatprep.subr.mxu0 0.0
  %622 = vmatpush1.msra.mxu0 0.0
  %623 = vmatprep.subr.mxu0 0.0
  %624 = vmatpush1.msra.mxu0 0.0
  %625 = vmatprep.subr.mxu0 0.0
  %626 = vmatpush1.msra.mxu0 0.0
  %627 = vmatprep.subr.mxu0 0.0
  %628 = vmatpush1.msra.mxu0 0.0
  %629 = vmatprep.subr.mxu0 0.0
  %630 = vmatpush1.msra.mxu0 0.0
  %631 = vmatprep.subr.mxu0 0.0
  %632 = vmatpush1.msra.mxu0 0.0
  %633 = vmatprep.subr.mxu0 0.0
  %634 = vmatpush1.msra.mxu0 0.0
  %635 = vmatprep.subr.mxu0 0.0
  %636 = vmatpush1.msra.mxu0 0.0
  %637 = vmatprep.subr.mxu0 0.0
  %638 = vmatpush1.msra.mxu0 0.0
  %639 = vmatprep.subr.mxu0 0.0
  %640 = vmatpush1.msra.mxu0 0.0
  %641 = vmatprep.subr.mxu0 0.0
  %642 = vmatpush1.msra.mxu0 0.0
  %643 = vmatprep.subr.mxu0 0.0
  %644 = vmatpush1.msra.mxu0 0.0
  %645 = vmatprep.subr.mxu0 0.0
  %646 = vmatpush1.msra.mxu0 0.0
  %647 = vmatprep.subr.mxu0 0.0
  %648 = vmatpush1.msra.mxu0 0.0
  %649 = vmatprep.subr.mxu0 0.0
  %650 = vmatpush1.msra.mxu0 0.0
  %651 = vmatprep.subr.mxu0 0.0
  %652 = vmatpush1.msra.mxu0 0.0
  %653 = vmatprep.subr.mxu0 0.0
  %654 = vmatpush1.msra.mxu0 0.0
  %655 = vmatprep.subr.mxu0 0.0
  %656 = vmatpush1.msra.mxu0 0.0
  %657 = vmatprep.subr.mxu0 0.0
  %658 = vmatpush1.msra.mxu0 0.0
  %659 = vmatprep.mubr.f32.mxu0 0.0
  %660 = vmatmul.mubr.f32.gmra.mrb[0].mxu0 %v593
  %v661 = vpop.f32.mrb[0].mxu0
  %v662 = vadd.f32 0.0, %v661
  %v663 = vpop.f32.mrb[0].mxu0
  %664 = vdwg.mxu0
  %v665 = vadd.f32 %v589, %v662
  %v666 = vsub.f32 0.0, %v665
  %v667 = vmul.f32 %v666, 1.442695
  %v668 = vpow.pop %v667
  %v669 = vadd.f32 %v668, 1.0
  %v670 = vrcp.pop %v669
  %v671 = vadd.f32 %v662, %v233
  %673 = vrot.lane.b32.xlu0 %v671, 64
  %v674 = vpop.permute.xlu0 %673
  %v676 = vmul.f32 %v670, %v674
  %678 = vrot.lane.b32.xlu0 %v676, 64
  %v679 = vpop.permute.xlu0 %678
  %v681 = vadd.f32 %v589, %v679
  %v682 = vtanh.pop %v681
  %v683 = vsub.f32 1.0, %v670
  %685 = vrot.lane.b32.xlu0 %v682, 96
  %v686 = vpop.permute.xlu0 %685
  %v688 = vmul.f32 %v683, %v686
  %v689 = vmul.f32 %v670, %v581
  %v690 = vadd.f32 %v688, %v689
  %vm691 = vcmp.eq.s32.totalorder %v145, 4
  %v692 = vsel %vm691, 1, 0
  %693 = vset.pattern.permute.xlu0 0
  %694 = vperm.xlu0 %693, %v692
  %v695 = vpop.permute.xlu0 %694
  %vm696 = vcmp.eq.s32.totalorder %v695, 1
  %v697 = vsel %vm696, %v690, %v588
  %699 = vrot.lane.b32.xlu0 %v697, 96
  %v700 = vpop.permute.xlu0 %699
  %vm702 = vcmask 259072
  %703 = vst.msk [vmem:[%s6] sm:$0x3f] %vm702, %v700
  // Predicated region
  $region26: #{_lambda_.5} parent=0 // pred_check
    _
  $region27: #{_lambda_.5} parent=0 // pred_check_branch
    %705 = sbr.rel (0) target = $region29
  $region28: #{_lambda_.5} parent=0 // pred_region
    _
  $region29: #{_lambda_.5} parent=0 // pred_fallthru
    _
  // Predicated region
  $region30: #{_lambda_.5} parent=0 // pred_check
    _
  $region31: #{_lambda_.5} parent=0 // pred_check_branch
    %707 = sbr.rel (0) target = $region33
  $region32: #{_lambda_.5} parent=0 // pred_region
    _
  $region33: #{_lambda_.5} parent=0 // pred_fallthru
    _

// kernel: _lambda_.6
$region0: #{_lambda_.6}
  #allocation0 [shape = 'u32[]', space=smem, size = 0x4, offset = 0x4, fixed_abs, tag = 'smem constant byte address 0x4 - core index']
  #allocation1 [shape = 'u32[144,128]{1,0:T(1,128)}', space=vmem, size = 0x12000, scoped, tag = 'internal scratch']
  #allocation2 [shape = 'f32[12,96]{1,0:T(8,128)}', space=vmem, size = 0x2000, scoped, tag = 'scratch operand']
  %s0 = inlined_call_operand.vmem [shape: f32[12,16], index: 0, kind: input, shape index: {}]
  %s1 = inlined_call_operand.vmem [shape: s32[2,1], index: 1, kind: input, shape index: {}]
  %s2 = inlined_call_operand.vmem [shape: f32[16,96], index: 2, kind: input, shape index: {}]
  %s3 = inlined_call_operand.vmem [shape: f32[32,96], index: 3, kind: input, shape index: {}]
  %s4 = inlined_call_operand.vmem [shape: f32[1,96], index: 4, kind: input, shape index: {}]
  %s5 = inlined_call_operand.vmem [shape: f32[1,32], index: 5, kind: input, shape index: {}]
  %s6 = inlined_call_operand.vmem [shape: f32[2,32], index: 6, kind: output, shape index: {}]
  %s7 = sld [smem:[#allocation0]]
  $region34: #{_lambda_.6} parent=0
    _
  %s9 = ssub.s32 1, %s7
  %s10 = scalar_select 0, %s9, %s7
  // Predicated region
  $region2: #{_lambda_.6} parent=0 // pred_check
    _
  $region3: #{_lambda_.6} parent=0 // pred_check_branch
    %12 = sbr.rel (0) target = $region5
  $region4: #{_lambda_.6} parent=0 // pred_region
    _
  $region5: #{_lambda_.6} parent=0 // pred_fallthru
    _
  // Predicated region
  $region6: #{_lambda_.6} parent=0 // pred_check
    _
  $region7: #{_lambda_.6} parent=0 // pred_check_branch
    %14 = sbr.rel (0) target = $region9
  $region8: #{_lambda_.6} parent=0 // pred_region
    _
  $region9: #{_lambda_.6} parent=0 // pred_fallthru
    _
  // Predicated region
  $region10: #{_lambda_.6} parent=0 // pred_check
    _
  $region11: #{_lambda_.6} parent=0 // pred_check_branch
    %16 = sbr.rel (0) target = $region13
  $region12: #{_lambda_.6} parent=0 // pred_region
    _
  $region13: #{_lambda_.6} parent=0 // pred_fallthru
    _
  // Predicated region
  $region14: #{_lambda_.6} parent=0 // pred_check
    _
  $region15: #{_lambda_.6} parent=0 // pred_check_branch
    %18 = sbr.rel (0) target = $region17
  $region16: #{_lambda_.6} parent=0 // pred_region
    _
  $region17: #{_lambda_.6} parent=0 // pred_fallthru
    _
  // Predicated region
  $region18: #{_lambda_.6} parent=0 // pred_check
    _
  $region19: #{_lambda_.6} parent=0 // pred_check_branch
    %20 = sbr.rel (0) target = $region21
  $region20: #{_lambda_.6} parent=0 // pred_region
    _
  $region21: #{_lambda_.6} parent=0 // pred_fallthru
    _
  // Predicated region
  $region22: #{_lambda_.6} parent=0 // pred_check
    _
  $region23: #{_lambda_.6} parent=0 // pred_check_branch
    %22 = sbr.rel (0) target = $region25
  $region24: #{_lambda_.6} parent=0 // pred_region
    _
  $region25: #{_lambda_.6} parent=0 // pred_fallthru
    _
  %v23 = vld [vmem:[%s0] sm:$0xff]
  %v24 = vld [vmem:[%s0 + $0x8] sm:$0xf]
  %v25 = vld [vmem:[%s2] sm:$0xff]
  %v26 = vld [vmem:[%s2 + $0x8] sm:$0xff]
  %v27 = vld [vmem:[%s4] sm:$0x1]
  %v29 = vlaneseq
  %v30 = vshrl.u32 %v29, 7
  %v31 = vsub.s32 0, %v30
  %v32 = vrot.slane %v27, %v31
  %vm34 = vcmask 130048
  %v36 = vsel %vm34, %v23, 0
  %v39 = vsel %vm34, %v24, 0
  %41 = vmatprep.subr.mxu0 0.0
  %42 = vmatpush1.msra.mxu0 %v25
  %43 = vmatprep.subr.mxu0 0.0
  %44 = vmatpush1.msra.mxu0 %v26
  %45 = vmatprep.subr.mxu0 0.0
  %46 = vmatpush1.msra.mxu0 0.0
  %47 = vmatprep.subr.mxu0 0.0
  %48 = vmatpush1.msra.mxu0 0.0
  %49 = vmatprep.subr.mxu0 0.0
  %50 = vmatpush1.msra.mxu0 0.0
  %51 = vmatprep.subr.mxu0 0.0
  %52 = vmatpush1.msra.mxu0 0.0
  %53 = vmatprep.subr.mxu0 0.0
  %54 = vmatpush1.msra.mxu0 0.0
  %55 = vmatprep.subr.mxu0 0.0
  %56 = vmatpush1.msra.mxu0 0.0
  %57 = vmatprep.subr.mxu0 0.0
  %58 = vmatpush1.msra.mxu0 0.0
  %59 = vmatprep.subr.mxu0 0.0
  %60 = vmatpush1.msra.mxu0 0.0
  %61 = vmatprep.subr.mxu0 0.0
  %62 = vmatpush1.msra.mxu0 0.0
  %63 = vmatprep.subr.mxu0 0.0
  %64 = vmatpush1.msra.mxu0 0.0
  %65 = vmatprep.subr.mxu0 0.0
  %66 = vmatpush1.msra.mxu0 0.0
  %67 = vmatprep.subr.mxu0 0.0
  %68 = vmatpush1.msra.mxu0 0.0
  %69 = vmatprep.subr.mxu0 0.0
  %70 = vmatpush1.msra.mxu0 0.0
  %71 = vmatprep.subr.mxu0 0.0
  %72 = vmatpush1.msra.mxu0 0.0
  %73 = vmatprep.subr.mxu0 0.0
  %74 = vmatpush1.msra.mxu0 0.0
  %75 = vmatprep.subr.mxu0 0.0
  %76 = vmatpush1.msra.mxu0 0.0
  %77 = vmatprep.subr.mxu0 0.0
  %78 = vmatpush1.msra.mxu0 0.0
  %79 = vmatprep.subr.mxu0 0.0
  %80 = vmatpush1.msra.mxu0 0.0
  %81 = vmatprep.subr.mxu0 0.0
  %82 = vmatpush1.msra.mxu0 0.0
  %83 = vmatprep.subr.mxu0 0.0
  %84 = vmatpush1.msra.mxu0 0.0
  %85 = vmatprep.subr.mxu0 0.0
  %86 = vmatpush1.msra.mxu0 0.0
  %87 = vmatprep.subr.mxu0 0.0
  %88 = vmatpush1.msra.mxu0 0.0
  %89 = vmatprep.subr.mxu0 0.0
  %90 = vmatpush1.msra.mxu0 0.0
  %91 = vmatprep.subr.mxu0 0.0
  %92 = vmatpush1.msra.mxu0 0.0
  %93 = vmatprep.subr.mxu0 0.0
  %94 = vmatpush1.msra.mxu0 0.0
  %95 = vmatprep.subr.mxu0 0.0
  %96 = vmatpush1.msra.mxu0 0.0
  %97 = vmatprep.subr.mxu0 0.0
  %98 = vmatpush1.msra.mxu0 0.0
  %99 = vmatprep.subr.mxu0 0.0
  %100 = vmatpush1.msra.mxu0 0.0
  %101 = vmatprep.subr.mxu0 0.0
  %102 = vmatpush1.msra.mxu0 0.0
  %103 = vmatprep.subr.mxu0 0.0
  %104 = vmatpush1.msra.mxu0 0.0
  %105 = vmatprep.mubr.f32.mxu0 0.0
  %106 = vmatmul.mubr.f32.gmra.mrb[0].mxu0 %v36
  %v107 = vpop.f32.mrb[0].mxu0
  %v108 = vadd.f32 %v32, %v107
  %v109 = vpop.f32.mrb[0].mxu0
  %110 = vmatprep.mubr.f32.mxu0 0.0
  %111 = vmatmul.mubr.f32.gmra.mrb[0].mxu0 %v39
  %v112 = vpop.f32.mrb[0].mxu0
  %v113 = vadd.f32 %v32, %v112
  %v114 = vpop.f32.mrb[0].mxu0
  %115 = vdwg.mxu0
  %vm116 = vcmask 785408
  %117 = vst.msk [vmem:[#allocation2] sm:$0xff] %vm116, %v108
  %vm118 = vcmask 781312
  %119 = vst.msk [vmem:[#allocation2 + $0x8] sm:$0xf] %vm118, %v113
  %v120 = vld [vmem:[%s3] sm:$0xff]
  %v121 = vld [vmem:[%s3 + $0x8] sm:$0xff]
  %v122 = vld [vmem:[%s3 + $0x10] sm:$0xff]
  %v123 = vld [vmem:[%s3 + $0x18] sm:$0xff]
  %v124 = vld [vmem:[%s5] sm:$0x1]
  %v125 = vld [vmem:[%s1] sm:$0x3]
  %v126 = vld [vmem:[#allocation2] sm:$0x3]
  %vm127 = vcmask 261120
  %v129 = vsel %vm127, 0.0, 0
  %131 = vmatprep.subr.mxu0 0.0
  %132 = vmatpush1.msra.mxu0 %v120
  %133 = vmatprep.subr.mxu0 0.0
  %134 = vmatpush1.msra.mxu0 %v121
  %135 = vmatprep.subr.mxu0 0.0
  %136 = vmatpush1.msra.mxu0 %v122
  %137 = vmatprep.subr.mxu0 0.0
  %138 = vmatpush1.msra.mxu0 %v123
  %139 = vmatprep.subr.mxu0 0.0
  %140 = vmatpush1.msra.mxu0 0.0
  %141 = vmatprep.subr.mxu0 0.0
  %142 = vmatpush1.msra.mxu0 0.0
  %143 = vmatprep.subr.mxu0 0.0
  %144 = vmatpush1.msra.mxu0 0.0
  %145 = vmatprep.subr.mxu0 0.0
  %146 = vmatpush1.msra.mxu0 0.0
  %147 = vmatprep.subr.mxu0 0.0
  %148 = vmatpush1.msra.mxu0 0.0
  %149 = vmatprep.subr.mxu0 0.0
  %150 = vmatpush1.msra.mxu0 0.0
  %151 = vmatprep.subr.mxu0 0.0
  %152 = vmatpush1.msra.mxu0 0.0
  %153 = vmatprep.subr.mxu0 0.0
  %154 = vmatpush1.msra.mxu0 0.0
  %155 = vmatprep.subr.mxu0 0.0
  %156 = vmatpush1.msra.mxu0 0.0
  %157 = vmatprep.subr.mxu0 0.0
  %158 = vmatpush1.msra.mxu0 0.0
  %159 = vmatprep.subr.mxu0 0.0
  %160 = vmatpush1.msra.mxu0 0.0
  %161 = vmatprep.subr.mxu0 0.0
  %162 = vmatpush1.msra.mxu0 0.0
  %163 = vmatprep.subr.mxu0 0.0
  %164 = vmatpush1.msra.mxu0 0.0
  %165 = vmatprep.subr.mxu0 0.0
  %166 = vmatpush1.msra.mxu0 0.0
  %167 = vmatprep.subr.mxu0 0.0
  %168 = vmatpush1.msra.mxu0 0.0
  %169 = vmatprep.subr.mxu0 0.0
  %170 = vmatpush1.msra.mxu0 0.0
  %171 = vmatprep.subr.mxu0 0.0
  %172 = vmatpush1.msra.mxu0 0.0
  %173 = vmatprep.subr.mxu0 0.0
  %174 = vmatpush1.msra.mxu0 0.0
  %175 = vmatprep.subr.mxu0 0.0
  %176 = vmatpush1.msra.mxu0 0.0
  %177 = vmatprep.subr.mxu0 0.0
  %178 = vmatpush1.msra.mxu0 0.0
  %179 = vmatprep.subr.mxu0 0.0
  %180 = vmatpush1.msra.mxu0 0.0
  %181 = vmatprep.subr.mxu0 0.0
  %182 = vmatpush1.msra.mxu0 0.0
  %183 = vmatprep.subr.mxu0 0.0
  %184 = vmatpush1.msra.mxu0 0.0
  %185 = vmatprep.subr.mxu0 0.0
  %186 = vmatpush1.msra.mxu0 0.0
  %187 = vmatprep.subr.mxu0 0.0
  %188 = vmatpush1.msra.mxu0 0.0
  %189 = vmatprep.subr.mxu0 0.0
  %190 = vmatpush1.msra.mxu0 0.0
  %191 = vmatprep.subr.mxu0 0.0
  %192 = vmatpush1.msra.mxu0 0.0
  %193 = vmatprep.subr.mxu0 0.0
  %194 = vmatpush1.msra.mxu0 0.0
  %195 = vmatprep.mubr.f32.mxu0 0.0
  %196 = vmatmul.mubr.f32.gmra.mrb[0].mxu0 %v129
  %v197 = vpop.f32.mrb[0].mxu0
  %v198 = vadd.f32 0.0, %v197
  %v199 = vpop.f32.mrb[0].mxu0
  %200 = vdwg.mxu0
  %v201 = vadd.f32 %v126, %v198
  %v202 = vsub.f32 0.0, %v201
  %v203 = vmul.f32 %v202, 1.442695
  %v204 = vpow.pop %v203
  %v205 = vadd.f32 %v204, 1.0
  %v206 = vrcp.pop %v205
  %v208 = vlaneseq
  %v209 = vshrl.u32 %v208, 7
  %v210 = vsub.s32 0, %v209
  %v211 = vrot.slane %v124, %v210
  %212 = vrot.lane.b32.xlu0 %v211, 64
  %v213 = vpop.permute.xlu0 %212
  %v215 = vadd.f32 %v198, %v213
  %217 = vrot.lane.b32.xlu0 %v215, 64
  %v218 = vpop.permute.xlu0 %217
  %v220 = vmul.f32 %v206, %v218
  %222 = vrot.lane.b32.xlu0 %v220, 64
  %v223 = vpop.permute.xlu0 %222
  %v225 = vadd.f32 %v126, %v223
  %v226 = vtanh.pop %v225
  %v227 = vsub.f32 1.0, %v206
  %229 = vrot.lane.b32.xlu0 %v226, 96
  %v230 = vpop.permute.xlu0 %229
  %v232 = vmul.f32 %v227, %v230
  %v233 = vmul.f32 %v206, 0.0
  %v234 = vadd.f32 %v232, %v233
  %vm235 = vcmp.eq.s32.totalorder %v125, 0
  %v236 = vsel %vm235, 1, 0
  %237 = vset.pattern.permute.xlu0 0
  %238 = vperm.xlu0 %237, %v236
  %v239 = vpop.permute.xlu0 %238
  %vm240 = vcmp.eq.s32.totalorder %v239, 1
  %v241 = vsel %vm240, %v234, 0.0
  %v242 = vld [vmem:[#allocation2 + $0x2] sm:$0x3]
  %244 = vrot.lane.b32.xlu0 %v234, 96
  %v245 = vpop.permute.xlu0 %244
  %v246 = vsel %vm127, %v245, 0
  %248 = vmatprep.subr.mxu0 0.0
  %249 = vmatpush1.msra.mxu0 %v120
  %250 = vmatprep.subr.mxu0 0.0
  %251 = vmatpush1.msra.mxu0 %v121
  %252 = vmatprep.subr.mxu0 0.0
  %253 = vmatpush1.msra.mxu0 %v122
  %254 = vmatprep.subr.mxu0 0.0
  %255 = vmatpush1.msra.mxu0 %v123
  %256 = vmatprep.subr.mxu0 0.0
  %257 = vmatpush1.msra.mxu0 0.0
  %258 = vmatprep.subr.mxu0 0.0
  %259 = vmatpush1.msra.mxu0 0.0
  %260 = vmatprep.subr.mxu0 0.0
  %261 = vmatpush1.msra.mxu0 0.0
  %262 = vmatprep.subr.mxu0 0.0
  %263 = vmatpush1.msra.mxu0 0.0
  %264 = vmatprep.subr.mxu0 0.0
  %265 = vmatpush1.msra.mxu0 0.0
  %266 = vmatprep.subr.mxu0 0.0
  %267 = vmatpush1.msra.mxu0 0.0
  %268 = vmatprep.subr.mxu0 0.0
  %269 = vmatpush1.msra.mxu0 0.0
  %270 = vmatprep.subr.mxu0 0.0
  %271 = vmatpush1.msra.mxu0 0.0
  %272 = vmatprep.subr.mxu0 0.0
  %273 = vmatpush1.msra.mxu0 0.0
  %274 = vmatprep.subr.mxu0 0.0
  %275 = vmatpush1.msra.mxu0 0.0
  %276 = vmatprep.subr.mxu0 0.0
  %277 = vmatpush1.msra.mxu0 0.0
  %278 = vmatprep.subr.mxu0 0.0
  %279 = vmatpush1.msra.mxu0 0.0
  %280 = vmatprep.subr.mxu0 0.0
  %281 = vmatpush1.msra.mxu0 0.0
  %282 = vmatprep.subr.mxu0 0.0
  %283 = vmatpush1.msra.mxu0 0.0
  %284 = vmatprep.subr.mxu0 0.0
  %285 = vmatpush1.msra.mxu0 0.0
  %286 = vmatprep.subr.mxu0 0.0
  %287 = vmatpush1.msra.mxu0 0.0
  %288 = vmatprep.subr.mxu0 0.0
  %289 = vmatpush1.msra.mxu0 0.0
  %290 = vmatprep.subr.mxu0 0.0
  %291 = vmatpush1.msra.mxu0 0.0
  %292 = vmatprep.subr.mxu0 0.0
  %293 = vmatpush1.msra.mxu0 0.0
  %294 = vmatprep.subr.mxu0 0.0
  %295 = vmatpush1.msra.mxu0 0.0
  %296 = vmatprep.subr.mxu0 0.0
  %297 = vmatpush1.msra.mxu0 0.0
  %298 = vmatprep.subr.mxu0 0.0
  %299 = vmatpush1.msra.mxu0 0.0
  %300 = vmatprep.subr.mxu0 0.0
  %301 = vmatpush1.msra.mxu0 0.0
  %302 = vmatprep.subr.mxu0 0.0
  %303 = vmatpush1.msra.mxu0 0.0
  %304 = vmatprep.subr.mxu0 0.0
  %305 = vmatpush1.msra.mxu0 0.0
  %306 = vmatprep.subr.mxu0 0.0
  %307 = vmatpush1.msra.mxu0 0.0
  %308 = vmatprep.subr.mxu0 0.0
  %309 = vmatpush1.msra.mxu0 0.0
  %310 = vmatprep.subr.mxu0 0.0
  %311 = vmatpush1.msra.mxu0 0.0
  %312 = vmatprep.mubr.f32.mxu0 0.0
  %313 = vmatmul.mubr.f32.gmra.mrb[0].mxu0 %v246
  %v314 = vpop.f32.mrb[0].mxu0
  %v315 = vadd.f32 0.0, %v314
  %v316 = vpop.f32.mrb[0].mxu0
  %317 = vdwg.mxu0
  %v318 = vadd.f32 %v242, %v315
  %v319 = vsub.f32 0.0, %v318
  %v320 = vmul.f32 %v319, 1.442695
  %v321 = vpow.pop %v320
  %v322 = vadd.f32 %v321, 1.0
  %v323 = vrcp.pop %v322
  %v324 = vadd.f32 %v315, %v213
  %326 = vrot.lane.b32.xlu0 %v324, 64
  %v327 = vpop.permute.xlu0 %326
  %v329 = vmul.f32 %v323, %v327
  %331 = vrot.lane.b32.xlu0 %v329, 64
  %v332 = vpop.permute.xlu0 %331
  %v334 = vadd.f32 %v242, %v332
  %v335 = vtanh.pop %v334
  %v336 = vsub.f32 1.0, %v323
  %338 = vrot.lane.b32.xlu0 %v335, 96
  %v339 = vpop.permute.xlu0 %338
  %v341 = vmul.f32 %v336, %v339
  %v342 = vmul.f32 %v323, %v234
  %v343 = vadd.f32 %v341, %v342
  %vm344 = vcmp.eq.s32.totalorder %v125, 1
  %v345 = vsel %vm344, 1, 0
  %346 = vset.pattern.permute.xlu0 0
  %347 = vperm.xlu0 %346, %v345
  %v348 = vpop.permute.xlu0 %347
  %vm349 = vcmp.eq.s32.totalorder %v348, 1
  %v350 = vsel %vm349, %v343, %v241
  %v351 = vld [vmem:[#allocation2 + $0x4] sm:$0x3]
  %353 = vrot.lane.b32.xlu0 %v343, 96
  %v354 = vpop.permute.xlu0 %353
  %v355 = vsel %vm127, %v354, 0
  %357 = vmatprep.subr.mxu0 0.0
  %358 = vmatpush1.msra.mxu0 %v120
  %359 = vmatprep.subr.mxu0 0.0
  %360 = vmatpush1.msra.mxu0 %v121
  %361 = vmatprep.subr.mxu0 0.0
  %362 = vmatpush1.msra.mxu0 %v122
  %363 = vmatprep.subr.mxu0 0.0
  %364 = vmatpush1.msra.mxu0 %v123
  %365 = vmatprep.subr.mxu0 0.0
  %366 = vmatpush1.msra.mxu0 0.0
  %367 = vmatprep.subr.mxu0 0.0
  %368 = vmatpush1.msra.mxu0 0.0
  %369 = vmatprep.subr.mxu0 0.0
  %370 = vmatpush1.msra.mxu0 0.0
  %371 = vmatprep.subr.mxu0 0.0
  %372 = vmatpush1.msra.mxu0 0.0
  %373 = vmatprep.subr.mxu0 0.0
  %374 = vmatpush1.msra.mxu0 0.0
  %375 = vmatprep.subr.mxu0 0.0
  %376 = vmatpush1.msra.mxu0 0.0
  %377 = vmatprep.subr.mxu0 0.0
  %378 = vmatpush1.msra.mxu0 0.0
  %379 = vmatprep.subr.mxu0 0.0
  %380 = vmatpush1.msra.mxu0 0.0
  %381 = vmatprep.subr.mxu0 0.0
  %382 = vmatpush1.msra.mxu0 0.0
  %383 = vmatprep.subr.mxu0 0.0
  %384 = vmatpush1.msra.mxu0 0.0
  %385 = vmatprep.subr.mxu0 0.0
  %386 = vmatpush1.msra.mxu0 0.0
  %387 = vmatprep.subr.mxu0 0.0
  %388 = vmatpush1.msra.mxu0 0.0
  %389 = vmatprep.subr.mxu0 0.0
  %390 = vmatpush1.msra.mxu0 0.0
  %391 = vmatprep.subr.mxu0 0.0
  %392 = vmatpush1.msra.mxu0 0.0
  %393 = vmatprep.subr.mxu0 0.0
  %394 = vmatpush1.msra.mxu0 0.0
  %395 = vmatprep.subr.mxu0 0.0
  %396 = vmatpush1.msra.mxu0 0.0
  %397 = vmatprep.subr.mxu0 0.0
  %398 = vmatpush1.msra.mxu0 0.0
  %399 = vmatprep.subr.mxu0 0.0
  %400 = vmatpush1.msra.mxu0 0.0
  %401 = vmatprep.subr.mxu0 0.0
  %402 = vmatpush1.msra.mxu0 0.0
  %403 = vmatprep.subr.mxu0 0.0
  %404 = vmatpush1.msra.mxu0 0.0
  %405 = vmatprep.subr.mxu0 0.0
  %406 = vmatpush1.msra.mxu0 0.0
  %407 = vmatprep.subr.mxu0 0.0
  %408 = vmatpush1.msra.mxu0 0.0
  %409 = vmatprep.subr.mxu0 0.0
  %410 = vmatpush1.msra.mxu0 0.0
  %411 = vmatprep.subr.mxu0 0.0
  %412 = vmatpush1.msra.mxu0 0.0
  %413 = vmatprep.subr.mxu0 0.0
  %414 = vmatpush1.msra.mxu0 0.0
  %415 = vmatprep.subr.mxu0 0.0
  %416 = vmatpush1.msra.mxu0 0.0
  %417 = vmatprep.subr.mxu0 0.0
  %418 = vmatpush1.msra.mxu0 0.0
  %419 = vmatprep.subr.mxu0 0.0
  %420 = vmatpush1.msra.mxu0 0.0
  %421 = vmatprep.mubr.f32.mxu0 0.0
  %422 = vmatmul.mubr.f32.gmra.mrb[0].mxu0 %v355
  %v423 = vpop.f32.mrb[0].mxu0
  %v424 = vadd.f32 0.0, %v423
  %v425 = vpop.f32.mrb[0].mxu0
  %426 = vdwg.mxu0
  %v427 = vadd.f32 %v351, %v424
  %v428 = vsub.f32 0.0, %v427
  %v429 = vmul.f32 %v428, 1.442695
  %v430 = vpow.pop %v429
  %v431 = vadd.f32 %v430, 1.0
  %v432 = vrcp.pop %v431
  %v433 = vadd.f32 %v424, %v213
  %435 = vrot.lane.b32.xlu0 %v433, 64
  %v436 = vpop.permute.xlu0 %435
  %v438 = vmul.f32 %v432, %v436
  %440 = vrot.lane.b32.xlu0 %v438, 64
  %v441 = vpop.permute.xlu0 %440
  %v443 = vadd.f32 %v351, %v441
  %v444 = vtanh.pop %v443
  %v445 = vsub.f32 1.0, %v432
  %447 = vrot.lane.b32.xlu0 %v444, 96
  %v448 = vpop.permute.xlu0 %447
  %v450 = vmul.f32 %v445, %v448
  %v451 = vmul.f32 %v432, %v343
  %v452 = vadd.f32 %v450, %v451
  %vm453 = vcmp.eq.s32.totalorder %v125, 2
  %v454 = vsel %vm453, 1, 0
  %455 = vset.pattern.permute.xlu0 0
  %456 = vperm.xlu0 %455, %v454
  %v457 = vpop.permute.xlu0 %456
  %vm458 = vcmp.eq.s32.totalorder %v457, 1
  %v459 = vsel %vm458, %v452, %v350
  %v460 = vld [vmem:[#allocation2 + $0x6] sm:$0x3]
  %462 = vrot.lane.b32.xlu0 %v452, 96
  %v463 = vpop.permute.xlu0 %462
  %v464 = vsel %vm127, %v463, 0
  %466 = vmatprep.subr.mxu0 0.0
  %467 = vmatpush1.msra.mxu0 %v120
  %468 = vmatprep.subr.mxu0 0.0
  %469 = vmatpush1.msra.mxu0 %v121
  %470 = vmatprep.subr.mxu0 0.0
  %471 = vmatpush1.msra.mxu0 %v122
  %472 = vmatprep.subr.mxu0 0.0
  %473 = vmatpush1.msra.mxu0 %v123
  %474 = vmatprep.subr.mxu0 0.0
  %475 = vmatpush1.msra.mxu0 0.0
  %476 = vmatprep.subr.mxu0 0.0
  %477 = vmatpush1.msra.mxu0 0.0
  %478 = vmatprep.subr.mxu0 0.0
  %479 = vmatpush1.msra.mxu0 0.0
  %480 = vmatprep.subr.mxu0 0.0
  %481 = vmatpush1.msra.mxu0 0.0
  %482 = vmatprep.subr.mxu0 0.0
  %483 = vmatpush1.msra.mxu0 0.0
  %484 = vmatprep.subr.mxu0 0.0
  %485 = vmatpush1.msra.mxu0 0.0
  %486 = vmatprep.subr.mxu0 0.0
  %487 = vmatpush1.msra.mxu0 0.0
  %488 = vmatprep.subr.mxu0 0.0
  %489 = vmatpush1.msra.mxu0 0.0
  %490 = vmatprep.subr.mxu0 0.0
  %491 = vmatpush1.msra.mxu0 0.0
  %492 = vmatprep.subr.mxu0 0.0
  %493 = vmatpush1.msra.mxu0 0.0
  %494 = vmatprep.subr.mxu0 0.0
  %495 = vmatpush1.msra.mxu0 0.0
  %496 = vmatprep.subr.mxu0 0.0
  %497 = vmatpush1.msra.mxu0 0.0
  %498 = vmatprep.subr.mxu0 0.0
  %499 = vmatpush1.msra.mxu0 0.0
  %500 = vmatprep.subr.mxu0 0.0
  %501 = vmatpush1.msra.mxu0 0.0
  %502 = vmatprep.subr.mxu0 0.0
  %503 = vmatpush1.msra.mxu0 0.0
  %504 = vmatprep.subr.mxu0 0.0
  %505 = vmatpush1.msra.mxu0 0.0
  %506 = vmatprep.subr.mxu0 0.0
  %507 = vmatpush1.msra.mxu0 0.0
  %508 = vmatprep.subr.mxu0 0.0
  %509 = vmatpush1.msra.mxu0 0.0
  %510 = vmatprep.subr.mxu0 0.0
  %511 = vmatpush1.msra.mxu0 0.0
  %512 = vmatprep.subr.mxu0 0.0
  %513 = vmatpush1.msra.mxu0 0.0
  %514 = vmatprep.subr.mxu0 0.0
  %515 = vmatpush1.msra.mxu0 0.0
  %516 = vmatprep.subr.mxu0 0.0
  %517 = vmatpush1.msra.mxu0 0.0
  %518 = vmatprep.subr.mxu0 0.0
  %519 = vmatpush1.msra.mxu0 0.0
  %520 = vmatprep.subr.mxu0 0.0
  %521 = vmatpush1.msra.mxu0 0.0
  %522 = vmatprep.subr.mxu0 0.0
  %523 = vmatpush1.msra.mxu0 0.0
  %524 = vmatprep.subr.mxu0 0.0
  %525 = vmatpush1.msra.mxu0 0.0
  %526 = vmatprep.subr.mxu0 0.0
  %527 = vmatpush1.msra.mxu0 0.0
  %528 = vmatprep.subr.mxu0 0.0
  %529 = vmatpush1.msra.mxu0 0.0
  %530 = vmatprep.mubr.f32.mxu0 0.0
  %531 = vmatmul.mubr.f32.gmra.mrb[0].mxu0 %v464
  %v532 = vpop.f32.mrb[0].mxu0
  %v533 = vadd.f32 0.0, %v532
  %v534 = vpop.f32.mrb[0].mxu0
  %535 = vdwg.mxu0
  %v536 = vadd.f32 %v460, %v533
  %v537 = vsub.f32 0.0, %v536
  %v538 = vmul.f32 %v537, 1.442695
  %v539 = vpow.pop %v538
  %v540 = vadd.f32 %v539, 1.0
  %v541 = vrcp.pop %v540
  %v542 = vadd.f32 %v533, %v213
  %544 = vrot.lane.b32.xlu0 %v542, 64
  %v545 = vpop.permute.xlu0 %544
  %v547 = vmul.f32 %v541, %v545
  %549 = vrot.lane.b32.xlu0 %v547, 64
  %v550 = vpop.permute.xlu0 %549
  %v552 = vadd.f32 %v460, %v550
  %v553 = vtanh.pop %v552
  %v554 = vsub.f32 1.0, %v541
  %556 = vrot.lane.b32.xlu0 %v553, 96
  %v557 = vpop.permute.xlu0 %556
  %v559 = vmul.f32 %v554, %v557
  %v560 = vmul.f32 %v541, %v452
  %v561 = vadd.f32 %v559, %v560
  %vm562 = vcmp.eq.s32.totalorder %v125, 3
  %v563 = vsel %vm562, 1, 0
  %564 = vset.pattern.permute.xlu0 0
  %565 = vperm.xlu0 %564, %v563
  %v566 = vpop.permute.xlu0 %565
  %vm567 = vcmp.eq.s32.totalorder %v566, 1
  %v568 = vsel %vm567, %v561, %v459
  %v569 = vld [vmem:[#allocation2 + $0x8] sm:$0x3]
  %571 = vrot.lane.b32.xlu0 %v561, 96
  %v572 = vpop.permute.xlu0 %571
  %v573 = vsel %vm127, %v572, 0
  %575 = vmatprep.subr.mxu0 0.0
  %576 = vmatpush1.msra.mxu0 %v120
  %577 = vmatprep.subr.mxu0 0.0
  %578 = vmatpush1.msra.mxu0 %v121
  %579 = vmatprep.subr.mxu0 0.0
  %580 = vmatpush1.msra.mxu0 %v122
  %581 = vmatprep.subr.mxu0 0.0
  %582 = vmatpush1.msra.mxu0 %v123
  %583 = vmatprep.subr.mxu0 0.0
  %584 = vmatpush1.msra.mxu0 0.0
  %585 = vmatprep.subr.mxu0 0.0
  %586 = vmatpush1.msra.mxu0 0.0
  %587 = vmatprep.subr.mxu0 0.0
  %588 = vmatpush1.msra.mxu0 0.0
  %589 = vmatprep.subr.mxu0 0.0
  %590 = vmatpush1.msra.mxu0 0.0
  %591 = vmatprep.subr.mxu0 0.0
  %592 = vmatpush1.msra.mxu0 0.0
  %593 = vmatprep.subr.mxu0 0.0
  %594 = vmatpush1.msra.mxu0 0.0
  %595 = vmatprep.subr.mxu0 0.0
  %596 = vmatpush1.msra.mxu0 0.0
  %597 = vmatprep.subr.mxu0 0.0
  %598 = vmatpush1.msra.mxu0 0.0
  %599 = vmatprep.subr.mxu0 0.0
  %600 = vmatpush1.msra.mxu0 0.0
  %601 = vmatprep.subr.mxu0 0.0
  %602 = vmatpush1.msra.mxu0 0.0
  %603 = vmatprep.subr.mxu0 0.0
  %604 = vmatpush1.msra.mxu0 0.0
  %605 = vmatprep.subr.mxu0 0.0
  %606 = vmatpush1.msra.mxu0 0.0
  %607 = vmatprep.subr.mxu0 0.0
  %608 = vmatpush1.msra.mxu0 0.0
  %609 = vmatprep.subr.mxu0 0.0
  %610 = vmatpush1.msra.mxu0 0.0
  %611 = vmatprep.subr.mxu0 0.0
  %612 = vmatpush1.msra.mxu0 0.0
  %613 = vmatprep.subr.mxu0 0.0
  %614 = vmatpush1.msra.mxu0 0.0
  %615 = vmatprep.subr.mxu0 0.0
  %616 = vmatpush1.msra.mxu0 0.0
  %617 = vmatprep.subr.mxu0 0.0
  %618 = vmatpush1.msra.mxu0 0.0
  %619 = vmatprep.subr.mxu0 0.0
  %620 = vmatpush1.msra.mxu0 0.0
  %621 = vmatprep.subr.mxu0 0.0
  %622 = vmatpush1.msra.mxu0 0.0
  %623 = vmatprep.subr.mxu0 0.0
  %624 = vmatpush1.msra.mxu0 0.0
  %625 = vmatprep.subr.mxu0 0.0
  %626 = vmatpush1.msra.mxu0 0.0
  %627 = vmatprep.subr.mxu0 0.0
  %628 = vmatpush1.msra.mxu0 0.0
  %629 = vmatprep.subr.mxu0 0.0
  %630 = vmatpush1.msra.mxu0 0.0
  %631 = vmatprep.subr.mxu0 0.0
  %632 = vmatpush1.msra.mxu0 0.0
  %633 = vmatprep.subr.mxu0 0.0
  %634 = vmatpush1.msra.mxu0 0.0
  %635 = vmatprep.subr.mxu0 0.0
  %636 = vmatpush1.msra.mxu0 0.0
  %637 = vmatprep.subr.mxu0 0.0
  %638 = vmatpush1.msra.mxu0 0.0
  %639 = vmatprep.mubr.f32.mxu0 0.0
  %640 = vmatmul.mubr.f32.gmra.mrb[0].mxu0 %v573
  %v641 = vpop.f32.mrb[0].mxu0
  %v642 = vadd.f32 0.0, %v641
  %v643 = vpop.f32.mrb[0].mxu0
  %644 = vdwg.mxu0
  %v645 = vadd.f32 %v569, %v642
  %v646 = vsub.f32 0.0, %v645
  %v647 = vmul.f32 %v646, 1.442695
  %v648 = vpow.pop %v647
  %v649 = vadd.f32 %v648, 1.0
  %v650 = vrcp.pop %v649
  %v651 = vadd.f32 %v642, %v213
  %653 = vrot.lane.b32.xlu0 %v651, 64
  %v654 = vpop.permute.xlu0 %653
  %v656 = vmul.f32 %v650, %v654
  %658 = vrot.lane.b32.xlu0 %v656, 64
  %v659 = vpop.permute.xlu0 %658
  %v661 = vadd.f32 %v569, %v659
  %v662 = vtanh.pop %v661
  %v663 = vsub.f32 1.0, %v650
  %665 = vrot.lane.b32.xlu0 %v662, 96
  %v666 = vpop.permute.xlu0 %665
  %v668 = vmul.f32 %v663, %v666
  %v669 = vmul.f32 %v650, %v561
  %v670 = vadd.f32 %v668, %v669
  %vm671 = vcmp.eq.s32.totalorder %v125, 4
  %v672 = vsel %vm671, 1, 0
  %673 = vset.pattern.permute.xlu0 0
  %674 = vperm.xlu0 %673, %v672
  %v675 = vpop.permute.xlu0 %674
  %vm676 = vcmp.eq.s32.totalorder %v675, 1
  %v677 = vsel %vm676, %v670, %v568
  %v678 = vld [vmem:[#allocation2 + $0xa] sm:$0x3]
  %680 = vrot.lane.b32.xlu0 %v670, 96
  %v681 = vpop.permute.xlu0 %680
  %v682 = vsel %vm127, %v681, 0
  %684 = vmatprep.subr.mxu0 0.0
  %685 = vmatpush1.msra.mxu0 %v120
  %686 = vmatprep.subr.mxu0 0.0
  %687 = vmatpush1.msra.mxu0 %v121
  %688 = vmatprep.subr.mxu0 0.0
  %689 = vmatpush1.msra.mxu0 %v122
  %690 = vmatprep.subr.mxu0 0.0
  %691 = vmatpush1.msra.mxu0 %v123
  %692 = vmatprep.subr.mxu0 0.0
  %693 = vmatpush1.msra.mxu0 0.0
  %694 = vmatprep.subr.mxu0 0.0
  %695 = vmatpush1.msra.mxu0 0.0
  %696 = vmatprep.subr.mxu0 0.0
  %697 = vmatpush1.msra.mxu0 0.0
  %698 = vmatprep.subr.mxu0 0.0
  %699 = vmatpush1.msra.mxu0 0.0
  %700 = vmatprep.subr.mxu0 0.0
  %701 = vmatpush1.msra.mxu0 0.0
  %702 = vmatprep.subr.mxu0 0.0
  %703 = vmatpush1.msra.mxu0 0.0
  %704 = vmatprep.subr.mxu0 0.0
  %705 = vmatpush1.msra.mxu0 0.0
  %706 = vmatprep.subr.mxu0 0.0
  %707 = vmatpush1.msra.mxu0 0.0
  %708 = vmatprep.subr.mxu0 0.0
  %709 = vmatpush1.msra.mxu0 0.0
  %710 = vmatprep.subr.mxu0 0.0
  %711 = vmatpush1.msra.mxu0 0.0
  %712 = vmatprep.subr.mxu0 0.0
  %713 = vmatpush1.msra.mxu0 0.0
  %714 = vmatprep.subr.mxu0 0.0
  %715 = vmatpush1.msra.mxu0 0.0
  %716 = vmatprep.subr.mxu0 0.0
  %717 = vmatpush1.msra.mxu0 0.0
  %718 = vmatprep.subr.mxu0 0.0
  %719 = vmatpush1.msra.mxu0 0.0
  %720 = vmatprep.subr.mxu0 0.0
  %721 = vmatpush1.msra.mxu0 0.0
  %722 = vmatprep.subr.mxu0 0.0
  %723 = vmatpush1.msra.mxu0 0.0
  %724 = vmatprep.subr.mxu0 0.0
  %725 = vmatpush1.msra.mxu0 0.0
  %726 = vmatprep.subr.mxu0 0.0
  %727 = vmatpush1.msra.mxu0 0.0
  %728 = vmatprep.subr.mxu0 0.0
  %729 = vmatpush1.msra.mxu0 0.0
  %730 = vmatprep.subr.mxu0 0.0
  %731 = vmatpush1.msra.mxu0 0.0
  %732 = vmatprep.subr.mxu0 0.0
  %733 = vmatpush1.msra.mxu0 0.0
  %734 = vmatprep.subr.mxu0 0.0
  %735 = vmatpush1.msra.mxu0 0.0
  %736 = vmatprep.subr.mxu0 0.0
  %737 = vmatpush1.msra.mxu0 0.0
  %738 = vmatprep.subr.mxu0 0.0
  %739 = vmatpush1.msra.mxu0 0.0
  %740 = vmatprep.subr.mxu0 0.0
  %741 = vmatpush1.msra.mxu0 0.0
  %742 = vmatprep.subr.mxu0 0.0
  %743 = vmatpush1.msra.mxu0 0.0
  %744 = vmatprep.subr.mxu0 0.0
  %745 = vmatpush1.msra.mxu0 0.0
  %746 = vmatprep.subr.mxu0 0.0
  %747 = vmatpush1.msra.mxu0 0.0
  %748 = vmatprep.mubr.f32.mxu0 0.0
  %749 = vmatmul.mubr.f32.gmra.mrb[0].mxu0 %v682
  %v750 = vpop.f32.mrb[0].mxu0
  %v751 = vadd.f32 0.0, %v750
  %v752 = vpop.f32.mrb[0].mxu0
  %753 = vdwg.mxu0
  %v754 = vadd.f32 %v678, %v751
  %v755 = vsub.f32 0.0, %v754
  %v756 = vmul.f32 %v755, 1.442695
  %v757 = vpow.pop %v756
  %v758 = vadd.f32 %v757, 1.0
  %v759 = vrcp.pop %v758
  %v760 = vadd.f32 %v751, %v213
  %762 = vrot.lane.b32.xlu0 %v760, 64
  %v763 = vpop.permute.xlu0 %762
  %v765 = vmul.f32 %v759, %v763
  %767 = vrot.lane.b32.xlu0 %v765, 64
  %v768 = vpop.permute.xlu0 %767
  %v770 = vadd.f32 %v678, %v768
  %v771 = vtanh.pop %v770
  %v772 = vsub.f32 1.0, %v759
  %774 = vrot.lane.b32.xlu0 %v771, 96
  %v775 = vpop.permute.xlu0 %774
  %v777 = vmul.f32 %v772, %v775
  %v778 = vmul.f32 %v759, %v670
  %v779 = vadd.f32 %v777, %v778
  %vm780 = vcmp.eq.s32.totalorder %v125, 5
  %v781 = vsel %vm780, 1, 0
  %782 = vset.pattern.permute.xlu0 0
  %783 = vperm.xlu0 %782, %v781
  %v784 = vpop.permute.xlu0 %783
  %vm785 = vcmp.eq.s32.totalorder %v784, 1
  %v786 = vsel %vm785, %v779, %v677
  %788 = vrot.lane.b32.xlu0 %v786, 96
  %v789 = vpop.permute.xlu0 %788
  %vm791 = vcmask 254976
  %792 = vst.msk [vmem:[%s6] sm:$0x3] %vm791, %v789
  // Predicated region
  $region26: #{_lambda_.6} parent=0 // pred_check
    _
  $region27: #{_lambda_.6} parent=0 // pred_check_branch
    %794 = sbr.rel (0) target = $region29
  $region28: #{_lambda_.6} parent=0 // pred_region
    _
  $region29: #{_lambda_.6} parent=0 // pred_fallthru
    _
  // Predicated region
  $region30: #{_lambda_.6} parent=0 // pred_check
    _
  $region31: #{_lambda_.6} parent=0 // pred_check_branch
    %796 = sbr.rel (0) target = $region33
  $region32: #{_lambda_.6} parent=0 // pred_region
    _
  $region33: #{_lambda_.6} parent=0 // pred_fallthru
    _

// kernel: _lambda_.7
$region0: #{_lambda_.7}
  #allocation0 [shape = 'u32[]', space=smem, size = 0x4, offset = 0x4, fixed_abs, tag = 'smem constant byte address 0x4 - core index']
  #allocation1 [shape = 'u32[144,128]{1,0:T(1,128)}', space=vmem, size = 0x12000, scoped, tag = 'internal scratch']
  #allocation2 [shape = 'f32[6,96]{1,0:T(8,128)}', space=vmem, size = 0x1000, scoped, tag = 'scratch operand']
  %s0 = inlined_call_operand.vmem [shape: f32[6,32], index: 0, kind: input, shape index: {}]
  %s1 = inlined_call_operand.vmem [shape: f32[2,32], index: 1, kind: input, shape index: {}]
  %s2 = inlined_call_operand.vmem [shape: s32[2,1], index: 2, kind: input, shape index: {}]
  %s3 = inlined_call_operand.vmem [shape: s32[2,1], index: 3, kind: input, shape index: {}]
  %s4 = inlined_call_operand.vmem [shape: f32[32,96], index: 4, kind: input, shape index: {}]
  %s5 = inlined_call_operand.vmem [shape: f32[32,96], index: 5, kind: input, shape index: {}]
  %s6 = inlined_call_operand.vmem [shape: f32[1,96], index: 6, kind: input, shape index: {}]
  %s7 = inlined_call_operand.vmem [shape: f32[1,32], index: 7, kind: input, shape index: {}]
  %s8 = inlined_call_operand.vmem [shape: f32[2,32], index: 8, kind: output, shape index: {0}]
  %s9 = inlined_call_operand.vmem [shape: f32[2,32], index: 9, kind: output, shape index: {1}]
  %10 = xla_tuple %s8, %s9
  %s11 = sld [smem:[#allocation0]]
  $region50: #{_lambda_.7} parent=0
    _
  %s13 = ssub.s32 1, %s11
  %s14 = scalar_select 0, %s13, %s11
  // Predicated region
  $region2: #{_lambda_.7} parent=0 // pred_check
    _
  $region3: #{_lambda_.7} parent=0 // pred_check_branch
    %16 = sbr.rel (0) target = $region5
  $region4: #{_lambda_.7} parent=0 // pred_region
    _
  $region5: #{_lambda_.7} parent=0 // pred_fallthru
    _
  // Predicated region
  $region6: #{_lambda_.7} parent=0 // pred_check
    _
  $region7: #{_lambda_.7} parent=0 // pred_check_branch
    %18 = sbr.rel (0) target = $region9
  $region8: #{_lambda_.7} parent=0 // pred_region
    _
  $region9: #{_lambda_.7} parent=0 // pred_fallthru
    _
  // Predicated region
  $region10: #{_lambda_.7} parent=0 // pred_check
    _
  $region11: #{_lambda_.7} parent=0 // pred_check_branch
    %20 = sbr.rel (0) target = $region13
  $region12: #{_lambda_.7} parent=0 // pred_region
    _
  $region13: #{_lambda_.7} parent=0 // pred_fallthru
    _
  // Predicated region
  $region14: #{_lambda_.7} parent=0 // pred_check
    _
  $region15: #{_lambda_.7} parent=0 // pred_check_branch
    %22 = sbr.rel (0) target = $region17
  $region16: #{_lambda_.7} parent=0 // pred_region
    _
  $region17: #{_lambda_.7} parent=0 // pred_fallthru
    _
  // Predicated region
  $region18: #{_lambda_.7} parent=0 // pred_check
    _
  $region19: #{_lambda_.7} parent=0 // pred_check_branch
    %24 = sbr.rel (0) target = $region21
  $region20: #{_lambda_.7} parent=0 // pred_region
    _
  $region21: #{_lambda_.7} parent=0 // pred_fallthru
    _
  // Predicated region
  $region22: #{_lambda_.7} parent=0 // pred_check
    _
  $region23: #{_lambda_.7} parent=0 // pred_check_branch
    %26 = sbr.rel (0) target = $region25
  $region24: #{_lambda_.7} parent=0 // pred_region
    _
  $region25: #{_lambda_.7} parent=0 // pred_fallthru
    _
  // Predicated region
  $region26: #{_lambda_.7} parent=0 // pred_check
    _
  $region27: #{_lambda_.7} parent=0 // pred_check_branch
    %28 = sbr.rel (0) target = $region29
  $region28: #{_lambda_.7} parent=0 // pred_region
    _
  $region29: #{_lambda_.7} parent=0 // pred_fallthru
    _
  // Predicated region
  $region30: #{_lambda_.7} parent=0 // pred_check
    _
  $region31: #{_lambda_.7} parent=0 // pred_check_branch
    %30 = sbr.rel (0) target = $region33
  $region32: #{_lambda_.7} parent=0 // pred_region
    _
  $region33: #{_lambda_.7} parent=0 // pred_fallthru
    _
  %v31 = vld [vmem:[%s0] sm:$0x3f]
  %v32 = vld [vmem:[%s4] sm:$0xff]
  %v33 = vld [vmem:[%s4 + $0x8] sm:$0xff]
  %v34 = vld [vmem:[%s4 + $0x10] sm:$0xff]
  %v35 = vld [vmem:[%s4 + $0x18] sm:$0xff]
  %v36 = vld [vmem:[%s6] sm:$0x1]
  %v38 = vlaneseq
  %v39 = vshrl.u32 %v38, 7
  %v40 = vsub.s32 0, %v39
  %v41 = vrot.slane %v36, %v40
  %vm43 = vcmask 261120
  %v45 = vsel %vm43, %v31, 0
  %47 = vmatprep.subr.mxu0 0.0
  %48 = vmatpush1.msra.mxu0 %v32
  %49 = vmatprep.subr.mxu0 0.0
  %50 = vmatpush1.msra.mxu0 %v33
  %51 = vmatprep.subr.mxu0 0.0
  %52 = vmatpush1.msra.mxu0 %v34
  %53 = vmatprep.subr.mxu0 0.0
  %54 = vmatpush1.msra.mxu0 %v35
  %55 = vmatprep.subr.mxu0 0.0
  %56 = vmatpush1.msra.mxu0 0.0
  %57 = vmatprep.subr.mxu0 0.0
  %58 = vmatpush1.msra.mxu0 0.0
  %59 = vmatprep.subr.mxu0 0.0
  %60 = vmatpush1.msra.mxu0 0.0
  %61 = vmatprep.subr.mxu0 0.0
  %62 = vmatpush1.msra.mxu0 0.0
  %63 = vmatprep.subr.mxu0 0.0
  %64 = vmatpush1.msra.mxu0 0.0
  %65 = vmatprep.subr.mxu0 0.0
  %66 = vmatpush1.msra.mxu0 0.0
  %67 = vmatprep.subr.mxu0 0.0
  %68 = vmatpush1.msra.mxu0 0.0
  %69 = vmatprep.subr.mxu0 0.0
  %70 = vmatpush1.msra.mxu0 0.0
  %71 = vmatprep.subr.mxu0 0.0
  %72 = vmatpush1.msra.mxu0 0.0
  %73 = vmatprep.subr.mxu0 0.0
  %74 = vmatpush1.msra.mxu0 0.0
  %75 = vmatprep.subr.mxu0 0.0
  %76 = vmatpush1.msra.mxu0 0.0
  %77 = vmatprep.subr.mxu0 0.0
  %78 = vmatpush1.msra.mxu0 0.0
  %79 = vmatprep.subr.mxu0 0.0
  %80 = vmatpush1.msra.mxu0 0.0
  %81 = vmatprep.subr.mxu0 0.0
  %82 = vmatpush1.msra.mxu0 0.0
  %83 = vmatprep.subr.mxu0 0.0
  %84 = vmatpush1.msra.mxu0 0.0
  %85 = vmatprep.subr.mxu0 0.0
  %86 = vmatpush1.msra.mxu0 0.0
  %87 = vmatprep.subr.mxu0 0.0
  %88 = vmatpush1.msra.mxu0 0.0
  %89 = vmatprep.subr.mxu0 0.0
  %90 = vmatpush1.msra.mxu0 0.0
  %91 = vmatprep.subr.mxu0 0.0
  %92 = vmatpush1.msra.mxu0 0.0
  %93 = vmatprep.subr.mxu0 0.0
  %94 = vmatpush1.msra.mxu0 0.0
  %95 = vmatprep.subr.mxu0 0.0
  %96 = vmatpush1.msra.mxu0 0.0
  %97 = vmatprep.subr.mxu0 0.0
  %98 = vmatpush1.msra.mxu0 0.0
  %99 = vmatprep.subr.mxu0 0.0
  %100 = vmatpush1.msra.mxu0 0.0
  %101 = vmatprep.subr.mxu0 0.0
  %102 = vmatpush1.msra.mxu0 0.0
  %103 = vmatprep.subr.mxu0 0.0
  %104 = vmatpush1.msra.mxu0 0.0
  %105 = vmatprep.subr.mxu0 0.0
  %106 = vmatpush1.msra.mxu0 0.0
  %107 = vmatprep.subr.mxu0 0.0
  %108 = vmatpush1.msra.mxu0 0.0
  %109 = vmatprep.subr.mxu0 0.0
  %110 = vmatpush1.msra.mxu0 0.0
  %111 = vmatprep.mubr.f32.mxu0 0.0
  %112 = vmatmul.mubr.f32.gmra.mrb[0].mxu0 %v45
  %v113 = vpop.f32.mrb[0].mxu0
  %v114 = vadd.f32 %v41, %v113
  %v115 = vpop.f32.mrb[0].mxu0
  %116 = vdwg.mxu0
  %vm117 = vcmask 783360
  %118 = vst.msk [vmem:[#allocation2] sm:$0x3f] %vm117, %v114
  %v119 = vld [vmem:[%s5] sm:$0xff]
  %v120 = vld [vmem:[%s5 + $0x8] sm:$0xff]
  %v121 = vld [vmem:[%s5 + $0x10] sm:$0xff]
  %v122 = vld [vmem:[%s5 + $0x18] sm:$0xff]
  %v123 = vld [vmem:[%s7] sm:$0x1]
  %v124 = vld [vmem:[%s2] sm:$0x3]
  %v125 = vld [vmem:[%s3] sm:$0x3]
  %v126 = vld [vmem:[%s1] sm:$0x3]
  %v127 = vld [vmem:[#allocation2] sm:$0x3]
  %v129 = vsel %vm43, %v126, 0
  %131 = vmatprep.subr.mxu0 0.0
  %132 = vmatpush1.msra.mxu0 %v119
  %133 = vmatprep.subr.mxu0 0.0
  %134 = vmatpush1.msra.mxu0 %v120
  %135 = vmatprep.subr.mxu0 0.0
  %136 = vmatpush1.msra.mxu0 %v121
  %137 = vmatprep.subr.mxu0 0.0
  %138 = vmatpush1.msra.mxu0 %v122
  %139 = vmatprep.subr.mxu0 0.0
  %140 = vmatpush1.msra.mxu0 0.0
  %141 = vmatprep.subr.mxu0 0.0
  %142 = vmatpush1.msra.mxu0 0.0
  %143 = vmatprep.subr.mxu0 0.0
  %144 = vmatpush1.msra.mxu0 0.0
  %145 = vmatprep.subr.mxu0 0.0
  %146 = vmatpush1.msra.mxu0 0.0
  %147 = vmatprep.subr.mxu0 0.0
  %148 = vmatpush1.msra.mxu0 0.0
  %149 = vmatprep.subr.mxu0 0.0
  %150 = vmatpush1.msra.mxu0 0.0
  %151 = vmatprep.subr.mxu0 0.0
  %152 = vmatpush1.msra.mxu0 0.0
  %153 = vmatprep.subr.mxu0 0.0
  %154 = vmatpush1.msra.mxu0 0.0
  %155 = vmatprep.subr.mxu0 0.0
  %156 = vmatpush1.msra.mxu0 0.0
  %157 = vmatprep.subr.mxu0 0.0
  %158 = vmatpush1.msra.mxu0 0.0
  %159 = vmatprep.subr.mxu0 0.0
  %160 = vmatpush1.msra.mxu0 0.0
  %161 = vmatprep.subr.mxu0 0.0
  %162 = vmatpush1.msra.mxu0 0.0
  %163 = vmatprep.subr.mxu0 0.0
  %164 = vmatpush1.msra.mxu0 0.0
  %165 = vmatprep.subr.mxu0 0.0
  %166 = vmatpush1.msra.mxu0 0.0
  %167 = vmatprep.subr.mxu0 0.0
  %168 = vmatpush1.msra.mxu0 0.0
  %169 = vmatprep.subr.mxu0 0.0
  %170 = vmatpush1.msra.mxu0 0.0
  %171 = vmatprep.subr.mxu0 0.0
  %172 = vmatpush1.msra.mxu0 0.0
  %173 = vmatprep.subr.mxu0 0.0
  %174 = vmatpush1.msra.mxu0 0.0
  %175 = vmatprep.subr.mxu0 0.0
  %176 = vmatpush1.msra.mxu0 0.0
  %177 = vmatprep.subr.mxu0 0.0
  %178 = vmatpush1.msra.mxu0 0.0
  %179 = vmatprep.subr.mxu0 0.0
  %180 = vmatpush1.msra.mxu0 0.0
  %181 = vmatprep.subr.mxu0 0.0
  %182 = vmatpush1.msra.mxu0 0.0
  %183 = vmatprep.subr.mxu0 0.0
  %184 = vmatpush1.msra.mxu0 0.0
  %185 = vmatprep.subr.mxu0 0.0
  %186 = vmatpush1.msra.mxu0 0.0
  %187 = vmatprep.subr.mxu0 0.0
  %188 = vmatpush1.msra.mxu0 0.0
  %189 = vmatprep.subr.mxu0 0.0
  %190 = vmatpush1.msra.mxu0 0.0
  %191 = vmatprep.subr.mxu0 0.0
  %192 = vmatpush1.msra.mxu0 0.0
  %193 = vmatprep.subr.mxu0 0.0
  %194 = vmatpush1.msra.mxu0 0.0
  %195 = vmatprep.mubr.f32.mxu0 0.0
  %196 = vmatmul.mubr.f32.gmra.mrb[0].mxu0 %v129
  %v197 = vpop.f32.mrb[0].mxu0
  %v198 = vadd.f32 0.0, %v197
  %v199 = vpop.f32.mrb[0].mxu0
  %200 = vdwg.mxu0
  %v201 = vadd.f32 %v127, %v198
  %v202 = vsub.f32 0.0, %v201
  %v203 = vmul.f32 %v202, 1.442695
  %v204 = vpow.pop %v203
  %v205 = vadd.f32 %v204, 1.0
  %v206 = vrcp.pop %v205
  %v208 = vlaneseq
  %v209 = vshrl.u32 %v208, 7
  %v210 = vsub.s32 0, %v209
  %v211 = vrot.slane %v123, %v210
  %212 = vrot.lane.b32.xlu0 %v211, 64
  %v213 = vpop.permute.xlu0 %212
  %v215 = vadd.f32 %v198, %v213
  %217 = vrot.lane.b32.xlu0 %v215, 64
  %v218 = vpop.permute.xlu0 %217
  %v220 = vmul.f32 %v206, %v218
  %222 = vrot.lane.b32.xlu0 %v220, 64
  %v223 = vpop.permute.xlu0 %222
  %v225 = vadd.f32 %v127, %v223
  %v226 = vtanh.pop %v225
  %v227 = vsub.f32 1.0, %v206
  %229 = vrot.lane.b32.xlu0 %v226, 96
  %v230 = vpop.permute.xlu0 %229
  %v232 = vmul.f32 %v227, %v230
  %233 = vrot.lane.b32.xlu0 %v126, 32
  %v234 = vpop.permute.xlu0 %233
  %v236 = vmul.f32 %v206, %v234
  %v237 = vadd.f32 %v232, %v236
  %vm238 = vcmp.eq.s32.totalorder %v124, 0
  %v239 = vsel %vm238, 1, 0
  %240 = vset.pattern.permute.xlu0 0
  %241 = vperm.xlu0 %240, %v239
  %v242 = vpop.permute.xlu0 %241
  %vm243 = vcmp.eq.s32.totalorder %v242, 1
  %v244 = vsel %vm243, %v237, 0.0
  %vm245 = vcmp.eq.s32.totalorder %v125, 0
  %v246 = vsel %vm245, 1, 0
  %247 = vset.pattern.permute.xlu0 0
  %248 = vperm.xlu0 %247, %v246
  %v249 = vpop.permute.xlu0 %248
  %vm250 = vcmp.eq.s32.totalorder %v249, 1
  %v251 = vsel %vm250, %v237, 0.0
  %v252 = vld [vmem:[#allocation2 + $0x2] sm:$0x3]
  %254 = vrot.lane.b32.xlu0 %v237, 96
  %v255 = vpop.permute.xlu0 %254
  %v256 = vsel %vm43, %v255, 0
  %258 = vmatprep.subr.mxu0 0.0
  %259 = vmatpush1.msra.mxu0 %v119
  %260 = vmatprep.subr.mxu0 0.0
  %261 = vmatpush1.msra.mxu0 %v120
  %262 = vmatprep.subr.mxu0 0.0
  %263 = vmatpush1.msra.mxu0 %v121
  %264 = vmatprep.subr.mxu0 0.0
  %265 = vmatpush1.msra.mxu0 %v122
  %266 = vmatprep.subr.mxu0 0.0
  %267 = vmatpush1.msra.mxu0 0.0
  %268 = vmatprep.subr.mxu0 0.0
  %269 = vmatpush1.msra.mxu0 0.0
  %270 = vmatprep.subr.mxu0 0.0
  %271 = vmatpush1.msra.mxu0 0.0
  %272 = vmatprep.subr.mxu0 0.0
  %273 = vmatpush1.msra.mxu0 0.0
  %274 = vmatprep.subr.mxu0 0.0
  %275 = vmatpush1.msra.mxu0 0.0
  %276 = vmatprep.subr.mxu0 0.0
  %277 = vmatpush1.msra.mxu0 0.0
  %278 = vmatprep.subr.mxu0 0.0
  %279 = vmatpush1.msra.mxu0 0.0
  %280 = vmatprep.subr.mxu0 0.0
  %281 = vmatpush1.msra.mxu0 0.0
  %282 = vmatprep.subr.mxu0 0.0
  %283 = vmatpush1.msra.mxu0 0.0
  %284 = vmatprep.subr.mxu0 0.0
  %285 = vmatpush1.msra.mxu0 0.0
  %286 = vmatprep.subr.mxu0 0.0
  %287 = vmatpush1.msra.mxu0 0.0
  %288 = vmatprep.subr.mxu0 0.0
  %289 = vmatpush1.msra.mxu0 0.0
  %290 = vmatprep.subr.mxu0 0.0
  %291 = vmatpush1.msra.mxu0 0.0
  %292 = vmatprep.subr.mxu0 0.0
  %293 = vmatpush1.msra.mxu0 0.0
  %294 = vmatprep.subr.mxu0 0.0
  %295 = vmatpush1.msra.mxu0 0.0
  %296 = vmatprep.subr.mxu0 0.0
  %297 = vmatpush1.msra.mxu0 0.0
  %298 = vmatprep.subr.mxu0 0.0
  %299 = vmatpush1.msra.mxu0 0.0
  %300 = vmatprep.subr.mxu0 0.0
  %301 = vmatpush1.msra.mxu0 0.0
  %302 = vmatprep.subr.mxu0 0.0
  %303 = vmatpush1.msra.mxu0 0.0
  %304 = vmatprep.subr.mxu0 0.0
  %305 = vmatpush1.msra.mxu0 0.0
  %306 = vmatprep.subr.mxu0 0.0
  %307 = vmatpush1.msra.mxu0 0.0
  %308 = vmatprep.subr.mxu0 0.0
  %309 = vmatpush1.msra.mxu0 0.0
  %310 = vmatprep.subr.mxu0 0.0
  %311 = vmatpush1.msra.mxu0 0.0
  %312 = vmatprep.subr.mxu0 0.0
  %313 = vmatpush1.msra.mxu0 0.0
  %314 = vmatprep.subr.mxu0 0.0
  %315 = vmatpush1.msra.mxu0 0.0
  %316 = vmatprep.subr.mxu0 0.0
  %317 = vmatpush1.msra.mxu0 0.0
  %318 = vmatprep.subr.mxu0 0.0
  %319 = vmatpush1.msra.mxu0 0.0
  %320 = vmatprep.subr.mxu0 0.0
  %321 = vmatpush1.msra.mxu0 0.0
  %322 = vmatprep.mubr.f32.mxu0 0.0
  %323 = vmatmul.mubr.f32.gmra.mrb[0].mxu0 %v256
  %v324 = vpop.f32.mrb[0].mxu0
  %v325 = vadd.f32 0.0, %v324
  %v326 = vpop.f32.mrb[0].mxu0
  %327 = vdwg.mxu0
  %v328 = vadd.f32 %v252, %v325
  %v329 = vsub.f32 0.0, %v328
  %v330 = vmul.f32 %v329, 1.442695
  %v331 = vpow.pop %v330
  %v332 = vadd.f32 %v331, 1.0
  %v333 = vrcp.pop %v332
  %v334 = vadd.f32 %v325, %v213
  %336 = vrot.lane.b32.xlu0 %v334, 64
  %v337 = vpop.permute.xlu0 %336
  %v339 = vmul.f32 %v333, %v337
  %341 = vrot.lane.b32.xlu0 %v339, 64
  %v342 = vpop.permute.xlu0 %341
  %v344 = vadd.f32 %v252, %v342
  %v345 = vtanh.pop %v344
  %v346 = vsub.f32 1.0, %v333
  %348 = vrot.lane.b32.xlu0 %v345, 96
  %v349 = vpop.permute.xlu0 %348
  %v351 = vmul.f32 %v346, %v349
  %v352 = vmul.f32 %v333, %v237
  %v353 = vadd.f32 %v351, %v352
  %vm354 = vcmp.eq.s32.totalorder %v124, 1
  %v355 = vsel %vm354, 1, 0
  %356 = vset.pattern.permute.xlu0 0
  %357 = vperm.xlu0 %356, %v355
  %v358 = vpop.permute.xlu0 %357
  %vm359 = vcmp.eq.s32.totalorder %v358, 1
  %v360 = vsel %vm359, %v353, %v244
  %vm361 = vcmp.eq.s32.totalorder %v125, 1
  %v362 = vsel %vm361, 1, 0
  %363 = vset.pattern.permute.xlu0 0
  %364 = vperm.xlu0 %363, %v362
  %v365 = vpop.permute.xlu0 %364
  %vm366 = vcmp.eq.s32.totalorder %v365, 1
  %v367 = vsel %vm366, %v353, %v251
  %v368 = vld [vmem:[#allocation2 + $0x4] sm:$0x3]
  %370 = vrot.lane.b32.xlu0 %v353, 96
  %v371 = vpop.permute.xlu0 %370
  %v372 = vsel %vm43, %v371, 0
  %374 = vmatprep.subr.mxu0 0.0
  %375 = vmatpush1.msra.mxu0 %v119
  %376 = vmatprep.subr.mxu0 0.0
  %377 = vmatpush1.msra.mxu0 %v120
  %378 = vmatprep.subr.mxu0 0.0
  %379 = vmatpush1.msra.mxu0 %v121
  %380 = vmatprep.subr.mxu0 0.0
  %381 = vmatpush1.msra.mxu0 %v122
  %382 = vmatprep.subr.mxu0 0.0
  %383 = vmatpush1.msra.mxu0 0.0
  %384 = vmatprep.subr.mxu0 0.0
  %385 = vmatpush1.msra.mxu0 0.0
  %386 = vmatprep.subr.mxu0 0.0
  %387 = vmatpush1.msra.mxu0 0.0
  %388 = vmatprep.subr.mxu0 0.0
  %389 = vmatpush1.msra.mxu0 0.0
  %390 = vmatprep.subr.mxu0 0.0
  %391 = vmatpush1.msra.mxu0 0.0
  %392 = vmatprep.subr.mxu0 0.0
  %393 = vmatpush1.msra.mxu0 0.0
  %394 = vmatprep.subr.mxu0 0.0
  %395 = vmatpush1.msra.mxu0 0.0
  %396 = vmatprep.subr.mxu0 0.0
  %397 = vmatpush1.msra.mxu0 0.0
  %398 = vmatprep.subr.mxu0 0.0
  %399 = vmatpush1.msra.mxu0 0.0
  %400 = vmatprep.subr.mxu0 0.0
  %401 = vmatpush1.msra.mxu0 0.0
  %402 = vmatprep.subr.mxu0 0.0
  %403 = vmatpush1.msra.mxu0 0.0
  %404 = vmatprep.subr.mxu0 0.0
  %405 = vmatpush1.msra.mxu0 0.0
  %406 = vmatprep.subr.mxu0 0.0
  %407 = vmatpush1.msra.mxu0 0.0
  %408 = vmatprep.subr.mxu0 0.0
  %409 = vmatpush1.msra.mxu0 0.0
  %410 = vmatprep.subr.mxu0 0.0
  %411 = vmatpush1.msra.mxu0 0.0
  %412 = vmatprep.subr.mxu0 0.0
  %413 = vmatpush1.msra.mxu0 0.0
  %414 = vmatprep.subr.mxu0 0.0
  %415 = vmatpush1.msra.mxu0 0.0
  %416 = vmatprep.subr.mxu0 0.0
  %417 = vmatpush1.msra.mxu0 0.0
  %418 = vmatprep.subr.mxu0 0.0
  %419 = vmatpush1.msra.mxu0 0.0
  %420 = vmatprep.subr.mxu0 0.0
  %421 = vmatpush1.msra.mxu0 0.0
  %422 = vmatprep.subr.mxu0 0.0
  %423 = vmatpush1.msra.mxu0 0.0
  %424 = vmatprep.subr.mxu0 0.0
  %425 = vmatpush1.msra.mxu0 0.0
  %426 = vmatprep.subr.mxu0 0.0
  %427 = vmatpush1.msra.mxu0 0.0
  %428 = vmatprep.subr.mxu0 0.0
  %429 = vmatpush1.msra.mxu0 0.0
  %430 = vmatprep.subr.mxu0 0.0
  %431 = vmatpush1.msra.mxu0 0.0
  %432 = vmatprep.subr.mxu0 0.0
  %433 = vmatpush1.msra.mxu0 0.0
  %434 = vmatprep.subr.mxu0 0.0
  %435 = vmatpush1.msra.mxu0 0.0
  %436 = vmatprep.subr.mxu0 0.0
  %437 = vmatpush1.msra.mxu0 0.0
  %438 = vmatprep.mubr.f32.mxu0 0.0
  %439 = vmatmul.mubr.f32.gmra.mrb[0].mxu0 %v372
  %v440 = vpop.f32.mrb[0].mxu0
  %v441 = vadd.f32 0.0, %v440
  %v442 = vpop.f32.mrb[0].mxu0
  %443 = vdwg.mxu0
  %v444 = vadd.f32 %v368, %v441
  %v445 = vsub.f32 0.0, %v444
  %v446 = vmul.f32 %v445, 1.442695
  %v447 = vpow.pop %v446
  %v448 = vadd.f32 %v447, 1.0
  %v449 = vrcp.pop %v448
  %v450 = vadd.f32 %v441, %v213
  %452 = vrot.lane.b32.xlu0 %v450, 64
  %v453 = vpop.permute.xlu0 %452
  %v455 = vmul.f32 %v449, %v453
  %457 = vrot.lane.b32.xlu0 %v455, 64
  %v458 = vpop.permute.xlu0 %457
  %v460 = vadd.f32 %v368, %v458
  %v461 = vtanh.pop %v460
  %v462 = vsub.f32 1.0, %v449
  %464 = vrot.lane.b32.xlu0 %v461, 96
  %v465 = vpop.permute.xlu0 %464
  %v467 = vmul.f32 %v462, %v465
  %v468 = vmul.f32 %v449, %v353
  %v469 = vadd.f32 %v467, %v468
  %vm470 = vcmp.eq.s32.totalorder %v124, 2
  %v471 = vsel %vm470, 1, 0
  %472 = vset.pattern.permute.xlu0 0
  %473 = vperm.xlu0 %472, %v471
  %v474 = vpop.permute.xlu0 %473
  %vm475 = vcmp.eq.s32.totalorder %v474, 1
  %v476 = vsel %vm475, %v469, %v360
  %vm477 = vcmp.eq.s32.totalorder %v125, 2
  %v478 = vsel %vm477, 1, 0
  %479 = vset.pattern.permute.xlu0 0
  %480 = vperm.xlu0 %479, %v478
  %v481 = vpop.permute.xlu0 %480
  %vm482 = vcmp.eq.s32.totalorder %v481, 1
  %v483 = vsel %vm482, %v469, %v367
  %485 = vrot.lane.b32.xlu0 %v476, 96
  %v486 = vpop.permute.xlu0 %485
  %vm488 = vcmask 254976
  %489 = vst.msk [vmem:[%s8] sm:$0x3] %vm488, %v486
  %491 = vrot.lane.b32.xlu0 %v483, 96
  %v492 = vpop.permute.xlu0 %491
  %494 = vst.msk [vmem:[%s9] sm:$0x3] %vm488, %v492
  // Predicated region
  $region34: #{_lambda_.7} parent=0 // pred_check
    _
  $region35: #{_lambda_.7} parent=0 // pred_check_branch
    %496 = sbr.rel (0) target = $region37
  $region36: #{_lambda_.7} parent=0 // pred_region
    _
  $region37: #{_lambda_.7} parent=0 // pred_fallthru
    _
  // Predicated region
  $region38: #{_lambda_.7} parent=0 // pred_check
    _
  $region39: #{_lambda_.7} parent=0 // pred_check_branch
    %498 = sbr.rel (0) target = $region41
  $region40: #{_lambda_.7} parent=0 // pred_region
    _
  $region41: #{_lambda_.7} parent=0 // pred_fallthru
    _
  // Predicated region
  $region42: #{_lambda_.7} parent=0 // pred_check
    _
  $region43: #{_lambda_.7} parent=0 // pred_check_branch
    %500 = sbr.rel (0) target = $region45
  $region44: #{_lambda_.7} parent=0 // pred_region
    _
  $region45: #{_lambda_.7} parent=0 // pred_fallthru
    _
  // Predicated region
  $region46: #{_lambda_.7} parent=0 // pred_check
    _
  $region47: #{_lambda_.7} parent=0 // pred_check_branch
    %502 = sbr.rel (0) target = $region49
  $region48: #{_lambda_.7} parent=0 // pred_region
    _
  $region49: #{_lambda_.7} parent=0 // pred_fallthru
    _

// kernel: _lambda_.8
$region0: #{_lambda_.8}
  #allocation0 [shape = 'u32[]', space=smem, size = 0x4, offset = 0x4, fixed_abs, tag = 'smem constant byte address 0x4 - core index']
  #allocation1 [shape = 'u32[144,128]{1,0:T(1,128)}', space=vmem, size = 0x12000, scoped, tag = 'internal scratch']
  #allocation2 [shape = 'f32[1,1]{1,0:T(1,128)S(1)}', space=vmem, size = 0x200, scoped, tag = 'scoped memory for _lambda_.8']
  %s0 = inlined_call_operand.vmem [shape: f32[2,32], index: 0, kind: input, shape index: {}]
  %s1 = inlined_call_operand.vmem [shape: f32[2,32], index: 1, kind: input, shape index: {}]
  %s2 = inlined_call_operand.vmem [shape: f32[2,32], index: 2, kind: input, shape index: {}]
  %s3 = inlined_call_operand.vmem [shape: f32[32,64], index: 3, kind: input, shape index: {}]
  %s4 = inlined_call_operand.vmem [shape: f32[1,64], index: 4, kind: input, shape index: {}]
  %s5 = inlined_call_operand.vmem [shape: f32[32,64], index: 5, kind: input, shape index: {}]
  %s6 = inlined_call_operand.vmem [shape: f32[1,64], index: 6, kind: input, shape index: {}]
  %s7 = inlined_call_operand.vmem [shape: f32[32,32], index: 7, kind: input, shape index: {}]
  %s8 = inlined_call_operand.vmem [shape: f32[32,32], index: 8, kind: input, shape index: {}]
  %s9 = inlined_call_operand.vmem [shape: f32[1,32], index: 9, kind: input, shape index: {}]
  %s10 = inlined_call_operand.vmem [shape: f32[32,32], index: 10, kind: input, shape index: {}]
  %s11 = inlined_call_operand.vmem [shape: f32[1,32], index: 11, kind: input, shape index: {}]
  %s12 = inlined_call_operand.vmem [shape: f32[1,32], index: 12, kind: input, shape index: {}]
  %s13 = inlined_call_operand.<no memory space> [shape: f32[1,1], index: 13, kind: input, shape index: {}]
  %s14 = inlined_call_operand.hbm [shape: f32[2,32], index: 14, kind: output, shape index: {0}]
  %s15 = inlined_call_operand.hbm [shape: f32[2,32], index: 15, kind: output, shape index: {1}]
  %s16 = inlined_call_operand.hbm [shape: f32[2,32], index: 16, kind: output, shape index: {2}]
  %s17 = inlined_call_operand.hbm [shape: f32[2,32], index: 17, kind: output, shape index: {3}]
  %s18 = inlined_call_operand.vmem [shape: f32[2,32], index: 18, kind: output, shape index: {4}]
  %s19 = inlined_call_operand.vmem [shape: f32[2,1], index: 19, kind: output, shape index: {5}]
  %20 = xla_tuple %s14, %s15, %s16, %s17, %s18, %s19
  %s21 = sld [smem:[#allocation0]]
  $region106: #{_lambda_.8} parent=0
    _
  %s23 = ssub.s32 1, %s21
  %s24 = scalar_select 0, %s23, %s21
  %v25 = vstv %s13
  %26 = vst [vmem:[#allocation2] sm:$0x1] %v25
  $region1: #{_lambda_.8} parent=0
    #allocation3 [shape = 'u8[1024]{0}', space=vmem, size = 0x400, scoped, tag = 'output window, operand 0, single buffered']
    #allocation4 [shape = 's32[1]{0}', space=sflag, size = 0x4, scoped, tag = 'scoped memory for _lambda_.8']
    #allocation5 [shape = 'u8[1024]{0}', space=vmem, size = 0x400, scoped, tag = 'output window, operand 1, single buffered']
    #allocation6 [shape = 's32[1]{0}', space=sflag, size = 0x4, scoped, tag = 'scoped memory for _lambda_.8']
    #allocation7 [shape = 'u8[1024]{0}', space=vmem, size = 0x400, scoped, tag = 'output window, operand 2, single buffered']
    #allocation8 [shape = 'u8[1024]{0}', space=vmem, size = 0x400, scoped, tag = 'output window, operand 3, single buffered']
    #allocation9 [shape = 's32[1]{0}', space=sflag, size = 0x4, scoped, tag = 'scoped memory for _lambda_.8']
    %27 = vsyncpa [#allocation4], 0
    %28 = vsyncpa [#allocation6], 0
    %29 = vsyncpa [#allocation9], 0
    // Predicated region
    $region2: #{_lambda_.8} parent=1 // pred_check
      _
    $region3: #{_lambda_.8} parent=1 // pred_check_branch
      %31 = sbr.rel (0) target = $region5
    $region4: #{_lambda_.8} parent=1 // pred_region
      _
    $region5: #{_lambda_.8} parent=1 // pred_fallthru
      _
    // Predicated region
    $region6: #{_lambda_.8} parent=1 // pred_check
      _
    $region7: #{_lambda_.8} parent=1 // pred_check_branch
      %33 = sbr.rel (0) target = $region9
    $region8: #{_lambda_.8} parent=1 // pred_region
      _
    $region9: #{_lambda_.8} parent=1 // pred_fallthru
      _
    // Predicated region
    $region10: #{_lambda_.8} parent=1 // pred_check
      _
    $region11: #{_lambda_.8} parent=1 // pred_check_branch
      %35 = sbr.rel (0) target = $region13
    $region12: #{_lambda_.8} parent=1 // pred_region
      _
    $region13: #{_lambda_.8} parent=1 // pred_fallthru
      _
    // Predicated region
    $region14: #{_lambda_.8} parent=1 // pred_check
      _
    $region15: #{_lambda_.8} parent=1 // pred_check_branch
      %37 = sbr.rel (0) target = $region17
    $region16: #{_lambda_.8} parent=1 // pred_region
      _
    $region17: #{_lambda_.8} parent=1 // pred_fallthru
      _
    // Predicated region
    $region18: #{_lambda_.8} parent=1 // pred_check
      _
    $region19: #{_lambda_.8} parent=1 // pred_check_branch
      %39 = sbr.rel (0) target = $region21
    $region20: #{_lambda_.8} parent=1 // pred_region
      _
    $region21: #{_lambda_.8} parent=1 // pred_fallthru
      _
    // Predicated region
    $region22: #{_lambda_.8} parent=1 // pred_check
      _
    $region23: #{_lambda_.8} parent=1 // pred_check_branch
      %41 = sbr.rel (0) target = $region25
    $region24: #{_lambda_.8} parent=1 // pred_region
      _
    $region25: #{_lambda_.8} parent=1 // pred_fallthru
      _
    // Predicated region
    $region26: #{_lambda_.8} parent=1 // pred_check
      _
    $region27: #{_lambda_.8} parent=1 // pred_check_branch
      %43 = sbr.rel (0) target = $region29
    $region28: #{_lambda_.8} parent=1 // pred_region
      _
    $region29: #{_lambda_.8} parent=1 // pred_fallthru
      _
    // Predicated region
    $region30: #{_lambda_.8} parent=1 // pred_check
      _
    $region31: #{_lambda_.8} parent=1 // pred_check_branch
      %45 = sbr.rel (0) target = $region33
    $region32: #{_lambda_.8} parent=1 // pred_region
      _
    $region33: #{_lambda_.8} parent=1 // pred_fallthru
      _
    // Predicated region
    $region34: #{_lambda_.8} parent=1 // pred_check
      _
    $region35: #{_lambda_.8} parent=1 // pred_check_branch
      %47 = sbr.rel (0) target = $region37
    $region36: #{_lambda_.8} parent=1 // pred_region
      _
    $region37: #{_lambda_.8} parent=1 // pred_fallthru
      _
    // Predicated region
    $region38: #{_lambda_.8} parent=1 // pred_check
      _
    $region39: #{_lambda_.8} parent=1 // pred_check_branch
      %49 = sbr.rel (0) target = $region41
    $region40: #{_lambda_.8} parent=1 // pred_region
      _
    $region41: #{_lambda_.8} parent=1 // pred_fallthru
      _
    // Predicated region
    $region42: #{_lambda_.8} parent=1 // pred_check
      _
    $region43: #{_lambda_.8} parent=1 // pred_check_branch
      %51 = sbr.rel (0) target = $region45
    $region44: #{_lambda_.8} parent=1 // pred_region
      _
    $region45: #{_lambda_.8} parent=1 // pred_fallthru
      _
    // Predicated region
    $region46: #{_lambda_.8} parent=1 // pred_check
      _
    $region47: #{_lambda_.8} parent=1 // pred_check_branch
      %53 = sbr.rel (0) target = $region49
    $region48: #{_lambda_.8} parent=1 // pred_region
      _
    $region49: #{_lambda_.8} parent=1 // pred_fallthru
      _
    // Predicated region
    $region50: #{_lambda_.8} parent=1 // pred_check
      _
    $region51: #{_lambda_.8} parent=1 // pred_check_branch
      %55 = sbr.rel (0) target = $region53
    $region52: #{_lambda_.8} parent=1 // pred_region
      _
    $region53: #{_lambda_.8} parent=1 // pred_fallthru
      _
    // Predicated region
    $region54: #{_lambda_.8} parent=1 // pred_check
      _
    $region55: #{_lambda_.8} parent=1 // pred_check_branch
      %57 = sbr.rel (0) target = $region57
    $region56: #{_lambda_.8} parent=1 // pred_region
      _
    $region57: #{_lambda_.8} parent=1 // pred_fallthru
      _
    %v58 = vld [vmem:[%s0] sm:$0x3]
    %v59 = vld [vmem:[%s3] sm:$0xff]
    %v60 = vld [vmem:[%s3 + $0x8] sm:$0xff]
    %v61 = vld [vmem:[%s3 + $0x10] sm:$0xff]
    %v62 = vld [vmem:[%s3 + $0x18] sm:$0xff]
    %v63 = vld [vmem:[%s4] sm:$0x1]
    %v65 = vlaneseq
    %v66 = vshrl.u32 %v65, 7
    %v67 = vsub.s32 0, %v66
    %v68 = vrot.slane %v63, %v67
    %vm70 = vcmask 261120
    %v72 = vsel %vm70, %v58, 0
    %74 = vmatprep.subr.mxu0 0.0
    %75 = vmatpush1.msra.mxu0 %v59
    %76 = vmatprep.subr.mxu0 0.0
    %77 = vmatpush1.msra.mxu0 %v60
    %78 = vmatprep.subr.mxu0 0.0
    %79 = vmatpush1.msra.mxu0 %v61
    %80 = vmatprep.subr.mxu0 0.0
    %81 = vmatpush1.msra.mxu0 %v62
    %82 = vmatprep.subr.mxu0 0.0
    %83 = vmatpush1.msra.mxu0 0.0
    %84 = vmatprep.subr.mxu0 0.0
    %85 = vmatpush1.msra.mxu0 0.0
    %86 = vmatprep.subr.mxu0 0.0
    %87 = vmatpush1.msra.mxu0 0.0
    %88 = vmatprep.subr.mxu0 0.0
    %89 = vmatpush1.msra.mxu0 0.0
    %90 = vmatprep.subr.mxu0 0.0
    %91 = vmatpush1.msra.mxu0 0.0
    %92 = vmatprep.subr.mxu0 0.0
    %93 = vmatpush1.msra.mxu0 0.0
    %94 = vmatprep.subr.mxu0 0.0
    %95 = vmatpush1.msra.mxu0 0.0
    %96 = vmatprep.subr.mxu0 0.0
    %97 = vmatpush1.msra.mxu0 0.0
    %98 = vmatprep.subr.mxu0 0.0
    %99 = vmatpush1.msra.mxu0 0.0
    %100 = vmatprep.subr.mxu0 0.0
    %101 = vmatpush1.msra.mxu0 0.0
    %102 = vmatprep.subr.mxu0 0.0
    %103 = vmatpush1.msra.mxu0 0.0
    %104 = vmatprep.subr.mxu0 0.0
    %105 = vmatpush1.msra.mxu0 0.0
    %106 = vmatprep.subr.mxu0 0.0
    %107 = vmatpush1.msra.mxu0 0.0
    %108 = vmatprep.subr.mxu0 0.0
    %109 = vmatpush1.msra.mxu0 0.0
    %110 = vmatprep.subr.mxu0 0.0
    %111 = vmatpush1.msra.mxu0 0.0
    %112 = vmatprep.subr.mxu0 0.0
    %113 = vmatpush1.msra.mxu0 0.0
    %114 = vmatprep.subr.mxu0 0.0
    %115 = vmatpush1.msra.mxu0 0.0
    %116 = vmatprep.subr.mxu0 0.0
    %117 = vmatpush1.msra.mxu0 0.0
    %118 = vmatprep.subr.mxu0 0.0
    %119 = vmatpush1.msra.mxu0 0.0
    %120 = vmatprep.subr.mxu0 0.0
    %121 = vmatpush1.msra.mxu0 0.0
    %122 = vmatprep.subr.mxu0 0.0
    %123 = vmatpush1.msra.mxu0 0.0
    %124 = vmatprep.subr.mxu0 0.0
    %125 = vmatpush1.msra.mxu0 0.0
    %126 = vmatprep.subr.mxu0 0.0
    %127 = vmatpush1.msra.mxu0 0.0
    %128 = vmatprep.subr.mxu0 0.0
    %129 = vmatpush1.msra.mxu0 0.0
    %130 = vmatprep.subr.mxu0 0.0
    %131 = vmatpush1.msra.mxu0 0.0
    %132 = vmatprep.subr.mxu0 0.0
    %133 = vmatpush1.msra.mxu0 0.0
    %134 = vmatprep.subr.mxu0 0.0
    %135 = vmatpush1.msra.mxu0 0.0
    %136 = vmatprep.subr.mxu0 0.0
    %137 = vmatpush1.msra.mxu0 0.0
    %138 = vmatprep.mubr.f32.mxu0 0.0
    %139 = vmatmul.mubr.f32.gmra.mrb[0].mxu0 %v72
    %v140 = vpop.f32.mrb[0].mxu0
    %v141 = vadd.f32 %v68, %v140
    %v142 = vpop.f32.mrb[0].mxu0
    %143 = vdwg.mxu0
    %v144 = vld [vmem:[%s1] sm:$0x3]
    %v145 = vld [vmem:[%s5] sm:$0xff]
    %v146 = vld [vmem:[%s5 + $0x8] sm:$0xff]
    %v147 = vld [vmem:[%s5 + $0x10] sm:$0xff]
    %v148 = vld [vmem:[%s5 + $0x18] sm:$0xff]
    %v149 = vld [vmem:[%s6] sm:$0x1]
    %v151 = vlaneseq
    %v152 = vshrl.u32 %v151, 7
    %v153 = vsub.s32 0, %v152
    %v154 = vrot.slane %v149, %v153
    %v157 = vsel %vm70, %v144, 0
    %159 = vmatprep.subr.mxu0 0.0
    %160 = vmatpush1.msra.mxu0 %v145
    %161 = vmatprep.subr.mxu0 0.0
    %162 = vmatpush1.msra.mxu0 %v146
    %163 = vmatprep.subr.mxu0 0.0
    %164 = vmatpush1.msra.mxu0 %v147
    %165 = vmatprep.subr.mxu0 0.0
    %166 = vmatpush1.msra.mxu0 %v148
    %167 = vmatprep.subr.mxu0 0.0
    %168 = vmatpush1.msra.mxu0 0.0
    %169 = vmatprep.subr.mxu0 0.0
    %170 = vmatpush1.msra.mxu0 0.0
    %171 = vmatprep.subr.mxu0 0.0
    %172 = vmatpush1.msra.mxu0 0.0
    %173 = vmatprep.subr.mxu0 0.0
    %174 = vmatpush1.msra.mxu0 0.0
    %175 = vmatprep.subr.mxu0 0.0
    %176 = vmatpush1.msra.mxu0 0.0
    %177 = vmatprep.subr.mxu0 0.0
    %178 = vmatpush1.msra.mxu0 0.0
    %179 = vmatprep.subr.mxu0 0.0
    %180 = vmatpush1.msra.mxu0 0.0
    %181 = vmatprep.subr.mxu0 0.0
    %182 = vmatpush1.msra.mxu0 0.0
    %183 = vmatprep.subr.mxu0 0.0
    %184 = vmatpush1.msra.mxu0 0.0
    %185 = vmatprep.subr.mxu0 0.0
    %186 = vmatpush1.msra.mxu0 0.0
    %187 = vmatprep.subr.mxu0 0.0
    %188 = vmatpush1.msra.mxu0 0.0
    %189 = vmatprep.subr.mxu0 0.0
    %190 = vmatpush1.msra.mxu0 0.0
    %191 = vmatprep.subr.mxu0 0.0
    %192 = vmatpush1.msra.mxu0 0.0
    %193 = vmatprep.subr.mxu0 0.0
    %194 = vmatpush1.msra.mxu0 0.0
    %195 = vmatprep.subr.mxu0 0.0
    %196 = vmatpush1.msra.mxu0 0.0
    %197 = vmatprep.subr.mxu0 0.0
    %198 = vmatpush1.msra.mxu0 0.0
    %199 = vmatprep.subr.mxu0 0.0
    %200 = vmatpush1.msra.mxu0 0.0
    %201 = vmatprep.subr.mxu0 0.0
    %202 = vmatpush1.msra.mxu0 0.0
    %203 = vmatprep.subr.mxu0 0.0
    %204 = vmatpush1.msra.mxu0 0.0
    %205 = vmatprep.subr.mxu0 0.0
    %206 = vmatpush1.msra.mxu0 0.0
    %207 = vmatprep.subr.mxu0 0.0
    %208 = vmatpush1.msra.mxu0 0.0
    %209 = vmatprep.subr.mxu0 0.0
    %210 = vmatpush1.msra.mxu0 0.0
    %211 = vmatprep.subr.mxu0 0.0
    %212 = vmatpush1.msra.mxu0 0.0
    %213 = vmatprep.subr.mxu0 0.0
    %214 = vmatpush1.msra.mxu0 0.0
    %215 = vmatprep.subr.mxu0 0.0
    %216 = vmatpush1.msra.mxu0 0.0
    %217 = vmatprep.subr.mxu0 0.0
    %218 = vmatpush1.msra.mxu0 0.0
    %219 = vmatprep.subr.mxu0 0.0
    %220 = vmatpush1.msra.mxu0 0.0
    %221 = vmatprep.subr.mxu0 0.0
    %222 = vmatpush1.msra.mxu0 0.0
    %223 = vmatprep.mubr.f32.mxu0 0.0
    %224 = vmatmul.mubr.f32.gmra.mrb[0].mxu0 %v157
    %v225 = vpop.f32.mrb[0].mxu0
    %v226 = vadd.f32 %v154, %v225
    %v227 = vpop.f32.mrb[0].mxu0
    %228 = vdwg.mxu0
    %v229 = vld [vmem:[%s2] sm:$0x3]
    %v230 = vmul.f32 %v226, 0.5
    %v231 = vmul.f32 %v230, 1.442695
    %v232 = vpow.pop %v231
    %234 = vrot.lane.b32.xlu0 %v232, 96
    %v235 = vpop.permute.xlu0 %234
    %v237 = vmul.f32 %v229, %v235
    %v238 = vadd.f32 %v237, %v226
    %v239 = vld [vmem:[%s7] sm:$0xff]
    %v240 = vld [vmem:[%s7 + $0x8] sm:$0xff]
    %v241 = vld [vmem:[%s7 + $0x10] sm:$0xff]
    %v242 = vld [vmem:[%s7 + $0x18] sm:$0xff]
    %v243 = vld [vmem:[%s8] sm:$0xff]
    %v244 = vld [vmem:[%s8 + $0x8] sm:$0xff]
    %v245 = vld [vmem:[%s8 + $0x10] sm:$0xff]
    %v246 = vld [vmem:[%s8 + $0x18] sm:$0xff]
    %v248 = vsel %vm70, %v238, 0
    %250 = vmatprep.subr.mxu0 0.0
    %251 = vmatpush1.msra.mxu0 %v243
    %252 = vmatprep.subr.mxu0 0.0
    %253 = vmatpush1.msra.mxu0 %v244
    %254 = vmatprep.subr.mxu0 0.0
    %255 = vmatpush1.msra.mxu0 %v245
    %256 = vmatprep.subr.mxu0 0.0
    %257 = vmatpush1.msra.mxu0 %v246
    %258 = vmatprep.subr.mxu0 0.0
    %259 = vmatpush1.msra.mxu0 0.0
    %260 = vmatprep.subr.mxu0 0.0
    %261 = vmatpush1.msra.mxu0 0.0
    %262 = vmatprep.subr.mxu0 0.0
    %263 = vmatpush1.msra.mxu0 0.0
    %264 = vmatprep.subr.mxu0 0.0
    %265 = vmatpush1.msra.mxu0 0.0
    %266 = vmatprep.subr.mxu0 0.0
    %267 = vmatpush1.msra.mxu0 0.0
    %268 = vmatprep.subr.mxu0 0.0
    %269 = vmatpush1.msra.mxu0 0.0
    %270 = vmatprep.subr.mxu0 0.0
    %271 = vmatpush1.msra.mxu0 0.0
    %272 = vmatprep.subr.mxu0 0.0
    %273 = vmatpush1.msra.mxu0 0.0
    %274 = vmatprep.subr.mxu0 0.0
    %275 = vmatpush1.msra.mxu0 0.0
    %276 = vmatprep.subr.mxu0 0.0
    %277 = vmatpush1.msra.mxu0 0.0
    %278 = vmatprep.subr.mxu0 0.0
    %279 = vmatpush1.msra.mxu0 0.0
    %280 = vmatprep.subr.mxu0 0.0
    %281 = vmatpush1.msra.mxu0 0.0
    %282 = vmatprep.subr.mxu0 0.0
    %283 = vmatpush1.msra.mxu0 0.0
    %284 = vmatprep.subr.mxu0 0.0
    %285 = vmatpush1.msra.mxu0 0.0
    %286 = vmatprep.subr.mxu0 0.0
    %287 = vmatpush1.msra.mxu0 0.0
    %288 = vmatprep.subr.mxu0 0.0
    %289 = vmatpush1.msra.mxu0 0.0
    %290 = vmatprep.subr.mxu0 0.0
    %291 = vmatpush1.msra.mxu0 0.0
    %292 = vmatprep.subr.mxu0 0.0
    %293 = vmatpush1.msra.mxu0 0.0
    %294 = vmatprep.subr.mxu0 0.0
    %295 = vmatpush1.msra.mxu0 0.0
    %296 = vmatprep.subr.mxu0 0.0
    %297 = vmatpush1.msra.mxu0 0.0
    %298 = vmatprep.subr.mxu0 0.0
    %299 = vmatpush1.msra.mxu0 0.0
    %300 = vmatprep.subr.mxu0 0.0
    %301 = vmatpush1.msra.mxu0 0.0
    %302 = vmatprep.subr.mxu0 0.0
    %303 = vmatpush1.msra.mxu0 0.0
    %304 = vmatprep.subr.mxu0 0.0
    %305 = vmatpush1.msra.mxu0 0.0
    %306 = vmatprep.subr.mxu0 0.0
    %307 = vmatpush1.msra.mxu0 0.0
    %308 = vmatprep.subr.mxu0 0.0
    %309 = vmatpush1.msra.mxu0 0.0
    %310 = vmatprep.subr.mxu0 0.0
    %311 = vmatpush1.msra.mxu0 0.0
    %312 = vmatprep.subr.mxu0 0.0
    %313 = vmatpush1.msra.mxu0 0.0
    %314 = vmatprep.mubr.f32.mxu0 0.0
    %315 = vmatmul.mubr.f32.gmra.mrb[0].mxu0 %v248
    %v316 = vpop.f32.mrb[0].mxu0
    %v317 = vadd.f32 0.0, %v316
    %v318 = vpop.f32.mrb[0].mxu0
    %319 = vdwg.mxu0
    %320 = vmatprep.subr.mxu0 0.0
    %321 = vmatpush1.msra.mxu0 %v239
    %322 = vmatprep.subr.mxu0 0.0
    %323 = vmatpush1.msra.mxu0 %v240
    %324 = vmatprep.subr.mxu0 0.0
    %325 = vmatpush1.msra.mxu0 %v241
    %326 = vmatprep.subr.mxu0 0.0
    %327 = vmatpush1.msra.mxu0 %v242
    %328 = vmatprep.subr.mxu0 0.0
    %329 = vmatpush1.msra.mxu0 0.0
    %330 = vmatprep.subr.mxu0 0.0
    %331 = vmatpush1.msra.mxu0 0.0
    %332 = vmatprep.subr.mxu0 0.0
    %333 = vmatpush1.msra.mxu0 0.0
    %334 = vmatprep.subr.mxu0 0.0
    %335 = vmatpush1.msra.mxu0 0.0
    %336 = vmatprep.subr.mxu0 0.0
    %337 = vmatpush1.msra.mxu0 0.0
    %338 = vmatprep.subr.mxu0 0.0
    %339 = vmatpush1.msra.mxu0 0.0
    %340 = vmatprep.subr.mxu0 0.0
    %341 = vmatpush1.msra.mxu0 0.0
    %342 = vmatprep.subr.mxu0 0.0
    %343 = vmatpush1.msra.mxu0 0.0
    %344 = vmatprep.subr.mxu0 0.0
    %345 = vmatpush1.msra.mxu0 0.0
    %346 = vmatprep.subr.mxu0 0.0
    %347 = vmatpush1.msra.mxu0 0.0
    %348 = vmatprep.subr.mxu0 0.0
    %349 = vmatpush1.msra.mxu0 0.0
    %350 = vmatprep.subr.mxu0 0.0
    %351 = vmatpush1.msra.mxu0 0.0
    %352 = vmatprep.subr.mxu0 0.0
    %353 = vmatpush1.msra.mxu0 0.0
    %354 = vmatprep.subr.mxu0 0.0
    %355 = vmatpush1.msra.mxu0 0.0
    %356 = vmatprep.subr.mxu0 0.0
    %357 = vmatpush1.msra.mxu0 0.0
    %358 = vmatprep.subr.mxu0 0.0
    %359 = vmatpush1.msra.mxu0 0.0
    %360 = vmatprep.subr.mxu0 0.0
    %361 = vmatpush1.msra.mxu0 0.0
    %362 = vmatprep.subr.mxu0 0.0
    %363 = vmatpush1.msra.mxu0 0.0
    %364 = vmatprep.subr.mxu0 0.0
    %365 = vmatpush1.msra.mxu0 0.0
    %366 = vmatprep.subr.mxu0 0.0
    %367 = vmatpush1.msra.mxu0 0.0
    %368 = vmatprep.subr.mxu0 0.0
    %369 = vmatpush1.msra.mxu0 0.0
    %370 = vmatprep.subr.mxu0 0.0
    %371 = vmatpush1.msra.mxu0 0.0
    %372 = vmatprep.subr.mxu0 0.0
    %373 = vmatpush1.msra.mxu0 0.0
    %374 = vmatprep.subr.mxu0 0.0
    %375 = vmatpush1.msra.mxu0 0.0
    %376 = vmatprep.subr.mxu0 0.0
    %377 = vmatpush1.msra.mxu0 0.0
    %378 = vmatprep.subr.mxu0 0.0
    %379 = vmatpush1.msra.mxu0 0.0
    %380 = vmatprep.subr.mxu0 0.0
    %381 = vmatpush1.msra.mxu0 0.0
    %382 = vmatprep.subr.mxu0 0.0
    %383 = vmatpush1.msra.mxu0 0.0
    %384 = vmatprep.mubr.f32.mxu0 0.0
    %385 = vmatmul.mubr.f32.gmra.mrb[0].mxu0 %v72
    %v386 = vpop.f32.mrb[0].mxu0
    %v387 = vadd.f32 %v317, %v386
    %v388 = vpop.f32.mrb[0].mxu0
    %389 = vdwg.mxu0
    %v390 = vld [vmem:[%s9] sm:$0x1]
    %v392 = vlaneseq
    %v393 = vshrl.u32 %v392, 7
    %v394 = vsub.s32 0, %v393
    %v395 = vrot.slane %v390, %v394
    %v397 = vadd.f32 %v387, %v395
    %v398 = vld [vmem:[%s10] sm:$0xff]
    %v399 = vld [vmem:[%s10 + $0x8] sm:$0xff]
    %v400 = vld [vmem:[%s10 + $0x10] sm:$0xff]
    %v401 = vld [vmem:[%s10 + $0x18] sm:$0xff]
    %v402 = vld [vmem:[%s11] sm:$0x1]
    %v404 = vlaneseq
    %v405 = vshrl.u32 %v404, 7
    %v406 = vsub.s32 0, %v405
    %v407 = vrot.slane %v402, %v406
    %409 = vmatprep.subr.mxu0 0.0
    %410 = vmatpush1.msra.mxu0 %v398
    %411 = vmatprep.subr.mxu0 0.0
    %412 = vmatpush1.msra.mxu0 %v399
    %413 = vmatprep.subr.mxu0 0.0
    %414 = vmatpush1.msra.mxu0 %v400
    %415 = vmatprep.subr.mxu0 0.0
    %416 = vmatpush1.msra.mxu0 %v401
    %417 = vmatprep.subr.mxu0 0.0
    %418 = vmatpush1.msra.mxu0 0.0
    %419 = vmatprep.subr.mxu0 0.0
    %420 = vmatpush1.msra.mxu0 0.0
    %421 = vmatprep.subr.mxu0 0.0
    %422 = vmatpush1.msra.mxu0 0.0
    %423 = vmatprep.subr.mxu0 0.0
    %424 = vmatpush1.msra.mxu0 0.0
    %425 = vmatprep.subr.mxu0 0.0
    %426 = vmatpush1.msra.mxu0 0.0
    %427 = vmatprep.subr.mxu0 0.0
    %428 = vmatpush1.msra.mxu0 0.0
    %429 = vmatprep.subr.mxu0 0.0
    %430 = vmatpush1.msra.mxu0 0.0
    %431 = vmatprep.subr.mxu0 0.0
    %432 = vmatpush1.msra.mxu0 0.0
    %433 = vmatprep.subr.mxu0 0.0
    %434 = vmatpush1.msra.mxu0 0.0
    %435 = vmatprep.subr.mxu0 0.0
    %436 = vmatpush1.msra.mxu0 0.0
    %437 = vmatprep.subr.mxu0 0.0
    %438 = vmatpush1.msra.mxu0 0.0
    %439 = vmatprep.subr.mxu0 0.0
    %440 = vmatpush1.msra.mxu0 0.0
    %441 = vmatprep.subr.mxu0 0.0
    %442 = vmatpush1.msra.mxu0 0.0
    %443 = vmatprep.subr.mxu0 0.0
    %444 = vmatpush1.msra.mxu0 0.0
    %445 = vmatprep.subr.mxu0 0.0
    %446 = vmatpush1.msra.mxu0 0.0
    %447 = vmatprep.subr.mxu0 0.0
    %448 = vmatpush1.msra.mxu0 0.0
    %449 = vmatprep.subr.mxu0 0.0
    %450 = vmatpush1.msra.mxu0 0.0
    %451 = vmatprep.subr.mxu0 0.0
    %452 = vmatpush1.msra.mxu0 0.0
    %453 = vmatprep.subr.mxu0 0.0
    %454 = vmatpush1.msra.mxu0 0.0
    %455 = vmatprep.subr.mxu0 0.0
    %456 = vmatpush1.msra.mxu0 0.0
    %457 = vmatprep.subr.mxu0 0.0
    %458 = vmatpush1.msra.mxu0 0.0
    %459 = vmatprep.subr.mxu0 0.0
    %460 = vmatpush1.msra.mxu0 0.0
    %461 = vmatprep.subr.mxu0 0.0
    %462 = vmatpush1.msra.mxu0 0.0
    %463 = vmatprep.subr.mxu0 0.0
    %464 = vmatpush1.msra.mxu0 0.0
    %465 = vmatprep.subr.mxu0 0.0
    %466 = vmatpush1.msra.mxu0 0.0
    %467 = vmatprep.subr.mxu0 0.0
    %468 = vmatpush1.msra.mxu0 0.0
    %469 = vmatprep.subr.mxu0 0.0
    %470 = vmatpush1.msra.mxu0 0.0
    %471 = vmatprep.subr.mxu0 0.0
    %472 = vmatpush1.msra.mxu0 0.0
    %473 = vmatprep.mubr.f32.mxu0 0.0
    %474 = vmatmul.mubr.f32.gmra.mrb[0].mxu0 %v72
    %v475 = vpop.f32.mrb[0].mxu0
    %v476 = vadd.f32 %v407, %v475
    %v477 = vpop.f32.mrb[0].mxu0
    %478 = vdwg.mxu0
    %v479 = vmax.f32 %v476, 0.0
    %v480 = vld [vmem:[%s12] sm:$0x1]
    %v482 = vlaneseq
    %v483 = vshrl.u32 %v482, 7
    %v484 = vsub.s32 0, %v483
    %v485 = vrot.slane %v480, %v484
    %v487 = vmul.f32 %v479, %v485
    %vm488 = vcmask 254976
    %v489 = vsel %vm488, %v487, 0.0
    %490 = vadd.xlane.f32.xlu0 %v489
    %v491 = vpop.xlane.xlu0 %490
    %v492 = vld [vmem:[#allocation2] sm:$0x1]
    %v494 = vlaneseq
    %v495 = vshrl.u32 %v494, 7
    %v496 = vsub.s32 0, %v495
    %v497 = vrot.slane %v492, %v496
    %v499 = vadd.f32 %v491, %v497
    %500 = vst.msk [vmem:[#allocation3] sm:$0x3] %vm488, %v141
    %502 = vrot.lane.b32.xlu0 %v141, 96
    %v503 = vpop.permute.xlu0 %502
    %505 = vst.msk [vmem:[#allocation5] sm:$0x3] %vm488, %v503
    %506 = vst.msk [vmem:[#allocation7] sm:$0x3] %vm488, %v226
    %508 = vrot.lane.b32.xlu0 %v226, 96
    %v509 = vpop.permute.xlu0 %508
    %511 = vst.msk [vmem:[#allocation8] sm:$0x3] %vm488, %v509
    %512 = vst.msk [vmem:[%s18] sm:$0x3] %vm488, %v397
    %vm513 = vcmask 1024
    %514 = vst.msk [vmem:[%s19] sm:$0x3] %vm513, %v499
    // Predicated region
    $region58: #{_lambda_.8} parent=1 // pred_check
      _
    $region59: #{_lambda_.8} parent=1 // pred_check_branch
      %516 = sbr.rel (0) target = $region61
    $region60: #{_lambda_.8} parent=1 // pred_region
      %s518 = ssub.s32 32, 32
      %519 = vsyncadd [#allocation4], %s518
      %s521 = sshll.u32 [#allocation3], 4
      %s522 = int_to_ptr.vmem [resolvable:$true] %s521
      %524 = dma.vmem_to_hbm [thread:$0]  %s522, 32, %s14, [#allocation4]
    $region61: #{_lambda_.8} parent=1 // pred_fallthru
      _
    // Predicated region
    $region62: #{_lambda_.8} parent=1 // pred_check
      _
    $region63: #{_lambda_.8} parent=1 // pred_check_branch
      %526 = sbr.rel (0) target = $region65
    $region64: #{_lambda_.8} parent=1 // pred_region
      %s528 = ssub.s32 32, 32
      %529 = vsyncadd [#allocation6], %s528
      %s531 = sshll.u32 [#allocation5], 4
      %s532 = int_to_ptr.vmem [resolvable:$true] %s531
      %534 = dma.vmem_to_hbm [thread:$0]  %s532, 32, %s15, [#allocation6]
    $region65: #{_lambda_.8} parent=1 // pred_fallthru
      _
    // Predicated region
    $region66: #{_lambda_.8} parent=1 // pred_check
      _
    $region67: #{_lambda_.8} parent=1 // pred_check_branch
      %536 = sbr.rel (0) target = $region69
    $region68: #{_lambda_.8} parent=1 // pred_region
      %s538 = ssub.s32 32, 32
      %539 = vsyncadd [#allocation6], %s538
      %s541 = sshll.u32 [#allocation7], 4
      %s542 = int_to_ptr.vmem [resolvable:$true] %s541
      %544 = dma.vmem_to_hbm [thread:$0]  %s542, 32, %s16, [#allocation6]
    $region69: #{_lambda_.8} parent=1 // pred_fallthru
      _
    // Predicated region
    $region70: #{_lambda_.8} parent=1 // pred_check
      _
    $region71: #{_lambda_.8} parent=1 // pred_check_branch
      %546 = sbr.rel (0) target = $region73
    $region72: #{_lambda_.8} parent=1 // pred_region
      %s548 = ssub.s32 32, 32
      %549 = vsyncadd [#allocation9], %s548
      %s551 = sshll.u32 [#allocation8], 4
      %s552 = int_to_ptr.vmem [resolvable:$true] %s551
      %554 = dma.vmem_to_hbm [thread:$0]  %s552, 32, %s17, [#allocation9]
    $region73: #{_lambda_.8} parent=1 // pred_fallthru
      _
    // Predicated region
    $region74: #{_lambda_.8} parent=1 // pred_check
      _
    $region75: #{_lambda_.8} parent=1 // pred_check_branch
      %556 = sbr.rel (0) target = $region77
    $region76: #{_lambda_.8} parent=1 // pred_region
      _
    $region77: #{_lambda_.8} parent=1 // pred_fallthru
      _
    // Predicated region
    $region78: #{_lambda_.8} parent=1 // pred_check
      _
    $region79: #{_lambda_.8} parent=1 // pred_check_branch
      %558 = sbr.rel (0) target = $region81
    $region80: #{_lambda_.8} parent=1 // pred_region
      _
    $region81: #{_lambda_.8} parent=1 // pred_fallthru
      _
    // Predicated region
    $region82: #{_lambda_.8} parent=1 // pred_check
      _
    $region83: #{_lambda_.8} parent=1 // pred_check_branch
      %560 = sbr.rel (0) target = $region85
    $region84: #{_lambda_.8} parent=1 // pred_region
      %561 = dma.done [#allocation4], 32
    $region85: #{_lambda_.8} parent=1 // pred_fallthru
      _
    // Predicated region
    $region86: #{_lambda_.8} parent=1 // pred_check
      _
    $region87: #{_lambda_.8} parent=1 // pred_check_branch
      %563 = sbr.rel (0) target = $region89
    $region88: #{_lambda_.8} parent=1 // pred_region
      %564 = dma.done [#allocation6], 32
    $region89: #{_lambda_.8} parent=1 // pred_fallthru
      _
    // Predicated region
    $region90: #{_lambda_.8} parent=1 // pred_check
      _
    $region91: #{_lambda_.8} parent=1 // pred_check_branch
      %566 = sbr.rel (0) target = $region93
    $region92: #{_lambda_.8} parent=1 // pred_region
      %567 = dma.done [#allocation6], 32
    $region93: #{_lambda_.8} parent=1 // pred_fallthru
      _
    // Predicated region
    $region94: #{_lambda_.8} parent=1 // pred_check
      _
    $region95: #{_lambda_.8} parent=1 // pred_check_branch
      %569 = sbr.rel (0) target = $region97
    $region96: #{_lambda_.8} parent=1 // pred_region
      %570 = dma.done [#allocation9], 32
    $region97: #{_lambda_.8} parent=1 // pred_fallthru
      _
    // Predicated region
    $region98: #{_lambda_.8} parent=1 // pred_check
      _
    $region99: #{_lambda_.8} parent=1 // pred_check_branch
      %572 = sbr.rel (0) target = $region101
    $region100: #{_lambda_.8} parent=1 // pred_region
      _
    $region101: #{_lambda_.8} parent=1 // pred_fallthru
      _
    // Predicated region
    $region102: #{_lambda_.8} parent=1 // pred_check
      _
    $region103: #{_lambda_.8} parent=1 // pred_check_branch
      %574 = sbr.rel (0) target = $region105
    $region104: #{_lambda_.8} parent=1 // pred_region
      _
    $region105: #{_lambda_.8} parent=1 // pred_fallthru
      _
    %575 = vsyncpa [#allocation4], 1
    %576 = vsyncpa [#allocation6], 1
    %577 = vsyncpa [#allocation9], 1

// kernel: _lambda_.9
$region0: #{_lambda_.9}
  #allocation0 [shape = 'u32[]', space=smem, size = 0x4, offset = 0x4, fixed_abs, tag = 'smem constant byte address 0x4 - core index']
  #allocation1 [shape = 'u32[144,128]{1,0:T(1,128)}', space=vmem, size = 0x12000, scoped, tag = 'internal scratch']
  #allocation2 [shape = 'f32[12,96]{1,0:T(8,128)}', space=vmem, size = 0x2000, scoped, tag = 'scratch operand']
  #allocation3 [shape = 'f32[12,32]{1,0:T(8,128)}', space=vmem, size = 0x2000, scoped, tag = 'scratch operand']
  %s0 = inlined_call_operand.vmem [shape: f32[12,16], index: 0, kind: input, shape index: {}]
  %s1 = inlined_call_operand.vmem [shape: f32[2,32], index: 1, kind: input, shape index: {}]
  %s2 = inlined_call_operand.vmem [shape: f32[16,96], index: 2, kind: input, shape index: {}]
  %s3 = inlined_call_operand.vmem [shape: f32[32,96], index: 3, kind: input, shape index: {}]
  %s4 = inlined_call_operand.vmem [shape: f32[1,96], index: 4, kind: input, shape index: {}]
  %s5 = inlined_call_operand.vmem [shape: f32[1,32], index: 5, kind: input, shape index: {}]
  %s6 = inlined_call_operand.vmem [shape: f32[32,50], index: 6, kind: input, shape index: {}]
  %s7 = inlined_call_operand.vmem [shape: f32[1,50], index: 7, kind: input, shape index: {}]
  %s8 = inlined_call_operand.vmem [shape: f32[12,50], index: 8, kind: output, shape index: {}]
  %s9 = sld [smem:[#allocation0]]
  $region42: #{_lambda_.9} parent=0
    _
  %s11 = ssub.s32 1, %s9
  %s12 = scalar_select 0, %s11, %s9
  // Predicated region
  $region2: #{_lambda_.9} parent=0 // pred_check
    _
  $region3: #{_lambda_.9} parent=0 // pred_check_branch
    %14 = sbr.rel (0) target = $region5
  $region4: #{_lambda_.9} parent=0 // pred_region
    _
  $region5: #{_lambda_.9} parent=0 // pred_fallthru
    _
  // Predicated region
  $region6: #{_lambda_.9} parent=0 // pred_check
    _
  $region7: #{_lambda_.9} parent=0 // pred_check_branch
    %16 = sbr.rel (0) target = $region9
  $region8: #{_lambda_.9} parent=0 // pred_region
    _
  $region9: #{_lambda_.9} parent=0 // pred_fallthru
    _
  // Predicated region
  $region10: #{_lambda_.9} parent=0 // pred_check
    _
  $region11: #{_lambda_.9} parent=0 // pred_check_branch
    %18 = sbr.rel (0) target = $region13
  $region12: #{_lambda_.9} parent=0 // pred_region
    _
  $region13: #{_lambda_.9} parent=0 // pred_fallthru
    _
  // Predicated region
  $region14: #{_lambda_.9} parent=0 // pred_check
    _
  $region15: #{_lambda_.9} parent=0 // pred_check_branch
    %20 = sbr.rel (0) target = $region17
  $region16: #{_lambda_.9} parent=0 // pred_region
    _
  $region17: #{_lambda_.9} parent=0 // pred_fallthru
    _
  // Predicated region
  $region18: #{_lambda_.9} parent=0 // pred_check
    _
  $region19: #{_lambda_.9} parent=0 // pred_check_branch
    %22 = sbr.rel (0) target = $region21
  $region20: #{_lambda_.9} parent=0 // pred_region
    _
  $region21: #{_lambda_.9} parent=0 // pred_fallthru
    _
  // Predicated region
  $region22: #{_lambda_.9} parent=0 // pred_check
    _
  $region23: #{_lambda_.9} parent=0 // pred_check_branch
    %24 = sbr.rel (0) target = $region25
  $region24: #{_lambda_.9} parent=0 // pred_region
    _
  $region25: #{_lambda_.9} parent=0 // pred_fallthru
    _
  // Predicated region
  $region26: #{_lambda_.9} parent=0 // pred_check
    _
  $region27: #{_lambda_.9} parent=0 // pred_check_branch
    %26 = sbr.rel (0) target = $region29
  $region28: #{_lambda_.9} parent=0 // pred_region
    _
  $region29: #{_lambda_.9} parent=0 // pred_fallthru
    _
  // Predicated region
  $region30: #{_lambda_.9} parent=0 // pred_check
    _
  $region31: #{_lambda_.9} parent=0 // pred_check_branch
    %28 = sbr.rel (0) target = $region33
  $region32: #{_lambda_.9} parent=0 // pred_region
    _
  $region33: #{_lambda_.9} parent=0 // pred_fallthru
    _
  %v29 = vld [vmem:[%s0] sm:$0xff]
  %v30 = vld [vmem:[%s0 + $0x8] sm:$0xf]
  %v31 = vld [vmem:[%s2] sm:$0xff]
  %v32 = vld [vmem:[%s2 + $0x8] sm:$0xff]
  %v33 = vld [vmem:[%s4] sm:$0x1]
  %v35 = vlaneseq
  %v36 = vshrl.u32 %v35, 7
  %v37 = vsub.s32 0, %v36
  %v38 = vrot.slane %v33, %v37
  %vm40 = vcmask 130048
  %v42 = vsel %vm40, %v29, 0
  %v45 = vsel %vm40, %v30, 0
  %47 = vmatprep.subr.mxu0 0.0
  %48 = vmatpush1.msra.mxu0 %v31
  %49 = vmatprep.subr.mxu0 0.0
  %50 = vmatpush1.msra.mxu0 %v32
  %51 = vmatprep.subr.mxu0 0.0
  %52 = vmatpush1.msra.mxu0 0.0
  %53 = vmatprep.subr.mxu0 0.0
  %54 = vmatpush1.msra.mxu0 0.0
  %55 = vmatprep.subr.mxu0 0.0
  %56 = vmatpush1.msra.mxu0 0.0
  %57 = vmatprep.subr.mxu0 0.0
  %58 = vmatpush1.msra.mxu0 0.0
  %59 = vmatprep.subr.mxu0 0.0
  %60 = vmatpush1.msra.mxu0 0.0
  %61 = vmatprep.subr.mxu0 0.0
  %62 = vmatpush1.msra.mxu0 0.0
  %63 = vmatprep.subr.mxu0 0.0
  %64 = vmatpush1.msra.mxu0 0.0
  %65 = vmatprep.subr.mxu0 0.0
  %66 = vmatpush1.msra.mxu0 0.0
  %67 = vmatprep.subr.mxu0 0.0
  %68 = vmatpush1.msra.mxu0 0.0
  %69 = vmatprep.subr.mxu0 0.0
  %70 = vmatpush1.msra.mxu0 0.0
  %71 = vmatprep.subr.mxu0 0.0
  %72 = vmatpush1.msra.mxu0 0.0
  %73 = vmatprep.subr.mxu0 0.0
  %74 = vmatpush1.msra.mxu0 0.0
  %75 = vmatprep.subr.mxu0 0.0
  %76 = vmatpush1.msra.mxu0 0.0
  %77 = vmatprep.subr.mxu0 0.0
  %78 = vmatpush1.msra.mxu0 0.0
  %79 = vmatprep.subr.mxu0 0.0
  %80 = vmatpush1.msra.mxu0 0.0
  %81 = vmatprep.subr.mxu0 0.0
  %82 = vmatpush1.msra.mxu0 0.0
  %83 = vmatprep.subr.mxu0 0.0
  %84 = vmatpush1.msra.mxu0 0.0
  %85 = vmatprep.subr.mxu0 0.0
  %86 = vmatpush1.msra.mxu0 0.0
  %87 = vmatprep.subr.mxu0 0.0
  %88 = vmatpush1.msra.mxu0 0.0
  %89 = vmatprep.subr.mxu0 0.0
  %90 = vmatpush1.msra.mxu0 0.0
  %91 = vmatprep.subr.mxu0 0.0
  %92 = vmatpush1.msra.mxu0 0.0
  %93 = vmatprep.subr.mxu0 0.0
  %94 = vmatpush1.msra.mxu0 0.0
  %95 = vmatprep.subr.mxu0 0.0
  %96 = vmatpush1.msra.mxu0 0.0
  %97 = vmatprep.subr.mxu0 0.0
  %98 = vmatpush1.msra.mxu0 0.0
  %99 = vmatprep.subr.mxu0 0.0
  %100 = vmatpush1.msra.mxu0 0.0
  %101 = vmatprep.subr.mxu0 0.0
  %102 = vmatpush1.msra.mxu0 0.0
  %103 = vmatprep.subr.mxu0 0.0
  %104 = vmatpush1.msra.mxu0 0.0
  %105 = vmatprep.subr.mxu0 0.0
  %106 = vmatpush1.msra.mxu0 0.0
  %107 = vmatprep.subr.mxu0 0.0
  %108 = vmatpush1.msra.mxu0 0.0
  %109 = vmatprep.subr.mxu0 0.0
  %110 = vmatpush1.msra.mxu0 0.0
  %111 = vmatprep.mubr.f32.mxu0 0.0
  %112 = vmatmul.mubr.f32.gmra.mrb[0].mxu0 %v42
  %v113 = vpop.f32.mrb[0].mxu0
  %v114 = vadd.f32 %v38, %v113
  %v115 = vpop.f32.mrb[0].mxu0
  %116 = vmatprep.mubr.f32.mxu0 0.0
  %117 = vmatmul.mubr.f32.gmra.mrb[0].mxu0 %v45
  %v118 = vpop.f32.mrb[0].mxu0
  %v119 = vadd.f32 %v38, %v118
  %v120 = vpop.f32.mrb[0].mxu0
  %121 = vdwg.mxu0
  %vm122 = vcmask 785408
  %123 = vst.msk [vmem:[#allocation2] sm:$0xff] %vm122, %v114
  %vm124 = vcmask 781312
  %125 = vst.msk [vmem:[#allocation2 + $0x8] sm:$0xf] %vm124, %v119
  %v126 = vld [vmem:[%s3] sm:$0xff]
  %v127 = vld [vmem:[%s3 + $0x8] sm:$0xff]
  %v128 = vld [vmem:[%s3 + $0x10] sm:$0xff]
  %v129 = vld [vmem:[%s3 + $0x18] sm:$0xff]
  %v130 = vld [vmem:[%s5] sm:$0x1]
  %v131 = vld [vmem:[%s1] sm:$0x3]
  %v132 = vld [vmem:[#allocation2] sm:$0x3]
  %vm133 = vcmask 261120
  %v135 = vsel %vm133, %v131, 0
  %137 = vmatprep.subr.mxu0 0.0
  %138 = vmatpush1.msra.mxu0 %v126
  %139 = vmatprep.subr.mxu0 0.0
  %140 = vmatpush1.msra.mxu0 %v127
  %141 = vmatprep.subr.mxu0 0.0
  %142 = vmatpush1.msra.mxu0 %v128
  %143 = vmatprep.subr.mxu0 0.0
  %144 = vmatpush1.msra.mxu0 %v129
  %145 = vmatprep.subr.mxu0 0.0
  %146 = vmatpush1.msra.mxu0 0.0
  %147 = vmatprep.subr.mxu0 0.0
  %148 = vmatpush1.msra.mxu0 0.0
  %149 = vmatprep.subr.mxu0 0.0
  %150 = vmatpush1.msra.mxu0 0.0
  %151 = vmatprep.subr.mxu0 0.0
  %152 = vmatpush1.msra.mxu0 0.0
  %153 = vmatprep.subr.mxu0 0.0
  %154 = vmatpush1.msra.mxu0 0.0
  %155 = vmatprep.subr.mxu0 0.0
  %156 = vmatpush1.msra.mxu0 0.0
  %157 = vmatprep.subr.mxu0 0.0
  %158 = vmatpush1.msra.mxu0 0.0
  %159 = vmatprep.subr.mxu0 0.0
  %160 = vmatpush1.msra.mxu0 0.0
  %161 = vmatprep.subr.mxu0 0.0
  %162 = vmatpush1.msra.mxu0 0.0
  %163 = vmatprep.subr.mxu0 0.0
  %164 = vmatpush1.msra.mxu0 0.0
  %165 = vmatprep.subr.mxu0 0.0
  %166 = vmatpush1.msra.mxu0 0.0
  %167 = vmatprep.subr.mxu0 0.0
  %168 = vmatpush1.msra.mxu0 0.0
  %169 = vmatprep.subr.mxu0 0.0
  %170 = vmatpush1.msra.mxu0 0.0
  %171 = vmatprep.subr.mxu0 0.0
  %172 = vmatpush1.msra.mxu0 0.0
  %173 = vmatprep.subr.mxu0 0.0
  %174 = vmatpush1.msra.mxu0 0.0
  %175 = vmatprep.subr.mxu0 0.0
  %176 = vmatpush1.msra.mxu0 0.0
  %177 = vmatprep.subr.mxu0 0.0
  %178 = vmatpush1.msra.mxu0 0.0
  %179 = vmatprep.subr.mxu0 0.0
  %180 = vmatpush1.msra.mxu0 0.0
  %181 = vmatprep.subr.mxu0 0.0
  %182 = vmatpush1.msra.mxu0 0.0
  %183 = vmatprep.subr.mxu0 0.0
  %184 = vmatpush1.msra.mxu0 0.0
  %185 = vmatprep.subr.mxu0 0.0
  %186 = vmatpush1.msra.mxu0 0.0
  %187 = vmatprep.subr.mxu0 0.0
  %188 = vmatpush1.msra.mxu0 0.0
  %189 = vmatprep.subr.mxu0 0.0
  %190 = vmatpush1.msra.mxu0 0.0
  %191 = vmatprep.subr.mxu0 0.0
  %192 = vmatpush1.msra.mxu0 0.0
  %193 = vmatprep.subr.mxu0 0.0
  %194 = vmatpush1.msra.mxu0 0.0
  %195 = vmatprep.subr.mxu0 0.0
  %196 = vmatpush1.msra.mxu0 0.0
  %197 = vmatprep.subr.mxu0 0.0
  %198 = vmatpush1.msra.mxu0 0.0
  %199 = vmatprep.subr.mxu0 0.0
  %200 = vmatpush1.msra.mxu0 0.0
  %201 = vmatprep.mubr.f32.mxu0 0.0
  %202 = vmatmul.mubr.f32.gmra.mrb[0].mxu0 %v135
  %v203 = vpop.f32.mrb[0].mxu0
  %v204 = vadd.f32 0.0, %v203
  %v205 = vpop.f32.mrb[0].mxu0
  %206 = vdwg.mxu0
  %v207 = vadd.f32 %v132, %v204
  %v208 = vsub.f32 0.0, %v207
  %v209 = vmul.f32 %v208, 1.442695
  %v210 = vpow.pop %v209
  %v211 = vadd.f32 %v210, 1.0
  %v212 = vrcp.pop %v211
  %v214 = vlaneseq
  %v215 = vshrl.u32 %v214, 7
  %v216 = vsub.s32 0, %v215
  %v217 = vrot.slane %v130, %v216
  %218 = vrot.lane.b32.xlu0 %v217, 64
  %v219 = vpop.permute.xlu0 %218
  %v221 = vadd.f32 %v204, %v219
  %223 = vrot.lane.b32.xlu0 %v221, 64
  %v224 = vpop.permute.xlu0 %223
  %v226 = vmul.f32 %v212, %v224
  %228 = vrot.lane.b32.xlu0 %v226, 64
  %v229 = vpop.permute.xlu0 %228
  %v231 = vadd.f32 %v132, %v229
  %v232 = vtanh.pop %v231
  %v233 = vsub.f32 1.0, %v212
  %235 = vrot.lane.b32.xlu0 %v232, 96
  %v236 = vpop.permute.xlu0 %235
  %v238 = vmul.f32 %v233, %v236
  %239 = vrot.lane.b32.xlu0 %v131, 32
  %v240 = vpop.permute.xlu0 %239
  %v242 = vmul.f32 %v212, %v240
  %v243 = vadd.f32 %v238, %v242
  %245 = vrot.lane.b32.xlu0 %v243, 96
  %v246 = vpop.permute.xlu0 %245
  %vm248 = vcmask 254976
  %249 = vst.msk [vmem:[#allocation3] sm:$0x3] %vm248, %v246
  %v250 = vld [vmem:[#allocation2 + $0x2] sm:$0x3]
  %v251 = vsel %vm133, %v246, 0
  %253 = vmatprep.subr.mxu0 0.0
  %254 = vmatpush1.msra.mxu0 %v126
  %255 = vmatprep.subr.mxu0 0.0
  %256 = vmatpush1.msra.mxu0 %v127
  %257 = vmatprep.subr.mxu0 0.0
  %258 = vmatpush1.msra.mxu0 %v128
  %259 = vmatprep.subr.mxu0 0.0
  %260 = vmatpush1.msra.mxu0 %v129
  %261 = vmatprep.subr.mxu0 0.0
  %262 = vmatpush1.msra.mxu0 0.0
  %263 = vmatprep.subr.mxu0 0.0
  %264 = vmatpush1.msra.mxu0 0.0
  %265 = vmatprep.subr.mxu0 0.0
  %266 = vmatpush1.msra.mxu0 0.0
  %267 = vmatprep.subr.mxu0 0.0
  %268 = vmatpush1.msra.mxu0 0.0
  %269 = vmatprep.subr.mxu0 0.0
  %270 = vmatpush1.msra.mxu0 0.0
  %271 = vmatprep.subr.mxu0 0.0
  %272 = vmatpush1.msra.mxu0 0.0
  %273 = vmatprep.subr.mxu0 0.0
  %274 = vmatpush1.msra.mxu0 0.0
  %275 = vmatprep.subr.mxu0 0.0
  %276 = vmatpush1.msra.mxu0 0.0
  %277 = vmatprep.subr.mxu0 0.0
  %278 = vmatpush1.msra.mxu0 0.0
  %279 = vmatprep.subr.mxu0 0.0
  %280 = vmatpush1.msra.mxu0 0.0
  %281 = vmatprep.subr.mxu0 0.0
  %282 = vmatpush1.msra.mxu0 0.0
  %283 = vmatprep.subr.mxu0 0.0
  %284 = vmatpush1.msra.mxu0 0.0
  %285 = vmatprep.subr.mxu0 0.0
  %286 = vmatpush1.msra.mxu0 0.0
  %287 = vmatprep.subr.mxu0 0.0
  %288 = vmatpush1.msra.mxu0 0.0
  %289 = vmatprep.subr.mxu0 0.0
  %290 = vmatpush1.msra.mxu0 0.0
  %291 = vmatprep.subr.mxu0 0.0
  %292 = vmatpush1.msra.mxu0 0.0
  %293 = vmatprep.subr.mxu0 0.0
  %294 = vmatpush1.msra.mxu0 0.0
  %295 = vmatprep.subr.mxu0 0.0
  %296 = vmatpush1.msra.mxu0 0.0
  %297 = vmatprep.subr.mxu0 0.0
  %298 = vmatpush1.msra.mxu0 0.0
  %299 = vmatprep.subr.mxu0 0.0
  %300 = vmatpush1.msra.mxu0 0.0
  %301 = vmatprep.subr.mxu0 0.0
  %302 = vmatpush1.msra.mxu0 0.0
  %303 = vmatprep.subr.mxu0 0.0
  %304 = vmatpush1.msra.mxu0 0.0
  %305 = vmatprep.subr.mxu0 0.0
  %306 = vmatpush1.msra.mxu0 0.0
  %307 = vmatprep.subr.mxu0 0.0
  %308 = vmatpush1.msra.mxu0 0.0
  %309 = vmatprep.subr.mxu0 0.0
  %310 = vmatpush1.msra.mxu0 0.0
  %311 = vmatprep.subr.mxu0 0.0
  %312 = vmatpush1.msra.mxu0 0.0
  %313 = vmatprep.subr.mxu0 0.0
  %314 = vmatpush1.msra.mxu0 0.0
  %315 = vmatprep.subr.mxu0 0.0
  %316 = vmatpush1.msra.mxu0 0.0
  %317 = vmatprep.mubr.f32.mxu0 0.0
  %318 = vmatmul.mubr.f32.gmra.mrb[0].mxu0 %v251
  %v319 = vpop.f32.mrb[0].mxu0
  %v320 = vadd.f32 0.0, %v319
  %v321 = vpop.f32.mrb[0].mxu0
  %322 = vdwg.mxu0
  %v323 = vadd.f32 %v250, %v320
  %v324 = vsub.f32 0.0, %v323
  %v325 = vmul.f32 %v324, 1.442695
  %v326 = vpow.pop %v325
  %v327 = vadd.f32 %v326, 1.0
  %v328 = vrcp.pop %v327
  %v329 = vadd.f32 %v320, %v219
  %331 = vrot.lane.b32.xlu0 %v329, 64
  %v332 = vpop.permute.xlu0 %331
  %v334 = vmul.f32 %v328, %v332
  %336 = vrot.lane.b32.xlu0 %v334, 64
  %v337 = vpop.permute.xlu0 %336
  %v339 = vadd.f32 %v250, %v337
  %v340 = vtanh.pop %v339
  %v341 = vsub.f32 1.0, %v328
  %343 = vrot.lane.b32.xlu0 %v340, 96
  %v344 = vpop.permute.xlu0 %343
  %v346 = vmul.f32 %v341, %v344
  %v347 = vmul.f32 %v328, %v243
  %v348 = vadd.f32 %v346, %v347
  %350 = vrot.lane.b32.xlu0 %v348, 96
  %v351 = vpop.permute.xlu0 %350
  %353 = vst.msk [vmem:[#allocation3 + $0x2] sm:$0x3] %vm248, %v351
  %v354 = vld [vmem:[#allocation2 + $0x4] sm:$0x3]
  %v355 = vsel %vm133, %v351, 0
  %357 = vmatprep.subr.mxu0 0.0
  %358 = vmatpush1.msra.mxu0 %v126
  %359 = vmatprep.subr.mxu0 0.0
  %360 = vmatpush1.msra.mxu0 %v127
  %361 = vmatprep.subr.mxu0 0.0
  %362 = vmatpush1.msra.mxu0 %v128
  %363 = vmatprep.subr.mxu0 0.0
  %364 = vmatpush1.msra.mxu0 %v129
  %365 = vmatprep.subr.mxu0 0.0
  %366 = vmatpush1.msra.mxu0 0.0
  %367 = vmatprep.subr.mxu0 0.0
  %368 = vmatpush1.msra.mxu0 0.0
  %369 = vmatprep.subr.mxu0 0.0
  %370 = vmatpush1.msra.mxu0 0.0
  %371 = vmatprep.subr.mxu0 0.0
  %372 = vmatpush1.msra.mxu0 0.0
  %373 = vmatprep.subr.mxu0 0.0
  %374 = vmatpush1.msra.mxu0 0.0
  %375 = vmatprep.subr.mxu0 0.0
  %376 = vmatpush1.msra.mxu0 0.0
  %377 = vmatprep.subr.mxu0 0.0
  %378 = vmatpush1.msra.mxu0 0.0
  %379 = vmatprep.subr.mxu0 0.0
  %380 = vmatpush1.msra.mxu0 0.0
  %381 = vmatprep.subr.mxu0 0.0
  %382 = vmatpush1.msra.mxu0 0.0
  %383 = vmatprep.subr.mxu0 0.0
  %384 = vmatpush1.msra.mxu0 0.0
  %385 = vmatprep.subr.mxu0 0.0
  %386 = vmatpush1.msra.mxu0 0.0
  %387 = vmatprep.subr.mxu0 0.0
  %388 = vmatpush1.msra.mxu0 0.0
  %389 = vmatprep.subr.mxu0 0.0
  %390 = vmatpush1.msra.mxu0 0.0
  %391 = vmatprep.subr.mxu0 0.0
  %392 = vmatpush1.msra.mxu0 0.0
  %393 = vmatprep.subr.mxu0 0.0
  %394 = vmatpush1.msra.mxu0 0.0
  %395 = vmatprep.subr.mxu0 0.0
  %396 = vmatpush1.msra.mxu0 0.0
  %397 = vmatprep.subr.mxu0 0.0
  %398 = vmatpush1.msra.mxu0 0.0
  %399 = vmatprep.subr.mxu0 0.0
  %400 = vmatpush1.msra.mxu0 0.0
  %401 = vmatprep.subr.mxu0 0.0
  %402 = vmatpush1.msra.mxu0 0.0
  %403 = vmatprep.subr.mxu0 0.0
  %404 = vmatpush1.msra.mxu0 0.0
  %405 = vmatprep.subr.mxu0 0.0
  %406 = vmatpush1.msra.mxu0 0.0
  %407 = vmatprep.subr.mxu0 0.0
  %408 = vmatpush1.msra.mxu0 0.0
  %409 = vmatprep.subr.mxu0 0.0
  %410 = vmatpush1.msra.mxu0 0.0
  %411 = vmatprep.subr.mxu0 0.0
  %412 = vmatpush1.msra.mxu0 0.0
  %413 = vmatprep.subr.mxu0 0.0
  %414 = vmatpush1.msra.mxu0 0.0
  %415 = vmatprep.subr.mxu0 0.0
  %416 = vmatpush1.msra.mxu0 0.0
  %417 = vmatprep.subr.mxu0 0.0
  %418 = vmatpush1.msra.mxu0 0.0
  %419 = vmatprep.subr.mxu0 0.0
  %420 = vmatpush1.msra.mxu0 0.0
  %421 = vmatprep.mubr.f32.mxu0 0.0
  %422 = vmatmul.mubr.f32.gmra.mrb[0].mxu0 %v355
  %v423 = vpop.f32.mrb[0].mxu0
  %v424 = vadd.f32 0.0, %v423
  %v425 = vpop.f32.mrb[0].mxu0
  %426 = vdwg.mxu0
  %v427 = vadd.f32 %v354, %v424
  %v428 = vsub.f32 0.0, %v427
  %v429 = vmul.f32 %v428, 1.442695
  %v430 = vpow.pop %v429
  %v431 = vadd.f32 %v430, 1.0
  %v432 = vrcp.pop %v431
  %v433 = vadd.f32 %v424, %v219
  %435 = vrot.lane.b32.xlu0 %v433, 64
  %v436 = vpop.permute.xlu0 %435
  %v438 = vmul.f32 %v432, %v436
  %440 = vrot.lane.b32.xlu0 %v438, 64
  %v441 = vpop.permute.xlu0 %440
  %v443 = vadd.f32 %v354, %v441
  %v444 = vtanh.pop %v443
  %v445 = vsub.f32 1.0, %v432
  %447 = vrot.lane.b32.xlu0 %v444, 96
  %v448 = vpop.permute.xlu0 %447
  %v450 = vmul.f32 %v445, %v448
  %v451 = vmul.f32 %v432, %v348
  %v452 = vadd.f32 %v450, %v451
  %454 = vrot.lane.b32.xlu0 %v452, 96
  %v455 = vpop.permute.xlu0 %454
  %457 = vst.msk [vmem:[#allocation3 + $0x4] sm:$0x3] %vm248, %v455
  %v458 = vld [vmem:[#allocation2 + $0x6] sm:$0x3]
  %v459 = vsel %vm133, %v455, 0
  %461 = vmatprep.subr.mxu0 0.0
  %462 = vmatpush1.msra.mxu0 %v126
  %463 = vmatprep.subr.mxu0 0.0
  %464 = vmatpush1.msra.mxu0 %v127
  %465 = vmatprep.subr.mxu0 0.0
  %466 = vmatpush1.msra.mxu0 %v128
  %467 = vmatprep.subr.mxu0 0.0
  %468 = vmatpush1.msra.mxu0 %v129
  %469 = vmatprep.subr.mxu0 0.0
  %470 = vmatpush1.msra.mxu0 0.0
  %471 = vmatprep.subr.mxu0 0.0
  %472 = vmatpush1.msra.mxu0 0.0
  %473 = vmatprep.subr.mxu0 0.0
  %474 = vmatpush1.msra.mxu0 0.0
  %475 = vmatprep.subr.mxu0 0.0
  %476 = vmatpush1.msra.mxu0 0.0
  %477 = vmatprep.subr.mxu0 0.0
  %478 = vmatpush1.msra.mxu0 0.0
  %479 = vmatprep.subr.mxu0 0.0
  %480 = vmatpush1.msra.mxu0 0.0
  %481 = vmatprep.subr.mxu0 0.0
  %482 = vmatpush1.msra.mxu0 0.0
  %483 = vmatprep.subr.mxu0 0.0
  %484 = vmatpush1.msra.mxu0 0.0
  %485 = vmatprep.subr.mxu0 0.0
  %486 = vmatpush1.msra.mxu0 0.0
  %487 = vmatprep.subr.mxu0 0.0
  %488 = vmatpush1.msra.mxu0 0.0
  %489 = vmatprep.subr.mxu0 0.0
  %490 = vmatpush1.msra.mxu0 0.0
  %491 = vmatprep.subr.mxu0 0.0
  %492 = vmatpush1.msra.mxu0 0.0
  %493 = vmatprep.subr.mxu0 0.0
  %494 = vmatpush1.msra.mxu0 0.0
  %495 = vmatprep.subr.mxu0 0.0
  %496 = vmatpush1.msra.mxu0 0.0
  %497 = vmatprep.subr.mxu0 0.0
  %498 = vmatpush1.msra.mxu0 0.0
  %499 = vmatprep.subr.mxu0 0.0
  %500 = vmatpush1.msra.mxu0 0.0
  %501 = vmatprep.subr.mxu0 0.0
  %502 = vmatpush1.msra.mxu0 0.0
  %503 = vmatprep.subr.mxu0 0.0
  %504 = vmatpush1.msra.mxu0 0.0
  %505 = vmatprep.subr.mxu0 0.0
  %506 = vmatpush1.msra.mxu0 0.0
  %507 = vmatprep.subr.mxu0 0.0
  %508 = vmatpush1.msra.mxu0 0.0
  %509 = vmatprep.subr.mxu0 0.0
  %510 = vmatpush1.msra.mxu0 0.0
  %511 = vmatprep.subr.mxu0 0.0
  %512 = vmatpush1.msra.mxu0 0.0
  %513 = vmatprep.subr.mxu0 0.0
  %514 = vmatpush1.msra.mxu0 0.0
  %515 = vmatprep.subr.mxu0 0.0
  %516 = vmatpush1.msra.mxu0 0.0
  %517 = vmatprep.subr.mxu0 0.0
  %518 = vmatpush1.msra.mxu0 0.0
  %519 = vmatprep.subr.mxu0 0.0
  %520 = vmatpush1.msra.mxu0 0.0
  %521 = vmatprep.subr.mxu0 0.0
  %522 = vmatpush1.msra.mxu0 0.0
  %523 = vmatprep.subr.mxu0 0.0
  %524 = vmatpush1.msra.mxu0 0.0
  %525 = vmatprep.mubr.f32.mxu0 0.0
  %526 = vmatmul.mubr.f32.gmra.mrb[0].mxu0 %v459
  %v527 = vpop.f32.mrb[0].mxu0
  %v528 = vadd.f32 0.0, %v527
  %v529 = vpop.f32.mrb[0].mxu0
  %530 = vdwg.mxu0
  %v531 = vadd.f32 %v458, %v528
  %v532 = vsub.f32 0.0, %v531
  %v533 = vmul.f32 %v532, 1.442695
  %v534 = vpow.pop %v533
  %v535 = vadd.f32 %v534, 1.0
  %v536 = vrcp.pop %v535
  %v537 = vadd.f32 %v528, %v219
  %539 = vrot.lane.b32.xlu0 %v537, 64
  %v540 = vpop.permute.xlu0 %539
  %v542 = vmul.f32 %v536, %v540
  %544 = vrot.lane.b32.xlu0 %v542, 64
  %v545 = vpop.permute.xlu0 %544
  %v547 = vadd.f32 %v458, %v545
  %v548 = vtanh.pop %v547
  %v549 = vsub.f32 1.0, %v536
  %551 = vrot.lane.b32.xlu0 %v548, 96
  %v552 = vpop.permute.xlu0 %551
  %v554 = vmul.f32 %v549, %v552
  %v555 = vmul.f32 %v536, %v452
  %v556 = vadd.f32 %v554, %v555
  %558 = vrot.lane.b32.xlu0 %v556, 96
  %v559 = vpop.permute.xlu0 %558
  %561 = vst.msk [vmem:[#allocation3 + $0x6] sm:$0x3] %vm248, %v559
  %v562 = vld [vmem:[#allocation2 + $0x8] sm:$0x3]
  %v563 = vsel %vm133, %v559, 0
  %565 = vmatprep.subr.mxu0 0.0
  %566 = vmatpush1.msra.mxu0 %v126
  %567 = vmatprep.subr.mxu0 0.0
  %568 = vmatpush1.msra.mxu0 %v127
  %569 = vmatprep.subr.mxu0 0.0
  %570 = vmatpush1.msra.mxu0 %v128
  %571 = vmatprep.subr.mxu0 0.0
  %572 = vmatpush1.msra.mxu0 %v129
  %573 = vmatprep.subr.mxu0 0.0
  %574 = vmatpush1.msra.mxu0 0.0
  %575 = vmatprep.subr.mxu0 0.0
  %576 = vmatpush1.msra.mxu0 0.0
  %577 = vmatprep.subr.mxu0 0.0
  %578 = vmatpush1.msra.mxu0 0.0
  %579 = vmatprep.subr.mxu0 0.0
  %580 = vmatpush1.msra.mxu0 0.0
  %581 = vmatprep.subr.mxu0 0.0
  %582 = vmatpush1.msra.mxu0 0.0
  %583 = vmatprep.subr.mxu0 0.0
  %584 = vmatpush1.msra.mxu0 0.0
  %585 = vmatprep.subr.mxu0 0.0
  %586 = vmatpush1.msra.mxu0 0.0
  %587 = vmatprep.subr.mxu0 0.0
  %588 = vmatpush1.msra.mxu0 0.0
  %589 = vmatprep.subr.mxu0 0.0
  %590 = vmatpush1.msra.mxu0 0.0
  %591 = vmatprep.subr.mxu0 0.0
  %592 = vmatpush1.msra.mxu0 0.0
  %593 = vmatprep.subr.mxu0 0.0
  %594 = vmatpush1.msra.mxu0 0.0
  %595 = vmatprep.subr.mxu0 0.0
  %596 = vmatpush1.msra.mxu0 0.0
  %597 = vmatprep.subr.mxu0 0.0
  %598 = vmatpush1.msra.mxu0 0.0
  %599 = vmatprep.subr.mxu0 0.0
  %600 = vmatpush1.msra.mxu0 0.0
  %601 = vmatprep.subr.mxu0 0.0
  %602 = vmatpush1.msra.mxu0 0.0
  %603 = vmatprep.subr.mxu0 0.0
  %604 = vmatpush1.msra.mxu0 0.0
  %605 = vmatprep.subr.mxu0 0.0
  %606 = vmatpush1.msra.mxu0 0.0
  %607 = vmatprep.subr.mxu0 0.0
  %608 = vmatpush1.msra.mxu0 0.0
  %609 = vmatprep.subr.mxu0 0.0
  %610 = vmatpush1.msra.mxu0 0.0
  %611 = vmatprep.subr.mxu0 0.0
  %612 = vmatpush1.msra.mxu0 0.0
  %613 = vmatprep.subr.mxu0 0.0
  %614 = vmatpush1.msra.mxu0 0.0
  %615 = vmatprep.subr.mxu0 0.0
  %616 = vmatpush1.msra.mxu0 0.0
  %617 = vmatprep.subr.mxu0 0.0
  %618 = vmatpush1.msra.mxu0 0.0
  %619 = vmatprep.subr.mxu0 0.0
  %620 = vmatpush1.msra.mxu0 0.0
  %621 = vmatprep.subr.mxu0 0.0
  %622 = vmatpush1.msra.mxu0 0.0
  %623 = vmatprep.subr.mxu0 0.0
  %624 = vmatpush1.msra.mxu0 0.0
  %625 = vmatprep.subr.mxu0 0.0
  %626 = vmatpush1.msra.mxu0 0.0
  %627 = vmatprep.subr.mxu0 0.0
  %628 = vmatpush1.msra.mxu0 0.0
  %629 = vmatprep.mubr.f32.mxu0 0.0
  %630 = vmatmul.mubr.f32.gmra.mrb[0].mxu0 %v563
  %v631 = vpop.f32.mrb[0].mxu0
  %v632 = vadd.f32 0.0, %v631
  %v633 = vpop.f32.mrb[0].mxu0
  %634 = vdwg.mxu0
  %v635 = vadd.f32 %v562, %v632
  %v636 = vsub.f32 0.0, %v635
  %v637 = vmul.f32 %v636, 1.442695
  %v638 = vpow.pop %v637
  %v639 = vadd.f32 %v638, 1.0
  %v640 = vrcp.pop %v639
  %v641 = vadd.f32 %v632, %v219
  %643 = vrot.lane.b32.xlu0 %v641, 64
  %v644 = vpop.permute.xlu0 %643
  %v646 = vmul.f32 %v640, %v644
  %648 = vrot.lane.b32.xlu0 %v646, 64
  %v649 = vpop.permute.xlu0 %648
  %v651 = vadd.f32 %v562, %v649
  %v652 = vtanh.pop %v651
  %v653 = vsub.f32 1.0, %v640
  %655 = vrot.lane.b32.xlu0 %v652, 96
  %v656 = vpop.permute.xlu0 %655
  %v658 = vmul.f32 %v653, %v656
  %v659 = vmul.f32 %v640, %v556
  %v660 = vadd.f32 %v658, %v659
  %662 = vrot.lane.b32.xlu0 %v660, 96
  %v663 = vpop.permute.xlu0 %662
  %665 = vst.msk [vmem:[#allocation3 + $0x8] sm:$0x3] %vm248, %v663
  %v666 = vld [vmem:[#allocation2 + $0xa] sm:$0x3]
  %v667 = vsel %vm133, %v663, 0
  %669 = vmatprep.subr.mxu0 0.0
  %670 = vmatpush1.msra.mxu0 %v126
  %671 = vmatprep.subr.mxu0 0.0
  %672 = vmatpush1.msra.mxu0 %v127
  %673 = vmatprep.subr.mxu0 0.0
  %674 = vmatpush1.msra.mxu0 %v128
  %675 = vmatprep.subr.mxu0 0.0
  %676 = vmatpush1.msra.mxu0 %v129
  %677 = vmatprep.subr.mxu0 0.0
  %678 = vmatpush1.msra.mxu0 0.0
  %679 = vmatprep.subr.mxu0 0.0
  %680 = vmatpush1.msra.mxu0 0.0
  %681 = vmatprep.subr.mxu0 0.0
  %682 = vmatpush1.msra.mxu0 0.0
  %683 = vmatprep.subr.mxu0 0.0
  %684 = vmatpush1.msra.mxu0 0.0
  %685 = vmatprep.subr.mxu0 0.0
  %686 = vmatpush1.msra.mxu0 0.0
  %687 = vmatprep.subr.mxu0 0.0
  %688 = vmatpush1.msra.mxu0 0.0
  %689 = vmatprep.subr.mxu0 0.0
  %690 = vmatpush1.msra.mxu0 0.0
  %691 = vmatprep.subr.mxu0 0.0
  %692 = vmatpush1.msra.mxu0 0.0
  %693 = vmatprep.subr.mxu0 0.0
  %694 = vmatpush1.msra.mxu0 0.0
  %695 = vmatprep.subr.mxu0 0.0
  %696 = vmatpush1.msra.mxu0 0.0
  %697 = vmatprep.subr.mxu0 0.0
  %698 = vmatpush1.msra.mxu0 0.0
  %699 = vmatprep.subr.mxu0 0.0
  %700 = vmatpush1.msra.mxu0 0.0
  %701 = vmatprep.subr.mxu0 0.0
  %702 = vmatpush1.msra.mxu0 0.0
  %703 = vmatprep.subr.mxu0 0.0
  %704 = vmatpush1.msra.mxu0 0.0
  %705 = vmatprep.subr.mxu0 0.0
  %706 = vmatpush1.msra.mxu0 0.0
  %707 = vmatprep.subr.mxu0 0.0
  %708 = vmatpush1.msra.mxu0 0.0
  %709 = vmatprep.subr.mxu0 0.0
  %710 = vmatpush1.msra.mxu0 0.0
  %711 = vmatprep.subr.mxu0 0.0
  %712 = vmatpush1.msra.mxu0 0.0
  %713 = vmatprep.subr.mxu0 0.0
  %714 = vmatpush1.msra.mxu0 0.0
  %715 = vmatprep.subr.mxu0 0.0
  %716 = vmatpush1.msra.mxu0 0.0
  %717 = vmatprep.subr.mxu0 0.0
  %718 = vmatpush1.msra.mxu0 0.0
  %719 = vmatprep.subr.mxu0 0.0
  %720 = vmatpush1.msra.mxu0 0.0
  %721 = vmatprep.subr.mxu0 0.0
  %722 = vmatpush1.msra.mxu0 0.0
  %723 = vmatprep.subr.mxu0 0.0
  %724 = vmatpush1.msra.mxu0 0.0
  %725 = vmatprep.subr.mxu0 0.0
  %726 = vmatpush1.msra.mxu0 0.0
  %727 = vmatprep.subr.mxu0 0.0
  %728 = vmatpush1.msra.mxu0 0.0
  %729 = vmatprep.subr.mxu0 0.0
  %730 = vmatpush1.msra.mxu0 0.0
  %731 = vmatprep.subr.mxu0 0.0
  %732 = vmatpush1.msra.mxu0 0.0
  %733 = vmatprep.mubr.f32.mxu0 0.0
  %734 = vmatmul.mubr.f32.gmra.mrb[0].mxu0 %v667
  %v735 = vpop.f32.mrb[0].mxu0
  %v736 = vadd.f32 0.0, %v735
  %v737 = vpop.f32.mrb[0].mxu0
  %738 = vdwg.mxu0
  %v739 = vadd.f32 %v666, %v736
  %v740 = vsub.f32 0.0, %v739
  %v741 = vmul.f32 %v740, 1.442695
  %v742 = vpow.pop %v741
  %v743 = vadd.f32 %v742, 1.0
  %v744 = vrcp.pop %v743
  %v745 = vadd.f32 %v736, %v219
  %747 = vrot.lane.b32.xlu0 %v745, 64
  %v748 = vpop.permute.xlu0 %747
  %v750 = vmul.f32 %v744, %v748
  %752 = vrot.lane.b32.xlu0 %v750, 64
  %v753 = vpop.permute.xlu0 %752
  %v755 = vadd.f32 %v666, %v753
  %v756 = vtanh.pop %v755
  %v757 = vsub.f32 1.0, %v744
  %759 = vrot.lane.b32.xlu0 %v756, 96
  %v760 = vpop.permute.xlu0 %759
  %v762 = vmul.f32 %v757, %v760
  %v763 = vmul.f32 %v744, %v660
  %v764 = vadd.f32 %v762, %v763
  %766 = vrot.lane.b32.xlu0 %v764, 96
  %v767 = vpop.permute.xlu0 %766
  %769 = vst.msk [vmem:[#allocation3 + $0xa] sm:$0x3] %vm248, %v767
  %v770 = vld [vmem:[#allocation3] sm:$0xff]
  %v771 = vld [vmem:[#allocation3 + $0x8] sm:$0xf]
  %v772 = vld [vmem:[%s6] sm:$0xff]
  %v773 = vld [vmem:[%s6 + $0x8] sm:$0xff]
  %v774 = vld [vmem:[%s6 + $0x10] sm:$0xff]
  %v775 = vld [vmem:[%s6 + $0x18] sm:$0xff]
  %v776 = vld [vmem:[%s7] sm:$0x1]
  %v778 = vlaneseq
  %v779 = vshrl.u32 %v778, 7
  %v780 = vsub.s32 0, %v779
  %v781 = vrot.slane %v776, %v780
  %v784 = vsel %vm133, %v770, 0
  %v787 = vsel %vm133, %v771, 0
  %789 = vmatprep.subr.mxu0 0.0
  %790 = vmatpush1.msra.mxu0 %v772
  %791 = vmatprep.subr.mxu0 0.0
  %792 = vmatpush1.msra.mxu0 %v773
  %793 = vmatprep.subr.mxu0 0.0
  %794 = vmatpush1.msra.mxu0 %v774
  %795 = vmatprep.subr.mxu0 0.0
  %796 = vmatpush1.msra.mxu0 %v775
  %797 = vmatprep.subr.mxu0 0.0
  %798 = vmatpush1.msra.mxu0 0.0
  %799 = vmatprep.subr.mxu0 0.0
  %800 = vmatpush1.msra.mxu0 0.0
  %801 = vmatprep.subr.mxu0 0.0
  %802 = vmatpush1.msra.mxu0 0.0
  %803 = vmatprep.subr.mxu0 0.0
  %804 = vmatpush1.msra.mxu0 0.0
  %805 = vmatprep.subr.mxu0 0.0
  %806 = vmatpush1.msra.mxu0 0.0
  %807 = vmatprep.subr.mxu0 0.0
  %808 = vmatpush1.msra.mxu0 0.0
  %809 = vmatprep.subr.mxu0 0.0
  %810 = vmatpush1.msra.mxu0 0.0
  %811 = vmatprep.subr.mxu0 0.0
  %812 = vmatpush1.msra.mxu0 0.0
  %813 = vmatprep.subr.mxu0 0.0
  %814 = vmatpush1.msra.mxu0 0.0
  %815 = vmatprep.subr.mxu0 0.0
  %816 = vmatpush1.msra.mxu0 0.0
  %817 = vmatprep.subr.mxu0 0.0
  %818 = vmatpush1.msra.mxu0 0.0
  %819 = vmatprep.subr.mxu0 0.0
  %820 = vmatpush1.msra.mxu0 0.0
  %821 = vmatprep.subr.mxu0 0.0
  %822 = vmatpush1.msra.mxu0 0.0
  %823 = vmatprep.subr.mxu0 0.0
  %824 = vmatpush1.msra.mxu0 0.0
  %825 = vmatprep.subr.mxu0 0.0
  %826 = vmatpush1.msra.mxu0 0.0
  %827 = vmatprep.subr.mxu0 0.0
  %828 = vmatpush1.msra.mxu0 0.0
  %829 = vmatprep.subr.mxu0 0.0
  %830 = vmatpush1.msra.mxu0 0.0
  %831 = vmatprep.subr.mxu0 0.0
  %832 = vmatpush1.msra.mxu0 0.0
  %833 = vmatprep.subr.mxu0 0.0
  %834 = vmatpush1.msra.mxu0 0.0
  %835 = vmatprep.subr.mxu0 0.0
  %836 = vmatpush1.msra.mxu0 0.0
  %837 = vmatprep.subr.mxu0 0.0
  %838 = vmatpush1.msra.mxu0 0.0
  %839 = vmatprep.subr.mxu0 0.0
  %840 = vmatpush1.msra.mxu0 0.0
  %841 = vmatprep.subr.mxu0 0.0
  %842 = vmatpush1.msra.mxu0 0.0
  %843 = vmatprep.subr.mxu0 0.0
  %844 = vmatpush1.msra.mxu0 0.0
  %845 = vmatprep.subr.mxu0 0.0
  %846 = vmatpush1.msra.mxu0 0.0
  %847 = vmatprep.subr.mxu0 0.0
  %848 = vmatpush1.msra.mxu0 0.0
  %849 = vmatprep.subr.mxu0 0.0
  %850 = vmatpush1.msra.mxu0 0.0
  %851 = vmatprep.subr.mxu0 0.0
  %852 = vmatpush1.msra.mxu0 0.0
  %853 = vmatprep.mubr.f32.mxu0 0.0
  %854 = vmatmul.mubr.f32.gmra.mrb[0].mxu0 %v784
  %v855 = vpop.f32.mrb[0].mxu0
  %v856 = vadd.f32 %v781, %v855
  %v857 = vpop.f32.mrb[0].mxu0
  %858 = vmatprep.mubr.f32.mxu0 0.0
  %859 = vmatmul.mubr.f32.gmra.mrb[0].mxu0 %v787
  %v860 = vpop.f32.mrb[0].mxu0
  %v861 = vadd.f32 %v781, %v860
  %v862 = vpop.f32.mrb[0].mxu0
  %863 = vdwg.mxu0
  %vm864 = vcmask 408576
  %v865 = vsel %vm864, %v856, -inf
  %866 = vmax.xlane.f32.xlu0 %v865
  %v867 = vpop.xlane.xlu0 %866
  %vm868 = vcmask 404480
  %v869 = vsel %vm868, %v861, -inf
  %870 = vmax.xlane.f32.xlu0 %v869
  %v871 = vpop.xlane.xlu0 %870
  %v872 = vsub.f32 %v856, %v867
  %v873 = vsub.f32 %v861, %v871
  %v874 = vmul.f32 %v872, 1.442695
  %v875 = vpow.pop %v874
  %v876 = vmul.f32 %v873, 1.442695
  %v877 = vpow.pop %v876
  %v878 = vsel %vm864, %v875, 0.0
  %879 = vadd.xlane.f32.xlu0 %v878
  %v880 = vpop.xlane.xlu0 %879
  %v881 = vsel %vm868, %v877, 0.0
  %882 = vadd.xlane.f32.xlu0 %v881
  %v883 = vpop.xlane.xlu0 %882
  %v884 = vlog2.pop %v880
  %v885 = vmul.f32 %v884, 0.6931472
  %v886 = vlog2.pop %v883
  %v887 = vmul.f32 %v886, 0.6931472
  %v888 = vadd.f32 %v885, %v867
  %v889 = vadd.f32 %v887, %v871
  %v890 = vsub.f32 %v856, %v888
  %v891 = vsub.f32 %v861, %v889
  %892 = vst.msk [vmem:[%s8] sm:$0xff] %vm864, %v890
  %893 = vst.msk [vmem:[%s8 + $0x8] sm:$0xf] %vm868, %v891
  // Predicated region
  $region34: #{_lambda_.9} parent=0 // pred_check
    _
  $region35: #{_lambda_.9} parent=0 // pred_check_branch
    %895 = sbr.rel (0) target = $region37
  $region36: #{_lambda_.9} parent=0 // pred_region
    _
  $region37: #{_lambda_.9} parent=0 // pred_fallthru
    _
  // Predicated region
  $region38: #{_lambda_.9} parent=0 // pred_check
    _
  $region39: #{_lambda_.9} parent=0 // pred_check_branch
    %897 = sbr.rel (0) target = $region41
  $region40: #{_lambda_.9} parent=0 // pred_region
    _
  $region41: #{_lambda_.9} parent=0 // pred_fallthru
    _

</llo_original>
